<compile_context>
chip_gen: v7x
topology: tpu7x:2x2x1
jax: 0.10.0
libtpu: 0.0.40
codegen_flags: <defaults>
</compile_context>

<pallas_src>
import functools

import jax
import jax.numpy as jnp
from jax.experimental import pallas as pl
from jax.experimental.pallas import tpu as pltpu

EPS = 1e-5  # nn.BatchNorm2d default eps


@functools.lru_cache(maxsize=None)
def _vmem_limit_bytes():
    # ~3/4 of physical VMEM, capped at 100 MiB (v5e/v6e: 128 MiB parts -> 96 MiB,
    # v7x: 64 MiB part -> 48 MiB).  Falls back to a v7x-safe 48 MiB.
    try:
        cap = pltpu.get_tpu_info().vmem_capacity_bytes
    except Exception:
        cap = 64 * 1024 * 1024
    return int(min(100 * 1024 * 1024, cap * 3 // 4))


def _pick_hw_tile(hw):
    # Lane-dense multiple of 128 that divides H*W if possible; else whole H*W.
    for t in (1024, 512, 256, 128):
        if hw % t == 0:
            return t
    return hw


# ----------------------------------------------------------------------------
# Kernel 1: fused concat + in-kernel halo pad + 3x3 conv + BN1 partial stats
# ----------------------------------------------------------------------------
def _conv1_stats_kernel(y_ref, zp_ref, w_ref, x1_ref, stats_ref, xpad_ref,
                        *, H, W, Cy, Cz, Cout):
    """y_ref: (1,H,W,Cy) f32   zp_ref: (1,H,W,Cz) f32 (pooled z)
    w_ref: (9*(Cy+Cz), Cout) bf16
    x1_ref: (1,H,W,Cout) f32 raw conv out   stats_ref: (1,2,Cout) f32
    xpad_ref: (H+2, W+2, Cy+Cz) bf16 scratch (zero border = padding=1).
    """
    Cin = Cy + Cz
    # Build the padded, concatenated input tile entirely in VMEM.
    xpad_ref[...] = jnp.zeros_like(xpad_ref)
    xpad_ref[1:H + 1, 1:W + 1, :Cy] = y_ref[0].astype(jnp.bfloat16)
    xpad_ref[1:H + 1, 1:W + 1, Cy:] = zp_ref[0].astype(jnp.bfloat16)

    # 9 per-tap MXU matmuls, f32 accumulation (no im2col scratch).
    acc = jnp.zeros((H * W, Cout), jnp.float32)
    for k in range(9):  # static unroll over 3x3 taps
        ky, kx = k // 3, k % 3
        win = xpad_ref[ky:ky + H, kx:kx + W, :].reshape(H * W, Cin)
        acc = acc + jnp.dot(win, w_ref[k * Cin:(k + 1) * Cin, :],
                            preferred_element_type=jnp.float32)

    x1_ref[...] = acc.reshape(1, H, W, Cout)
    # Per-sample BN partials (sum, sum of squares) -> reduced in the wrapper.
    stats_ref[0, 0:1, :] = jnp.sum(acc, axis=0, keepdims=True)
    stats_ref[0, 1:2, :] = jnp.sum(acc * acc, axis=0, keepdims=True)


# ----------------------------------------------------------------------------
# Kernel 2: fused BN1 normalize+ReLU + in-kernel pad + 3x3 conv2 + BN2 partials
# ----------------------------------------------------------------------------
def _bn1_conv2_stats_kernel(x1_ref, scale_ref, shift_ref, w_ref,
                            x2_ref, stats_ref, xpad_ref, *, H, W, C):
    """x1_ref: (1,H,W,C) f32 raw conv1   scale/shift: (1,C) f32 (BN1 affine)
    w_ref: (9*C, C) bf16
    x2_ref: (1,H,W,C) f32 raw conv2   stats_ref: (1,2,C) f32
    xpad_ref: (H+2, W+2, C) bf16 scratch.
    """
    # BN1 epilogue in f32, then cast to bf16 only for the MXU input.
    y1 = jnp.maximum(x1_ref[0] * scale_ref[...] + shift_ref[...], 0.0)

    xpad_ref[...] = jnp.zeros_like(xpad_ref)
    xpad_ref[1:H + 1, 1:W + 1, :] = y1.astype(jnp.bfloat16)

    acc = jnp.zeros((H * W, C), jnp.float32)
    for k in range(9):  # static unroll over 3x3 taps
        ky, kx = k // 3, k % 3
        win = xpad_ref[ky:ky + H, kx:kx + W, :].reshape(H * W, C)
        acc = acc + jnp.dot(win, w_ref[k * C:(k + 1) * C, :],
                            preferred_element_type=jnp.float32)

    x2_ref[...] = acc.reshape(1, H, W, C)
    stats_ref[0, 0:1, :] = jnp.sum(acc, axis=0, keepdims=True)
    stats_ref[0, 1:2, :] = jnp.sum(acc * acc, axis=0, keepdims=True)


# ----------------------------------------------------------------------------
# Kernel 3: fused BN2 normalize+ReLU + 1x1 conv_res(+bias), lane-dense outputs
# ----------------------------------------------------------------------------
def _bn2_relu_convres_kernel(x2_ref, scale_ref, shift_ref, wres_ref, bres_ref,
                             y_ref, r_ref):
    """x2_ref: (1,THW,Cout) f32 raw conv2   scale/shift: (1,Cout) f32
    wres_ref: (Cout, Cres) bf16   bres_ref: (1, Cres) f32
    y_ref: (1,Cout,THW) f32 (channel-major y_prime)   r_ref: (1,Cres,THW) f32.
    """
    y2 = jnp.maximum(x2_ref[0] * scale_ref[...] + shift_ref[...], 0.0)  # (THW,Cout)
    # Channel-major store: lane dim = spatial tile (lane-dense, no final NCHW
    # transpose needed in the wrapper).  Transpose rides the XLU slot.
    y_ref[...] = y2.T[None]
    r = jnp.dot(y2.astype(jnp.bfloat16), wres_ref[...],
                preferred_element_type=jnp.float32) + bres_ref[...]
    r_ref[...] = r.T[None]


# ----------------------------------------------------------------------------
# pallas_call wrappers
# ----------------------------------------------------------------------------
def conv1_stats(y, zp, w1, Cout):
    N, H, W, Cy = y.shape
    Cz = zp.shape[-1]
    Cin = Cy + Cz
    M = N * H * W
    kern = functools.partial(_conv1_stats_kernel, H=H, W=W, Cy=Cy, Cz=Cz, Cout=Cout)
    flops = 2 * M * 9 * Cin * Cout
    bytes_acc = (M * Cin * 4) + (9 * Cin * Cout * 2) + (M * Cout * 4) + (N * 2 * Cout * 4)
    return pl.pallas_call(
        kern,
        grid=(N,),
        in_specs=[
            pl.BlockSpec((1, H, W, Cy), lambda n: (n, 0, 0, 0)),
            pl.BlockSpec((1, H, W, Cz), lambda n: (n, 0, 0, 0)),
            pl.BlockSpec((9 * Cin, Cout), lambda n: (0, 0)),
        ],
        out_shape=(
            jax.ShapeDtypeStruct((N, H, W, Cout), jnp.float32),   # raw conv1
            jax.ShapeDtypeStruct((N, 2, Cout), jnp.float32),      # BN1 partials
        ),
        out_specs=(
            pl.BlockSpec((1, H, W, Cout), lambda n: (n, 0, 0, 0)),
            pl.BlockSpec((1, 2, Cout), lambda n: (n, 0, 0)),
        ),
        scratch_shapes=[pltpu.VMEM((H + 2, W + 2, Cin), jnp.bfloat16)],
        compiler_params=pltpu.CompilerParams(
            dimension_semantics=("parallel",),
            vmem_limit_bytes=_vmem_limit_bytes()),
        cost_estimate=pl.CostEstimate(flops=flops, transcendentals=0,
                                      bytes_accessed=bytes_acc),
    )(y, zp, w1)


def bn1_conv2_stats(x1_raw, scale1, shift1, w2):
    N, H, W, C = x1_raw.shape
    M = N * H * W
    kern = functools.partial(_bn1_conv2_stats_kernel, H=H, W=W, C=C)
    flops = 2 * M * 9 * C * C
    bytes_acc = (M * C * 4) * 2 + (9 * C * C * 2) + (N * 2 * C * 4)
    return pl.pallas_call(
        kern,
        grid=(N,),
        in_specs=[
            pl.BlockSpec((1, H, W, C), lambda n: (n, 0, 0, 0)),
            pl.BlockSpec((1, C), lambda n: (0, 0)),
            pl.BlockSpec((1, C), lambda n: (0, 0)),
            pl.BlockSpec((9 * C, C), lambda n: (0, 0)),
        ],
        out_shape=(
            jax.ShapeDtypeStruct((N, H, W, C), jnp.float32),      # raw conv2
            jax.ShapeDtypeStruct((N, 2, C), jnp.float32),         # BN2 partials
        ),
        out_specs=(
            pl.BlockSpec((1, H, W, C), lambda n: (n, 0, 0, 0)),
            pl.BlockSpec((1, 2, C), lambda n: (n, 0, 0)),
        ),
        scratch_shapes=[pltpu.VMEM((H + 2, W + 2, C), jnp.bfloat16)],
        compiler_params=pltpu.CompilerParams(
            dimension_semantics=("parallel",),
            vmem_limit_bytes=_vmem_limit_bytes()),
        cost_estimate=pl.CostEstimate(flops=flops, transcendentals=0,
                                      bytes_accessed=bytes_acc),
    )(x1_raw, scale1, shift1, w2)


def bn2_relu_convres(x2_flat, scale2, shift2, w_res, b_res):
    N, HW, Cout = x2_flat.shape
    Cres = w_res.shape[-1]
    THW = _pick_hw_tile(HW)
    M = N * HW
    flops = 2 * M * Cout * Cres
    bytes_acc = M * Cout * 4 + M * Cout * 4 + M * Cres * 4
    return pl.pallas_call(
        _bn2_relu_convres_kernel,
        grid=(N, HW // THW),
        in_specs=[
            pl.BlockSpec((1, THW, Cout), lambda n, t: (n, t, 0)),
            pl.BlockSpec((1, Cout), lambda n, t: (0, 0)),
            pl.BlockSpec((1, Cout), lambda n, t: (0, 0)),
            pl.BlockSpec((Cout, Cres), lambda n, t: (0, 0)),
            pl.BlockSpec((1, Cres), lambda n, t: (0, 0)),
        ],
        out_shape=(
            jax.ShapeDtypeStruct((N, Cout, HW), jnp.float32),     # y_prime (chan-major)
            jax.ShapeDtypeStruct((N, Cres, HW), jnp.float32),     # conv_res (chan-major)
        ),
        out_specs=(
            pl.BlockSpec((1, Cout, THW), lambda n, t: (n, 0, t)),
            pl.BlockSpec((1, Cres, THW), lambda n, t: (n, 0, t)),
        ),
        compiler_params=pltpu.CompilerParams(
            dimension_semantics=("parallel", "parallel"),
            vmem_limit_bytes=_vmem_limit_bytes()),
        cost_estimate=pl.CostEstimate(flops=flops, transcendentals=0,
                                      bytes_accessed=bytes_acc),
    )(x2_flat, scale2, shift2, w_res, b_res)


# ----------------------------------------------------------------------------
# BN partials -> per-channel affine (one-pass variance, f32, clamped)
# ----------------------------------------------------------------------------
def _bn_affine(stats, gamma, beta, count):
    ssum = jnp.sum(stats[:, 0, :], axis=0)
    ssq = jnp.sum(stats[:, 1, :], axis=0)
    mean = ssum / count
    var = jnp.maximum(ssq / count - mean * mean, 0.0)
    scale = gamma.astype(jnp.float32) * jax.lax.rsqrt(var + EPS)
    shift = beta.astype(jnp.float32) - mean * scale
    return scale.reshape(1, -1), shift.reshape(1, -1)


# ----------------------------------------------------------------------------
# FRRU forward (NCHW in / NCHW out, matching the PyTorch module)
# ----------------------------------------------------------------------------
def frru_forward(params, y_nchw, z_nchw, *, scale):
    N, Cy, H, W = y_nchw.shape
    Cz = z_nchw.shape[1]                      # 32
    Cout = params["gamma1"].shape[0]
    HW = H * W
    M = N * HW

    # MaxPool2d(scale) on z, done in NCHW so full-res z is never transposed.
    # TODO(synk): fuse this pooling into the conv1 kernel.
    z_pool = z_nchw.reshape(N, Cz, H, scale, W, scale).max(axis=(3, 5))

    # Only the small streams get NHWC-transposed for the conv kernels.
    y_nhwc = jnp.transpose(y_nchw, (0, 2, 3, 1)).astype(jnp.float32)
    zp_nhwc = jnp.transpose(z_pool, (0, 2, 3, 1)).astype(jnp.float32)

    # Flattened HWIO weights (tap-major, channel-minor) in bf16 for the MXU.
    w1 = params["w1"].reshape(9 * (Cy + Cz), Cout).astype(jnp.bfloat16)
    w2 = params["w2"].reshape(9 * Cout, Cout).astype(jnp.bfloat16)
    w_res = params["w_res"].astype(jnp.bfloat16)
    b_res = params["b_res"].reshape(1, Cz).astype(jnp.float32)

    # conv1 (concat + halo fused) + BN1 partial stats.
    x1_raw, stats1 = conv1_stats(y_nhwc, zp_nhwc, w1, Cout)
    s1, b1 = _bn_affine(stats1, params["gamma1"], params["beta1"], M)

    # BN1 normalize+ReLU fused into conv2 + BN2 partial stats.
    x2_raw, stats2 = bn1_conv2_stats(x1_raw, s1, b1, w2)
    s2, b2 = _bn_affine(stats2, params["gamma2"], params["beta2"], M)

    # BN2 normalize+ReLU + 1x1 conv_res(+bias); channel-major outputs.
    y_t, r_t = bn2_relu_convres(x2_raw.reshape(N, HW, Cout), s2, b2, w_res, b_res)

    y_prime = y_t.reshape(N, Cout, H, W)       # already NCHW, no transpose
    r = r_t.reshape(N, Cz, H, W)

    # Nearest upsample by `scale` + residual add, directly in NCHW.
    r_up = jnp.broadcast_to(
        r[:, :, :, None, :, None], (N, Cz, H, scale, W, scale)
    ).reshape(N, Cz, H * scale, W * scale)
    z_prime = z_nchw.astype(jnp.float32) + r_up

    return y_prime, z_prime


# ----------------------------------------------------------------------------
# Pure-JAX f32 reference (sanity check)
# ----------------------------------------------------------------------------
def _ref_forward(params, y_nchw, z_nchw, scale):
    y = jnp.transpose(y_nchw, (0, 2, 3, 1)).astype(jnp.float32)
    z = jnp.transpose(z_nchw, (0, 2, 3, 1)).astype(jnp.float32)
    N, H, W, _ = y.shape
    Cz = z.shape[-1]
    z_pool = z.reshape(N, H, scale, W, scale, Cz).max(axis=(2, 4))
    x = jnp.concatenate([y, z_pool], axis=-1)

    def cbr(inp, w, gamma, beta):
        out = jax.lax.conv_general_dilated(
            inp, w, window_strides=(1, 1), padding="SAME",
            dimension_numbers=("NHWC", "HWIO", "NHWC"))
        mean = out.mean(axis=(0, 1, 2))
        var = ((out - mean) ** 2).mean(axis=(0, 1, 2))
        out = (out - mean) * jax.lax.rsqrt(var + EPS) * gamma + beta
        return jnp.maximum(out, 0.0)

    y1 = cbr(x, params["w1"], params["gamma1"], params["beta1"])
    y2 = cbr(y1, params["w2"], params["gamma2"], params["beta2"])
    r = jnp.einsum("nhwc,cd->nhwd", y2, params["w_res"]) + params["b_res"]
    r_up = jnp.repeat(jnp.repeat(r, scale, axis=1), scale, axis=2)
    z_prime = z + r_up
    return (jnp.transpose(y2, (0, 3, 1, 2)),
            jnp.transpose(z_prime, (0, 3, 1, 2)))


# ----------------------------------------------------------------------------
# Parameter init + demo
# ----------------------------------------------------------------------------
def init_params(key, prev_channels, out_channels):
    cin1 = prev_channels + 32
    k1, k2, k3, k4 = jax.random.split(key, 4)
    return {
        # conv weights stored as HWIO (h, w, in, out), matching the kernels.
        "w1": 0.05 * jax.random.normal(k1, (3, 3, cin1, out_channels), jnp.float32),
        "gamma1": jnp.ones((out_channels,), jnp.float32),   # BN defaults
        "beta1": jnp.zeros((out_channels,), jnp.float32),
        "w2": 0.05 * jax.random.normal(k2, (3, 3, out_channels, out_channels), jnp.float32),
        "gamma2": jnp.ones((out_channels,), jnp.float32),
        "beta2": jnp.zeros((out_channels,), jnp.float32),
        "w_res": 0.05 * jax.random.normal(k3, (out_channels, 32), jnp.float32),
        "b_res": 0.05 * jax.random.normal(k4, (32,), jnp.float32),
    }


if __name__ == "__main__":
    prev_channels, out_channels, scale = 4, 16, 2
    N, H, W = 2, 8, 8

    key = jax.random.PRNGKey(0)
    k_p, k_y, k_z = jax.random.split(key, 3)
    params = init_params(k_p, prev_channels, out_channels)

    y_in = jax.random.normal(k_y, (N, prev_channels, H, W), jnp.float32)
    z_in = jax.random.normal(k_z, (N, 32, H * scale, W * scale), jnp.float32)

    fwd = jax.jit(functools.partial(frru_forward, scale=scale))
    y_prime, z_prime = fwd(params, y_in, z_in)
    y_prime = jax.block_until_ready(y_prime)
    z_prime = jax.block_until_ready(z_prime)

    # Sanity check vs. pure f32 reference (tolerance loosened slightly for the
    # bf16 MXU inputs; kernels accumulate and run the BN epilogue in f32).
    y_ref, z_ref = _ref_forward(params, y_in, z_in, scale)
    assert y_prime.shape == (N, out_channels, H, W)
    assert z_prime.shape == (N, 32, H * scale, W * scale)
    assert jnp.allclose(y_prime, y_ref, atol=3e-2, rtol=3e-2)
    assert jnp.allclose(z_prime, z_ref, atol=3e-2, rtol=3e-2)

    print("KERNEL_OK")
</pallas_src>

<mosaic_0001>
module attributes {stable_mosaic.version = 11 : i64} {
  func.func @_bn2_relu_convres_kernel(%arg0: i32, %arg1: i32, %arg2: memref<1x64x16xf32, #tpu.memory_space<vmem>>, %arg3: memref<1x16xf32, #tpu.memory_space<vmem>>, %arg4: memref<1x16xf32, #tpu.memory_space<vmem>>, %arg5: memref<16x32xbf16, #tpu.memory_space<vmem>>, %arg6: memref<1x32xf32, #tpu.memory_space<vmem>>, %arg7: memref<1x16x64xf32, #tpu.memory_space<vmem>>, %arg8: memref<1x32x64xf32, #tpu.memory_space<vmem>>) attributes {dimension_semantics = [#tpu.dimension_semantics<parallel>, #tpu.dimension_semantics<parallel>], iteration_bounds = array<i64: 2, 1>, scalar_prefetch = 0 : i64, scratch_operands = 0 : i64, tpu.core_type = #tpu.core_type<tc>, window_params = [{transform_indices = @transform_0, window_bounds = array<i64: 1, 64, 16>}, {pipeline_mode = #tpu.pipeline_mode<synchronous>, transform_indices = @transform_1, window_bounds = array<i64: 1, 16>}, {pipeline_mode = #tpu.pipeline_mode<synchronous>, transform_indices = @transform_2, window_bounds = array<i64: 1, 16>}, {pipeline_mode = #tpu.pipeline_mode<synchronous>, transform_indices = @transform_3, window_bounds = array<i64: 16, 32>}, {pipeline_mode = #tpu.pipeline_mode<synchronous>, transform_indices = @transform_4, window_bounds = array<i64: 1, 32>}, {transform_indices = @transform_5, window_bounds = array<i64: 1, 16, 64>}, {transform_indices = @transform_6, window_bounds = array<i64: 1, 32, 64>}]} {
    %c0 = arith.constant 0 : index
    %c0_0 = arith.constant 0 : index
    %c0_1 = arith.constant 0 : index
    %0 = vector.load %arg2[%c0, %c0_0, %c0_1] : memref<1x64x16xf32, #tpu.memory_space<vmem>>, vector<1x64x16xf32>
    %1 = vector.shape_cast %0 : vector<1x64x16xf32> to vector<64x16xf32>
    %c0_2 = arith.constant 0 : index
    %c0_3 = arith.constant 0 : index
    %2 = vector.load %arg3[%c0_2, %c0_3] : memref<1x16xf32, #tpu.memory_space<vmem>>, vector<1x16xf32>
    %3 = vector.broadcast %2 : vector<1x16xf32> to vector<64x16xf32>
    %4 = arith.mulf %1, %3 : vector<64x16xf32>
    %c0_4 = arith.constant 0 : index
    %c0_5 = arith.constant 0 : index
    %5 = vector.load %arg4[%c0_4, %c0_5] : memref<1x16xf32, #tpu.memory_space<vmem>>, vector<1x16xf32>
    %6 = vector.broadcast %5 : vector<1x16xf32> to vector<64x16xf32>
    %7 = arith.addf %4, %6 : vector<64x16xf32>
    %cst = arith.constant 0.000000e+00 : f32
    %8 = vector.broadcast %cst : f32 to vector<64x16xf32>
    %9 = arith.maximumf %7, %8 : vector<64x16xf32>
    %10 = tpu.transpose %9, [1, 0] : vector<64x16xf32> -> vector<16x64xf32>
    %11 = vector.shape_cast %10 : vector<16x64xf32> to vector<1x16x64xf32>
    %c0_6 = arith.constant 0 : index
    %c0_7 = arith.constant 0 : index
    %c0_8 = arith.constant 0 : index
    %12 = vector.load %arg7[%c0_6, %c0_7, %c0_8] : memref<1x16x64xf32, #tpu.memory_space<vmem>>, vector<1x16x64xf32>
    tpu.vector_store %arg7[%c0_6, %c0_7, %c0_8], %11 {strides = array<i32>} : memref<1x16x64xf32, #tpu.memory_space<vmem>>, vector<1x16x64xf32>,
    %13 = arith.truncf %9 : vector<64x16xf32> to vector<64x16xbf16>
    %c0_9 = arith.constant 0 : index
    %c0_10 = arith.constant 0 : index
    %14 = vector.load %arg5[%c0_9, %c0_10] : memref<16x32xbf16, #tpu.memory_space<vmem>>, vector<16x32xbf16>
    %cst_11 = arith.constant dense<0.000000e+00> : vector<64x32xf32>
    %15 = tpu.matmul %13, %14, %cst_11 {dimension_numbers = #tpu.dot_dimension_numbers<[1], [0], [0], [1], [0, 0, 1, 1], [], []>} : vector<64x16xbf16>, vector<16x32xbf16>, vector<64x32xf32> -> vector<64x32xf32>
    %c0_12 = arith.constant 0 : index
    %c0_13 = arith.constant 0 : index
    %16 = vector.load %arg6[%c0_12, %c0_13] : memref<1x32xf32, #tpu.memory_space<vmem>>, vector<1x32xf32>
    %17 = vector.broadcast %16 : vector<1x32xf32> to vector<64x32xf32>
    %18 = arith.addf %15, %17 : vector<64x32xf32>
    %19 = tpu.transpose %18, [1, 0] : vector<64x32xf32> -> vector<32x64xf32>
    %20 = vector.shape_cast %19 : vector<32x64xf32> to vector<1x32x64xf32>
    %c0_14 = arith.constant 0 : index
    %c0_15 = arith.constant 0 : index
    %c0_16 = arith.constant 0 : index
    %21 = vector.load %arg8[%c0_14, %c0_15, %c0_16] : memref<1x32x64xf32, #tpu.memory_space<vmem>>, vector<1x32x64xf32>
    tpu.vector_store %arg8[%c0_14, %c0_15, %c0_16], %20 {strides = array<i32>} : memref<1x32x64xf32, #tpu.memory_space<vmem>>, vector<1x32x64xf32>,
    return
  }
  func.func @transform_0(%arg0: i32, %arg1: i32) -> (i32, i32, i32) {
    %c0_i32 = arith.constant 0 : i32
    %c0_i32_0 = arith.constant 0 : i32
    return %arg0, %arg1, %c0_i32 : i32, i32, i32
  }
  func.func @transform_1(%arg0: i32, %arg1: i32) -> (i32, i32) {
    %c0_i32 = arith.constant 0 : i32
    %c0_i32_0 = arith.constant 0 : i32
    %c0_i32_1 = arith.constant 0 : i32
    return %c0_i32, %c0_i32_0 : i32, i32
  }
  func.func @transform_2(%arg0: i32, %arg1: i32) -> (i32, i32) {
    %c0_i32 = arith.constant 0 : i32
    %c0_i32_0 = arith.constant 0 : i32
    %c0_i32_1 = arith.constant 0 : i32
    return %c0_i32, %c0_i32_0 : i32, i32
  }
  func.func @transform_3(%arg0: i32, %arg1: i32) -> (i32, i32) {
    %c0_i32 = arith.constant 0 : i32
    %c0_i32_0 = arith.constant 0 : i32
    %c0_i32_1 = arith.constant 0 : i32
    return %c0_i32, %c0_i32_0 : i32, i32
  }
  func.func @transform_4(%arg0: i32, %arg1: i32) -> (i32, i32) {
    %c0_i32 = arith.constant 0 : i32
    %c0_i32_0 = arith.constant 0 : i32
    %c0_i32_1 = arith.constant 0 : i32
    return %c0_i32, %c0_i32_0 : i32, i32
  }
  func.func @transform_5(%arg0: i32, %arg1: i32) -> (i32, i32, i32) {
    %c0_i32 = arith.constant 0 : i32
    %c0_i32_0 = arith.constant 0 : i32
    return %arg0, %c0_i32, %arg1 : i32, i32, i32
  }
  func.func @transform_6(%arg0: i32, %arg1: i32) -> (i32, i32, i32) {
    %c0_i32 = arith.constant 0 : i32
    %c0_i32_0 = arith.constant 0 : i32
    return %arg0, %c0_i32, %arg1 : i32, i32, i32
  }
}

module attributes {stable_mosaic.version = 11 : i64} {
  func.func @_conv1_stats_kernel(%arg0: i32, %arg1: memref<1x8x8x4xf32, #tpu.memory_space<vmem>>, %arg2: memref<1x8x8x32xf32, #tpu.memory_space<vmem>>, %arg3: memref<324x16xbf16, #tpu.memory_space<vmem>>, %arg4: memref<1x8x8x16xf32, #tpu.memory_space<vmem>>, %arg5: memref<1x2x16xf32, #tpu.memory_space<vmem>>, %arg6: memref<10x10x36xbf16, #tpu.memory_space<vmem>>) attributes {dimension_semantics = [#tpu.dimension_semantics<parallel>], iteration_bounds = array<i64: 2>, scalar_prefetch = 0 : i64, scratch_operands = 1 : i64, tpu.core_type = #tpu.core_type<tc>, window_params = [{transform_indices = @transform_0, window_bounds = array<i64: 1, 8, 8, 4>}, {transform_indices = @transform_1, window_bounds = array<i64: 1, 8, 8, 32>}, {pipeline_mode = #tpu.pipeline_mode<synchronous>, transform_indices = @transform_2, window_bounds = array<i64: 324, 16>}, {transform_indices = @transform_3, window_bounds = array<i64: 1, 8, 8, 16>}, {transform_indices = @transform_4, window_bounds = array<i64: 1, 2, 16>}]} {
    %cst = arith.constant 0.000000e+00 : bf16
    %0 = vector.broadcast %cst : bf16 to vector<10x10x36xbf16>
    %c0 = arith.constant 0 : index
    %c0_0 = arith.constant 0 : index
    %c0_1 = arith.constant 0 : index
    %1 = vector.load %arg6[%c0, %c0_0, %c0_1] : memref<10x10x36xbf16, #tpu.memory_space<vmem>>, vector<10x10x36xbf16>
    tpu.vector_store %arg6[%c0, %c0_0, %c0_1], %0 {strides = array<i32>} : memref<10x10x36xbf16, #tpu.memory_space<vmem>>, vector<10x10x36xbf16>,
    %c0_2 = arith.constant 0 : index
    %c0_3 = arith.constant 0 : index
    %c0_4 = arith.constant 0 : index
    %c0_5 = arith.constant 0 : index
    %2 = vector.load %arg1[%c0_2, %c0_3, %c0_4, %c0_5] : memref<1x8x8x4xf32, #tpu.memory_space<vmem>>, vector<1x8x8x4xf32>
    %3 = vector.shape_cast %2 : vector<1x8x8x4xf32> to vector<8x8x4xf32>
    %4 = arith.truncf %3 : vector<8x8x4xf32> to vector<8x8x4xbf16>
    %c1 = arith.constant 1 : index
    %c1_6 = arith.constant 1 : index
    %c0_7 = arith.constant 0 : index
    %5 = vector.load %arg6[%c1, %c1_6, %c0_7] : memref<10x10x36xbf16, #tpu.memory_space<vmem>>, vector<8x8x4xbf16>
    tpu.vector_store %arg6[%c1, %c1_6, %c0_7], %4 {strides = array<i32>} : memref<10x10x36xbf16, #tpu.memory_space<vmem>>, vector<8x8x4xbf16>,
    %c0_8 = arith.constant 0 : index
    %c0_9 = arith.constant 0 : index
    %c0_10 = arith.constant 0 : index
    %c0_11 = arith.constant 0 : index
    %6 = vector.load %arg2[%c0_8, %c0_9, %c0_10, %c0_11] : memref<1x8x8x32xf32, #tpu.memory_space<vmem>>, vector<1x8x8x32xf32>
    %7 = vector.shape_cast %6 : vector<1x8x8x32xf32> to vector<8x8x32xf32>
    %8 = arith.truncf %7 : vector<8x8x32xf32> to vector<8x8x32xbf16>
    %c1_12 = arith.constant 1 : index
    %c1_13 = arith.constant 1 : index
    %c4 = arith.constant 4 : index
    %9 = vector.load %arg6[%c1_12, %c1_13, %c4] : memref<10x10x36xbf16, #tpu.memory_space<vmem>>, vector<8x8x32xbf16>
    tpu.vector_store %arg6[%c1_12, %c1_13, %c4], %8 {strides = array<i32>} : memref<10x10x36xbf16, #tpu.memory_space<vmem>>, vector<8x8x32xbf16>,
    %cst_14 = arith.constant 0.000000e+00 : f32
    %10 = vector.broadcast %cst_14 : f32 to vector<64x16xf32>
    %c0_15 = arith.constant 0 : index
    %c0_16 = arith.constant 0 : index
    %c0_17 = arith.constant 0 : index
    %11 = vector.load %arg6[%c0_15, %c0_16, %c0_17] : memref<10x10x36xbf16, #tpu.memory_space<vmem>>, vector<8x8x36xbf16>
    %12 = vector.shape_cast %11 : vector<8x8x36xbf16> to vector<64x36xbf16>
    %c0_18 = arith.constant 0 : index
    %c0_19 = arith.constant 0 : index
    %13 = vector.load %arg3[%c0_18, %c0_19] : memref<324x16xbf16, #tpu.memory_space<vmem>>, vector<36x16xbf16>
    %cst_20 = arith.constant dense<0.000000e+00> : vector<64x16xf32>
    %14 = tpu.matmul %12, %13, %cst_20 {dimension_numbers = #tpu.dot_dimension_numbers<[1], [0], [0], [1], [0, 0, 1, 1], [], []>} : vector<64x36xbf16>, vector<36x16xbf16>, vector<64x16xf32> -> vector<64x16xf32>
    %15 = arith.addf %10, %14 : vector<64x16xf32>
    %c0_21 = arith.constant 0 : index
    %c1_22 = arith.constant 1 : index
    %c0_23 = arith.constant 0 : index
    %16 = vector.load %arg6[%c0_21, %c1_22, %c0_23] : memref<10x10x36xbf16, #tpu.memory_space<vmem>>, vector<8x8x36xbf16>
    %17 = vector.shape_cast %16 : vector<8x8x36xbf16> to vector<64x36xbf16>
    %c36 = arith.constant 36 : index
    %c0_24 = arith.constant 0 : index
    %18 = vector.load %arg3[%c36, %c0_24] : memref<324x16xbf16, #tpu.memory_space<vmem>>, vector<36x16xbf16>
    %cst_25 = arith.constant dense<0.000000e+00> : vector<64x16xf32>
    %19 = tpu.matmul %17, %18, %cst_25 {dimension_numbers = #tpu.dot_dimension_numbers<[1], [0], [0], [1], [0, 0, 1, 1], [], []>} : vector<64x36xbf16>, vector<36x16xbf16>, vector<64x16xf32> -> vector<64x16xf32>
    %20 = arith.addf %15, %19 : vector<64x16xf32>
    %c0_26 = arith.constant 0 : index
    %c2 = arith.constant 2 : index
    %c0_27 = arith.constant 0 : index
    %21 = vector.load %arg6[%c0_26, %c2, %c0_27] : memref<10x10x36xbf16, #tpu.memory_space<vmem>>, vector<8x8x36xbf16>
    %22 = vector.shape_cast %21 : vector<8x8x36xbf16> to vector<64x36xbf16>
    %c72 = arith.constant 72 : index
    %c0_28 = arith.constant 0 : index
    %23 = vector.load %arg3[%c72, %c0_28] : memref<324x16xbf16, #tpu.memory_space<vmem>>, vector<36x16xbf16>
    %cst_29 = arith.constant dense<0.000000e+00> : vector<64x16xf32>
    %24 = tpu.matmul %22, %23, %cst_29 {dimension_numbers = #tpu.dot_dimension_numbers<[1], [0], [0], [1], [0, 0, 1, 1], [], []>} : vector<64x36xbf16>, vector<36x16xbf16>, vector<64x16xf32> -> vector<64x16xf32>
    %25 = arith.addf %20, %24 : vector<64x16xf32>
    %c1_30 = arith.constant 1 : index
    %c0_31 = arith.constant 0 : index
    %c0_32 = arith.constant 0 : index
    %26 = vector.load %arg6[%c1_30, %c0_31, %c0_32] : memref<10x10x36xbf16, #tpu.memory_space<vmem>>, vector<8x8x36xbf16>
    %27 = vector.shape_cast %26 : vector<8x8x36xbf16> to vector<64x36xbf16>
    %c108 = arith.constant 108 : index
    %c0_33 = arith.constant 0 : index
    %28 = vector.load %arg3[%c108, %c0_33] : memref<324x16xbf16, #tpu.memory_space<vmem>>, vector<36x16xbf16>
    %cst_34 = arith.constant dense<0.000000e+00> : vector<64x16xf32>
    %29 = tpu.matmul %27, %28, %cst_34 {dimension_numbers = #tpu.dot_dimension_numbers<[1], [0], [0], [1], [0, 0, 1, 1], [], []>} : vector<64x36xbf16>, vector<36x16xbf16>, vector<64x16xf32> -> vector<64x16xf32>
    %30 = arith.addf %25, %29 : vector<64x16xf32>
    %c1_35 = arith.constant 1 : index
    %c1_36 = arith.constant 1 : index
    %c0_37 = arith.constant 0 : index
    %31 = vector.load %arg6[%c1_35, %c1_36, %c0_37] : memref<10x10x36xbf16, #tpu.memory_space<vmem>>, vector<8x8x36xbf16>
    %32 = vector.shape_cast %31 : vector<8x8x36xbf16> to vector<64x36xbf16>
    %c144 = arith.constant 144 : index
    %c0_38 = arith.constant 0 : index
    %33 = vector.load %arg3[%c144, %c0_38] : memref<324x16xbf16, #tpu.memory_space<vmem>>, vector<36x16xbf16>
    %cst_39 = arith.constant dense<0.000000e+00> : vector<64x16xf32>
    %34 = tpu.matmul %32, %33, %cst_39 {dimension_numbers = #tpu.dot_dimension_numbers<[1], [0], [0], [1], [0, 0, 1, 1], [], []>} : vector<64x36xbf16>, vector<36x16xbf16>, vector<64x16xf32> -> vector<64x16xf32>
    %35 = arith.addf %30, %34 : vector<64x16xf32>
    %c1_40 = arith.constant 1 : index
    %c2_41 = arith.constant 2 : index
    %c0_42 = arith.constant 0 : index
    %36 = vector.load %arg6[%c1_40, %c2_41, %c0_42] : memref<10x10x36xbf16, #tpu.memory_space<vmem>>, vector<8x8x36xbf16>
    %37 = vector.shape_cast %36 : vector<8x8x36xbf16> to vector<64x36xbf16>
    %c180 = arith.constant 180 : index
    %c0_43 = arith.constant 0 : index
    %38 = vector.load %arg3[%c180, %c0_43] : memref<324x16xbf16, #tpu.memory_space<vmem>>, vector<36x16xbf16>
    %cst_44 = arith.constant dense<0.000000e+00> : vector<64x16xf32>
    %39 = tpu.matmul %37, %38, %cst_44 {dimension_numbers = #tpu.dot_dimension_numbers<[1], [0], [0], [1], [0, 0, 1, 1], [], []>} : vector<64x36xbf16>, vector<36x16xbf16>, vector<64x16xf32> -> vector<64x16xf32>
    %40 = arith.addf %35, %39 : vector<64x16xf32>
    %c2_45 = arith.constant 2 : index
    %c0_46 = arith.constant 0 : index
    %c0_47 = arith.constant 0 : index
    %41 = vector.load %arg6[%c2_45, %c0_46, %c0_47] : memref<10x10x36xbf16, #tpu.memory_space<vmem>>, vector<8x8x36xbf16>
    %42 = vector.shape_cast %41 : vector<8x8x36xbf16> to vector<64x36xbf16>
    %c216 = arith.constant 216 : index
    %c0_48 = arith.constant 0 : index
    %43 = vector.load %arg3[%c216, %c0_48] : memref<324x16xbf16, #tpu.memory_space<vmem>>, vector<36x16xbf16>
    %cst_49 = arith.constant dense<0.000000e+00> : vector<64x16xf32>
    %44 = tpu.matmul %42, %43, %cst_49 {dimension_numbers = #tpu.dot_dimension_numbers<[1], [0], [0], [1], [0, 0, 1, 1], [], []>} : vector<64x36xbf16>, vector<36x16xbf16>, vector<64x16xf32> -> vector<64x16xf32>
    %45 = arith.addf %40, %44 : vector<64x16xf32>
    %c2_50 = arith.constant 2 : index
    %c1_51 = arith.constant 1 : index
    %c0_52 = arith.constant 0 : index
    %46 = vector.load %arg6[%c2_50, %c1_51, %c0_52] : memref<10x10x36xbf16, #tpu.memory_space<vmem>>, vector<8x8x36xbf16>
    %47 = vector.shape_cast %46 : vector<8x8x36xbf16> to vector<64x36xbf16>
    %c252 = arith.constant 252 : index
    %c0_53 = arith.constant 0 : index
    %48 = vector.load %arg3[%c252, %c0_53] : memref<324x16xbf16, #tpu.memory_space<vmem>>, vector<36x16xbf16>
    %cst_54 = arith.constant dense<0.000000e+00> : vector<64x16xf32>
    %49 = tpu.matmul %47, %48, %cst_54 {dimension_numbers = #tpu.dot_dimension_numbers<[1], [0], [0], [1], [0, 0, 1, 1], [], []>} : vector<64x36xbf16>, vector<36x16xbf16>, vector<64x16xf32> -> vector<64x16xf32>
    %50 = arith.addf %45, %49 : vector<64x16xf32>
    %c2_55 = arith.constant 2 : index
    %c2_56 = arith.constant 2 : index
    %c0_57 = arith.constant 0 : index
    %51 = vector.load %arg6[%c2_55, %c2_56, %c0_57] : memref<10x10x36xbf16, #tpu.memory_space<vmem>>, vector<8x8x36xbf16>
    %52 = vector.shape_cast %51 : vector<8x8x36xbf16> to vector<64x36xbf16>
    %c288 = arith.constant 288 : index
    %c0_58 = arith.constant 0 : index
    %53 = vector.load %arg3[%c288, %c0_58] : memref<324x16xbf16, #tpu.memory_space<vmem>>, vector<36x16xbf16>
    %cst_59 = arith.constant dense<0.000000e+00> : vector<64x16xf32>
    %54 = tpu.matmul %52, %53, %cst_59 {dimension_numbers = #tpu.dot_dimension_numbers<[1], [0], [0], [1], [0, 0, 1, 1], [], []>} : vector<64x36xbf16>, vector<36x16xbf16>, vector<64x16xf32> -> vector<64x16xf32>
    %55 = arith.addf %50, %54 : vector<64x16xf32>
    %56 = vector.shape_cast %55 : vector<64x16xf32> to vector<1x8x8x16xf32>
    %c0_60 = arith.constant 0 : index
    %c0_61 = arith.constant 0 : index
    %c0_62 = arith.constant 0 : index
    %c0_63 = arith.constant 0 : index
    %57 = vector.load %arg4[%c0_60, %c0_61, %c0_62, %c0_63] : memref<1x8x8x16xf32, #tpu.memory_space<vmem>>, vector<1x8x8x16xf32>
    tpu.vector_store %arg4[%c0_60, %c0_61, %c0_62, %c0_63], %56 {strides = array<i32>} : memref<1x8x8x16xf32, #tpu.memory_space<vmem>>, vector<1x8x8x16xf32>,
    %cst_64 = arith.constant dense<0.000000e+00> : vector<16xf32>
    %58 = vector.multi_reduction <add>, %55, %cst_64 [0] : vector<64x16xf32> to vector<16xf32>
    %59 = vector.shape_cast %58 : vector<16xf32> to vector<1x16xf32>
    %c0_65 = arith.constant 0 : index
    %c0_66 = arith.constant 0 : index
    %c0_67 = arith.constant 0 : index
    %60 = vector.load %arg5[%c0_65, %c0_66, %c0_67] : memref<1x2x16xf32, #tpu.memory_space<vmem>>, vector<1x1x16xf32>
    %61 = vector.shape_cast %60 : vector<1x1x16xf32> to vector<1x16xf32>
    %62 = vector.shape_cast %59 : vector<1x16xf32> to vector<1x1x16xf32>
    tpu.vector_store %arg5[%c0_65, %c0_66, %c0_67], %62 {strides = array<i32>} : memref<1x2x16xf32, #tpu.memory_space<vmem>>, vector<1x1x16xf32>,
    %63 = arith.mulf %55, %55 : vector<64x16xf32>
    %cst_68 = arith.constant dense<0.000000e+00> : vector<16xf32>
    %64 = vector.multi_reduction <add>, %63, %cst_68 [0] : vector<64x16xf32> to vector<16xf32>
    %65 = vector.shape_cast %64 : vector<16xf32> to vector<1x16xf32>
    %c0_69 = arith.constant 0 : index
    %c1_70 = arith.constant 1 : index
    %c0_71 = arith.constant 0 : index
    %66 = vector.load %arg5[%c0_69, %c1_70, %c0_71] : memref<1x2x16xf32, #tpu.memory_space<vmem>>, vector<1x1x16xf32>
    %67 = vector.shape_cast %66 : vector<1x1x16xf32> to vector<1x16xf32>
    %68 = vector.shape_cast %65 : vector<1x16xf32> to vector<1x1x16xf32>
    tpu.vector_store %arg5[%c0_69, %c1_70, %c0_71], %68 {strides = array<i32>} : memref<1x2x16xf32, #tpu.memory_space<vmem>>, vector<1x1x16xf32>,
    return
  }
  func.func @transform_0(%arg0: i32) -> (i32, i32, i32, i32) {
    %c0_i32 = arith.constant 0 : i32
    %c0_i32_0 = arith.constant 0 : i32
    %c0_i32_1 = arith.constant 0 : i32
    %c0_i32_2 = arith.constant 0 : i32
    return %arg0, %c0_i32, %c0_i32_0, %c0_i32_1 : i32, i32, i32, i32
  }
  func.func @transform_1(%arg0: i32) -> (i32, i32, i32, i32) {
    %c0_i32 = arith.constant 0 : i32
    %c0_i32_0 = arith.constant 0 : i32
    %c0_i32_1 = arith.constant 0 : i32
    %c0_i32_2 = arith.constant 0 : i32
    return %arg0, %c0_i32, %c0_i32_0, %c0_i32_1 : i32, i32, i32, i32
  }
  func.func @transform_2(%arg0: i32) -> (i32, i32) {
    %c0_i32 = arith.constant 0 : i32
    %c0_i32_0 = arith.constant 0 : i32
    %c0_i32_1 = arith.constant 0 : i32
    return %c0_i32, %c0_i32_0 : i32, i32
  }
  func.func @transform_3(%arg0: i32) -> (i32, i32, i32, i32) {
    %c0_i32 = arith.constant 0 : i32
    %c0_i32_0 = arith.constant 0 : i32
    %c0_i32_1 = arith.constant 0 : i32
    %c0_i32_2 = arith.constant 0 : i32
    return %arg0, %c0_i32, %c0_i32_0, %c0_i32_1 : i32, i32, i32, i32
  }
  func.func @transform_4(%arg0: i32) -> (i32, i32, i32) {
    %c0_i32 = arith.constant 0 : i32
    %c0_i32_0 = arith.constant 0 : i32
    %c0_i32_1 = arith.constant 0 : i32
    return %arg0, %c0_i32, %c0_i32_0 : i32, i32, i32
  }
}

module attributes {stable_mosaic.version = 11 : i64} {
  func.func @_bn1_conv2_stats_kernel(%arg0: i32, %arg1: memref<1x8x8x16xf32, #tpu.memory_space<vmem>>, %arg2: memref<1x16xf32, #tpu.memory_space<vmem>>, %arg3: memref<1x16xf32, #tpu.memory_space<vmem>>, %arg4: memref<144x16xbf16, #tpu.memory_space<vmem>>, %arg5: memref<1x8x8x16xf32, #tpu.memory_space<vmem>>, %arg6: memref<1x2x16xf32, #tpu.memory_space<vmem>>, %arg7: memref<10x10x16xbf16, #tpu.memory_space<vmem>>) attributes {dimension_semantics = [#tpu.dimension_semantics<parallel>], iteration_bounds = array<i64: 2>, scalar_prefetch = 0 : i64, scratch_operands = 1 : i64, tpu.core_type = #tpu.core_type<tc>, window_params = [{transform_indices = @transform_0, window_bounds = array<i64: 1, 8, 8, 16>}, {pipeline_mode = #tpu.pipeline_mode<synchronous>, transform_indices = @transform_1, window_bounds = array<i64: 1, 16>}, {pipeline_mode = #tpu.pipeline_mode<synchronous>, transform_indices = @transform_2, window_bounds = array<i64: 1, 16>}, {pipeline_mode = #tpu.pipeline_mode<synchronous>, transform_indices = @transform_3, window_bounds = array<i64: 144, 16>}, {transform_indices = @transform_4, window_bounds = array<i64: 1, 8, 8, 16>}, {transform_indices = @transform_5, window_bounds = array<i64: 1, 2, 16>}]} {
    %c0 = arith.constant 0 : index
    %c0_0 = arith.constant 0 : index
    %c0_1 = arith.constant 0 : index
    %c0_2 = arith.constant 0 : index
    %0 = vector.load %arg1[%c0, %c0_0, %c0_1, %c0_2] : memref<1x8x8x16xf32, #tpu.memory_space<vmem>>, vector<1x8x8x16xf32>
    %1 = vector.shape_cast %0 : vector<1x8x8x16xf32> to vector<8x8x16xf32>
    %c0_3 = arith.constant 0 : index
    %c0_4 = arith.constant 0 : index
    %2 = vector.load %arg2[%c0_3, %c0_4] : memref<1x16xf32, #tpu.memory_space<vmem>>, vector<1x16xf32>
    %3 = vector.shape_cast %2 : vector<1x16xf32> to vector<1x1x16xf32>
    %4 = vector.broadcast %3 : vector<1x1x16xf32> to vector<8x8x16xf32>
    %5 = arith.mulf %1, %4 : vector<8x8x16xf32>
    %c0_5 = arith.constant 0 : index
    %c0_6 = arith.constant 0 : index
    %6 = vector.load %arg3[%c0_5, %c0_6] : memref<1x16xf32, #tpu.memory_space<vmem>>, vector<1x16xf32>
    %7 = vector.shape_cast %6 : vector<1x16xf32> to vector<1x1x16xf32>
    %8 = vector.broadcast %7 : vector<1x1x16xf32> to vector<8x8x16xf32>
    %9 = arith.addf %5, %8 : vector<8x8x16xf32>
    %cst = arith.constant 0.000000e+00 : f32
    %10 = vector.broadcast %cst : f32 to vector<8x8x16xf32>
    %11 = arith.maximumf %9, %10 : vector<8x8x16xf32>
    %cst_7 = arith.constant 0.000000e+00 : bf16
    %12 = vector.broadcast %cst_7 : bf16 to vector<10x10x16xbf16>
    %c0_8 = arith.constant 0 : index
    %c0_9 = arith.constant 0 : index
    %c0_10 = arith.constant 0 : index
    %13 = vector.load %arg7[%c0_8, %c0_9, %c0_10] : memref<10x10x16xbf16, #tpu.memory_space<vmem>>, vector<10x10x16xbf16>
    tpu.vector_store %arg7[%c0_8, %c0_9, %c0_10], %12 {strides = array<i32>} : memref<10x10x16xbf16, #tpu.memory_space<vmem>>, vector<10x10x16xbf16>,
    %14 = arith.truncf %11 : vector<8x8x16xf32> to vector<8x8x16xbf16>
    %c1 = arith.constant 1 : index
    %c1_11 = arith.constant 1 : index
    %c0_12 = arith.constant 0 : index
    %15 = vector.load %arg7[%c1, %c1_11, %c0_12] : memref<10x10x16xbf16, #tpu.memory_space<vmem>>, vector<8x8x16xbf16>
    tpu.vector_store %arg7[%c1, %c1_11, %c0_12], %14 {strides = array<i32>} : memref<10x10x16xbf16, #tpu.memory_space<vmem>>, vector<8x8x16xbf16>,
    %cst_13 = arith.constant 0.000000e+00 : f32
    %16 = vector.broadcast %cst_13 : f32 to vector<64x16xf32>
    %c0_14 = arith.constant 0 : index
    %c0_15 = arith.constant 0 : index
    %c0_16 = arith.constant 0 : index
    %17 = vector.load %arg7[%c0_14, %c0_15, %c0_16] : memref<10x10x16xbf16, #tpu.memory_space<vmem>>, vector<8x8x16xbf16>
    %18 = vector.shape_cast %17 : vector<8x8x16xbf16> to vector<64x16xbf16>
    %c0_17 = arith.constant 0 : index
    %c0_18 = arith.constant 0 : index
    %19 = vector.load %arg4[%c0_17, %c0_18] : memref<144x16xbf16, #tpu.memory_space<vmem>>, vector<16x16xbf16>
    %cst_19 = arith.constant dense<0.000000e+00> : vector<64x16xf32>
    %20 = tpu.matmul %18, %19, %cst_19 {dimension_numbers = #tpu.dot_dimension_numbers<[1], [0], [0], [1], [0, 0, 1, 1], [], []>} : vector<64x16xbf16>, vector<16x16xbf16>, vector<64x16xf32> -> vector<64x16xf32>
    %21 = arith.addf %16, %20 : vector<64x16xf32>
    %c0_20 = arith.constant 0 : index
    %c1_21 = arith.constant 1 : index
    %c0_22 = arith.constant 0 : index
    %22 = vector.load %arg7[%c0_20, %c1_21, %c0_22] : memref<10x10x16xbf16, #tpu.memory_space<vmem>>, vector<8x8x16xbf16>
    %23 = vector.shape_cast %22 : vector<8x8x16xbf16> to vector<64x16xbf16>
    %c16 = arith.constant 16 : index
    %c0_23 = arith.constant 0 : index
    %24 = vector.load %arg4[%c16, %c0_23] : memref<144x16xbf16, #tpu.memory_space<vmem>>, vector<16x16xbf16>
    %cst_24 = arith.constant dense<0.000000e+00> : vector<64x16xf32>
    %25 = tpu.matmul %23, %24, %cst_24 {dimension_numbers = #tpu.dot_dimension_numbers<[1], [0], [0], [1], [0, 0, 1, 1], [], []>} : vector<64x16xbf16>, vector<16x16xbf16>, vector<64x16xf32> -> vector<64x16xf32>
    %26 = arith.addf %21, %25 : vector<64x16xf32>
    %c0_25 = arith.constant 0 : index
    %c2 = arith.constant 2 : index
    %c0_26 = arith.constant 0 : index
    %27 = vector.load %arg7[%c0_25, %c2, %c0_26] : memref<10x10x16xbf16, #tpu.memory_space<vmem>>, vector<8x8x16xbf16>
    %28 = vector.shape_cast %27 : vector<8x8x16xbf16> to vector<64x16xbf16>
    %c32 = arith.constant 32 : index
    %c0_27 = arith.constant 0 : index
    %29 = vector.load %arg4[%c32, %c0_27] : memref<144x16xbf16, #tpu.memory_space<vmem>>, vector<16x16xbf16>
    %cst_28 = arith.constant dense<0.000000e+00> : vector<64x16xf32>
    %30 = tpu.matmul %28, %29, %cst_28 {dimension_numbers = #tpu.dot_dimension_numbers<[1], [0], [0], [1], [0, 0, 1, 1], [], []>} : vector<64x16xbf16>, vector<16x16xbf16>, vector<64x16xf32> -> vector<64x16xf32>
    %31 = arith.addf %26, %30 : vector<64x16xf32>
    %c1_29 = arith.constant 1 : index
    %c0_30 = arith.constant 0 : index
    %c0_31 = arith.constant 0 : index
    %32 = vector.load %arg7[%c1_29, %c0_30, %c0_31] : memref<10x10x16xbf16, #tpu.memory_space<vmem>>, vector<8x8x16xbf16>
    %33 = vector.shape_cast %32 : vector<8x8x16xbf16> to vector<64x16xbf16>
    %c48 = arith.constant 48 : index
    %c0_32 = arith.constant 0 : index
    %34 = vector.load %arg4[%c48, %c0_32] : memref<144x16xbf16, #tpu.memory_space<vmem>>, vector<16x16xbf16>
    %cst_33 = arith.constant dense<0.000000e+00> : vector<64x16xf32>
    %35 = tpu.matmul %33, %34, %cst_33 {dimension_numbers = #tpu.dot_dimension_numbers<[1], [0], [0], [1], [0, 0, 1, 1], [], []>} : vector<64x16xbf16>, vector<16x16xbf16>, vector<64x16xf32> -> vector<64x16xf32>
    %36 = arith.addf %31, %35 : vector<64x16xf32>
    %c1_34 = arith.constant 1 : index
    %c1_35 = arith.constant 1 : index
    %c0_36 = arith.constant 0 : index
    %37 = vector.load %arg7[%c1_34, %c1_35, %c0_36] : memref<10x10x16xbf16, #tpu.memory_space<vmem>>, vector<8x8x16xbf16>
    %38 = vector.shape_cast %37 : vector<8x8x16xbf16> to vector<64x16xbf16>
    %c64 = arith.constant 64 : index
    %c0_37 = arith.constant 0 : index
    %39 = vector.load %arg4[%c64, %c0_37] : memref<144x16xbf16, #tpu.memory_space<vmem>>, vector<16x16xbf16>
    %cst_38 = arith.constant dense<0.000000e+00> : vector<64x16xf32>
    %40 = tpu.matmul %38, %39, %cst_38 {dimension_numbers = #tpu.dot_dimension_numbers<[1], [0], [0], [1], [0, 0, 1, 1], [], []>} : vector<64x16xbf16>, vector<16x16xbf16>, vector<64x16xf32> -> vector<64x16xf32>
    %41 = arith.addf %36, %40 : vector<64x16xf32>
    %c1_39 = arith.constant 1 : index
    %c2_40 = arith.constant 2 : index
    %c0_41 = arith.constant 0 : index
    %42 = vector.load %arg7[%c1_39, %c2_40, %c0_41] : memref<10x10x16xbf16, #tpu.memory_space<vmem>>, vector<8x8x16xbf16>
    %43 = vector.shape_cast %42 : vector<8x8x16xbf16> to vector<64x16xbf16>
    %c80 = arith.constant 80 : index
    %c0_42 = arith.constant 0 : index
    %44 = vector.load %arg4[%c80, %c0_42] : memref<144x16xbf16, #tpu.memory_space<vmem>>, vector<16x16xbf16>
    %cst_43 = arith.constant dense<0.000000e+00> : vector<64x16xf32>
    %45 = tpu.matmul %43, %44, %cst_43 {dimension_numbers = #tpu.dot_dimension_numbers<[1], [0], [0], [1], [0, 0, 1, 1], [], []>} : vector<64x16xbf16>, vector<16x16xbf16>, vector<64x16xf32> -> vector<64x16xf32>
    %46 = arith.addf %41, %45 : vector<64x16xf32>
    %c2_44 = arith.constant 2 : index
    %c0_45 = arith.constant 0 : index
    %c0_46 = arith.constant 0 : index
    %47 = vector.load %arg7[%c2_44, %c0_45, %c0_46] : memref<10x10x16xbf16, #tpu.memory_space<vmem>>, vector<8x8x16xbf16>
    %48 = vector.shape_cast %47 : vector<8x8x16xbf16> to vector<64x16xbf16>
    %c96 = arith.constant 96 : index
    %c0_47 = arith.constant 0 : index
    %49 = vector.load %arg4[%c96, %c0_47] : memref<144x16xbf16, #tpu.memory_space<vmem>>, vector<16x16xbf16>
    %cst_48 = arith.constant dense<0.000000e+00> : vector<64x16xf32>
    %50 = tpu.matmul %48, %49, %cst_48 {dimension_numbers = #tpu.dot_dimension_numbers<[1], [0], [0], [1], [0, 0, 1, 1], [], []>} : vector<64x16xbf16>, vector<16x16xbf16>, vector<64x16xf32> -> vector<64x16xf32>
    %51 = arith.addf %46, %50 : vector<64x16xf32>
    %c2_49 = arith.constant 2 : index
    %c1_50 = arith.constant 1 : index
    %c0_51 = arith.constant 0 : index
    %52 = vector.load %arg7[%c2_49, %c1_50, %c0_51] : memref<10x10x16xbf16, #tpu.memory_space<vmem>>, vector<8x8x16xbf16>
    %53 = vector.shape_cast %52 : vector<8x8x16xbf16> to vector<64x16xbf16>
    %c112 = arith.constant 112 : index
    %c0_52 = arith.constant 0 : index
    %54 = vector.load %arg4[%c112, %c0_52] : memref<144x16xbf16, #tpu.memory_space<vmem>>, vector<16x16xbf16>
    %cst_53 = arith.constant dense<0.000000e+00> : vector<64x16xf32>
    %55 = tpu.matmul %53, %54, %cst_53 {dimension_numbers = #tpu.dot_dimension_numbers<[1], [0], [0], [1], [0, 0, 1, 1], [], []>} : vector<64x16xbf16>, vector<16x16xbf16>, vector<64x16xf32> -> vector<64x16xf32>
    %56 = arith.addf %51, %55 : vector<64x16xf32>
    %c2_54 = arith.constant 2 : index
    %c2_55 = arith.constant 2 : index
    %c0_56 = arith.constant 0 : index
    %57 = vector.load %arg7[%c2_54, %c2_55, %c0_56] : memref<10x10x16xbf16, #tpu.memory_space<vmem>>, vector<8x8x16xbf16>
    %58 = vector.shape_cast %57 : vector<8x8x16xbf16> to vector<64x16xbf16>
    %c128 = arith.constant 128 : index
    %c0_57 = arith.constant 0 : index
    %59 = vector.load %arg4[%c128, %c0_57] : memref<144x16xbf16, #tpu.memory_space<vmem>>, vector<16x16xbf16>
    %cst_58 = arith.constant dense<0.000000e+00> : vector<64x16xf32>
    %60 = tpu.matmul %58, %59, %cst_58 {dimension_numbers = #tpu.dot_dimension_numbers<[1], [0], [0], [1], [0, 0, 1, 1], [], []>} : vector<64x16xbf16>, vector<16x16xbf16>, vector<64x16xf32> -> vector<64x16xf32>
    %61 = arith.addf %56, %60 : vector<64x16xf32>
    %62 = vector.shape_cast %61 : vector<64x16xf32> to vector<1x8x8x16xf32>
    %c0_59 = arith.constant 0 : index
    %c0_60 = arith.constant 0 : index
    %c0_61 = arith.constant 0 : index
    %c0_62 = arith.constant 0 : index
    %63 = vector.load %arg5[%c0_59, %c0_60, %c0_61, %c0_62] : memref<1x8x8x16xf32, #tpu.memory_space<vmem>>, vector<1x8x8x16xf32>
    tpu.vector_store %arg5[%c0_59, %c0_60, %c0_61, %c0_62], %62 {strides = array<i32>} : memref<1x8x8x16xf32, #tpu.memory_space<vmem>>, vector<1x8x8x16xf32>,
    %cst_63 = arith.constant dense<0.000000e+00> : vector<16xf32>
    %64 = vector.multi_reduction <add>, %61, %cst_63 [0] : vector<64x16xf32> to vector<16xf32>
    %65 = vector.shape_cast %64 : vector<16xf32> to vector<1x16xf32>
    %c0_64 = arith.constant 0 : index
    %c0_65 = arith.constant 0 : index
    %c0_66 = arith.constant 0 : index
    %66 = vector.load %arg6[%c0_64, %c0_65, %c0_66] : memref<1x2x16xf32, #tpu.memory_space<vmem>>, vector<1x1x16xf32>
    %67 = vector.shape_cast %66 : vector<1x1x16xf32> to vector<1x16xf32>
    %68 = vector.shape_cast %65 : vector<1x16xf32> to vector<1x1x16xf32>
    tpu.vector_store %arg6[%c0_64, %c0_65, %c0_66], %68 {strides = array<i32>} : memref<1x2x16xf32, #tpu.memory_space<vmem>>, vector<1x1x16xf32>,
    %69 = arith.mulf %61, %61 : vector<64x16xf32>
    %cst_67 = arith.constant dense<0.000000e+00> : vector<16xf32>
    %70 = vector.multi_reduction <add>, %69, %cst_67 [0] : vector<64x16xf32> to vector<16xf32>
    %71 = vector.shape_cast %70 : vector<16xf32> to vector<1x16xf32>
    %c0_68 = arith.constant 0 : index
    %c1_69 = arith.constant 1 : index
    %c0_70 = arith.constant 0 : index
    %72 = vector.load %arg6[%c0_68, %c1_69, %c0_70] : memref<1x2x16xf32, #tpu.memory_space<vmem>>, vector<1x1x16xf32>
    %73 = vector.shape_cast %72 : vector<1x1x16xf32> to vector<1x16xf32>
    %74 = vector.shape_cast %71 : vector<1x16xf32> to vector<1x1x16xf32>
    tpu.vector_store %arg6[%c0_68, %c1_69, %c0_70], %74 {strides = array<i32>} : memref<1x2x16xf32, #tpu.memory_space<vmem>>, vector<1x1x16xf32>,
    return
  }
  func.func @transform_0(%arg0: i32) -> (i32, i32, i32, i32) {
    %c0_i32 = arith.constant 0 : i32
    %c0_i32_0 = arith.constant 0 : i32
    %c0_i32_1 = arith.constant 0 : i32
    %c0_i32_2 = arith.constant 0 : i32
    return %arg0, %c0_i32, %c0_i32_0, %c0_i32_1 : i32, i32, i32, i32
  }
  func.func @transform_1(%arg0: i32) -> (i32, i32) {
    %c0_i32 = arith.constant 0 : i32
    %c0_i32_0 = arith.constant 0 : i32
    %c0_i32_1 = arith.constant 0 : i32
    return %c0_i32, %c0_i32_0 : i32, i32
  }
  func.func @transform_2(%arg0: i32) -> (i32, i32) {
    %c0_i32 = arith.constant 0 : i32
    %c0_i32_0 = arith.constant 0 : i32
    %c0_i32_1 = arith.constant 0 : i32
    return %c0_i32, %c0_i32_0 : i32, i32
  }
  func.func @transform_3(%arg0: i32) -> (i32, i32) {
    %c0_i32 = arith.constant 0 : i32
    %c0_i32_0 = arith.constant 0 : i32
    %c0_i32_1 = arith.constant 0 : i32
    return %c0_i32, %c0_i32_0 : i32, i32
  }
  func.func @transform_4(%arg0: i32) -> (i32, i32, i32, i32) {
    %c0_i32 = arith.constant 0 : i32
    %c0_i32_0 = arith.constant 0 : i32
    %c0_i32_1 = arith.constant 0 : i32
    %c0_i32_2 = arith.constant 0 : i32
    return %arg0, %c0_i32, %c0_i32_0, %c0_i32_1 : i32, i32, i32, i32
  }
  func.func @transform_5(%arg0: i32) -> (i32, i32, i32) {
    %c0_i32 = arith.constant 0 : i32
    %c0_i32_0 = arith.constant 0 : i32
    %c0_i32_1 = arith.constant 0 : i32
    return %arg0, %c0_i32, %c0_i32_0 : i32, i32, i32
  }
}

</mosaic_0001>

<llo_original>
// kernel: frru_forward.5
$region0: #{frru_forward.5}
  #allocation0 [shape = 'u32[]', space=smem, size = 0x4, offset = 0x4, fixed_abs, tag = 'smem constant byte address 0x4 - core index']
  #allocation1 [shape = 'u32[144,128]{1,0:T(1,128)}', space=vmem, size = 0x12000, scoped, tag = 'internal scratch']
  %s0 = inlined_call_operand.vmem [shape: f32[2,64,16], index: 0, kind: input, shape index: {}]
  %s1 = inlined_call_operand.vmem [shape: f32[1,16], index: 1, kind: input, shape index: {}]
  %s2 = inlined_call_operand.vmem [shape: f32[1,16], index: 2, kind: input, shape index: {}]
  %s3 = inlined_call_operand.vmem [shape: bf16[16,32], index: 3, kind: input, shape index: {}]
  %s4 = inlined_call_operand.vmem [shape: f32[1,32], index: 4, kind: input, shape index: {}]
  %s5 = inlined_call_operand.vmem [shape: f32[2,16,64], index: 5, kind: output, shape index: {0}]
  %s6 = inlined_call_operand.vmem [shape: f32[2,32,64], index: 6, kind: output, shape index: {1}]
  %7 = xla_tuple %s5, %s6
  %s8 = sld [smem:[#allocation0]]
  $region61: #{frru_forward.5} parent=0
    _
  %s10 = ssub.s32 1, %s8
  %s11 = scalar_select 0, %s10, %s8
  loop: start=0, step=1, limit=4
  $region2: #{frru_forward.5} parent=0 // loop_pre_header
    _
  $region3: #{frru_forward.5} parent=0 // loop_header
    %s13 = sphi 0, %s17
    %p14 = scmp.ge.s32.totalorder %s13, 4
    %s20 = sphi 0, %s32
    %s21 = sphi 0, %s28
    %s22 = sphi 0, %s20
    %s23 = sphi 0, %s21
    %s24 = sphi 0, %s22
    %s25 = sphi 0, %s23
    %s37 = sphi 0, %s39
    %s40 = sphi 0, %s37
    %s41 = sphi 0, %s40
    %s57 = sphi 0, %s41
    %s61 = sphi 0, %s61
    %s63 = sphi 0, %s61
    %s64 = sphi 0, %s63
    %s78 = sphi 0, %s64
    %s82 = sphi 0, %s82
    %s84 = sphi 0, %s82
    %s85 = sphi 0, %s84
    %s99 = sphi 0, %s85
    %s103 = sphi 0, %s103
    %s105 = sphi 0, %s103
    %s106 = sphi 0, %s105
    %s120 = sphi 0, %s106
    %s124 = sphi 0, %s124
    %s126 = sphi 0, %s124
    %s127 = sphi 0, %s126
    %s141 = sphi 0, %s127
    %s149 = sphi 0, %s151
    %s152 = sphi 0, %s149
    %s153 = sphi 0, %s152
    %s169 = sphi 0, %s153
    %s177 = sphi 0, %s179
    %s180 = sphi 0, %s177
    %s181 = sphi 0, %s180
    %s197 = sphi 0, %s181
  $region4: #{frru_forward.5} parent=0 // loop_header_branch
    %16 = sbr.rel (%p14) target = $region8
  $region5: #{frru_forward.5} parent=0 // loop_body
    %s18 = ssub.s32 %s13, 1
    %s19 = ssub.s32 %s13, 2
    %s26 = sadd.s32 1, %s21
    %p27 = scmp.ge.s32.totalorder %s26, 1
    %s28 = scalar_select %p27, 0, %s26
    %s29 = sadd.s32 1, %s20
    %s30 = scalar_select %p27, %s29, %s20
    %p31 = scmp.ge.s32.totalorder %s30, 2
    %s32 = scalar_select %p31, 0, %s30
    %s33 = ssub.s32 %s20, %s32
    %s34 = ssub.s32 %s21, %s28
    %s35 = sor.u32 %s33, %s34
    %p36 = scmp.eq.s32.totalorder %s35, 0
    %s38 = sadd.s32 %s37, 1
    %s39 = scalar_select %p36, %s37, %s38
    %p42 = pneg %p36
    %p43 = scmp.eq.s32.totalorder %s13, 1
    %p44 = por %p42, %p43
    %p45 = scmp.ne.s32.totalorder %s37, %s40
    %p46 = scmp.eq.s32.totalorder %s13, 0
    %p47 = por %p45, %p46
    %p48 = scmp.ne.s32.totalorder %s37, %s40
    %p49 = scmp.eq.s32.totalorder %s18, 1
    %p50 = por %p48, %p49
    %p51 = scmp.ne.s32.totalorder %s40, %s41
    %p52 = scmp.eq.s32.totalorder %s18, 0
    %p53 = por %p51, %p52
    %p54 = scmp.ne.s32.totalorder %s40, %s41
    %p55 = scmp.eq.s32.totalorder %s19, 1
    %p56 = por %p54, %p55
    %p58 = scmp.ne.s32.totalorder %s41, %s57
    %p59 = scmp.eq.s32.totalorder %s19, 0
    %p60 = por %p58, %p59
    %s62 = sadd.s32 %s61, 1
    %p65 = scmp.eq.s32.totalorder %s13, 1
    %p66 = scmp.ne.s32.totalorder %s61, %s63
    %p67 = scmp.eq.s32.totalorder %s13, 0
    %p68 = por %p66, %p67
    %p69 = scmp.ne.s32.totalorder %s61, %s63
    %p70 = scmp.eq.s32.totalorder %s18, 1
    %p71 = por %p69, %p70
    %p72 = scmp.ne.s32.totalorder %s63, %s64
    %p73 = scmp.eq.s32.totalorder %s18, 0
    %p74 = por %p72, %p73
    %p75 = scmp.ne.s32.totalorder %s63, %s64
    %p76 = scmp.eq.s32.totalorder %s19, 1
    %p77 = por %p75, %p76
    %p79 = scmp.ne.s32.totalorder %s64, %s78
    %p80 = scmp.eq.s32.totalorder %s19, 0
    %p81 = por %p79, %p80
    %s83 = sadd.s32 %s82, 1
    %p86 = scmp.eq.s32.totalorder %s13, 1
    %p87 = scmp.ne.s32.totalorder %s82, %s84
    %p88 = scmp.eq.s32.totalorder %s13, 0
    %p89 = por %p87, %p88
    %p90 = scmp.ne.s32.totalorder %s82, %s84
    %p91 = scmp.eq.s32.totalorder %s18, 1
    %p92 = por %p90, %p91
    %p93 = scmp.ne.s32.totalorder %s84, %s85
    %p94 = scmp.eq.s32.totalorder %s18, 0
    %p95 = por %p93, %p94
    %p96 = scmp.ne.s32.totalorder %s84, %s85
    %p97 = scmp.eq.s32.totalorder %s19, 1
    %p98 = por %p96, %p97
    %p100 = scmp.ne.s32.totalorder %s85, %s99
    %p101 = scmp.eq.s32.totalorder %s19, 0
    %p102 = por %p100, %p101
    %s104 = sadd.s32 %s103, 1
    %p107 = scmp.eq.s32.totalorder %s13, 1
    %p108 = scmp.ne.s32.totalorder %s103, %s105
    %p109 = scmp.eq.s32.totalorder %s13, 0
    %p110 = por %p108, %p109
    %p111 = scmp.ne.s32.totalorder %s103, %s105
    %p112 = scmp.eq.s32.totalorder %s18, 1
    %p113 = por %p111, %p112
    %p114 = scmp.ne.s32.totalorder %s105, %s106
    %p115 = scmp.eq.s32.totalorder %s18, 0
    %p116 = por %p114, %p115
    %p117 = scmp.ne.s32.totalorder %s105, %s106
    %p118 = scmp.eq.s32.totalorder %s19, 1
    %p119 = por %p117, %p118
    %p121 = scmp.ne.s32.totalorder %s106, %s120
    %p122 = scmp.eq.s32.totalorder %s19, 0
    %p123 = por %p121, %p122
    %s125 = sadd.s32 %s124, 1
    %p128 = scmp.eq.s32.totalorder %s13, 1
    %p129 = scmp.ne.s32.totalorder %s124, %s126
    %p130 = scmp.eq.s32.totalorder %s13, 0
    %p131 = por %p129, %p130
    %p132 = scmp.ne.s32.totalorder %s124, %s126
    %p133 = scmp.eq.s32.totalorder %s18, 1
    %p134 = por %p132, %p133
    %p135 = scmp.ne.s32.totalorder %s126, %s127
    %p136 = scmp.eq.s32.totalorder %s18, 0
    %p137 = por %p135, %p136
    %p138 = scmp.ne.s32.totalorder %s126, %s127
    %p139 = scmp.eq.s32.totalorder %s19, 1
    %p140 = por %p138, %p139
    %p142 = scmp.ne.s32.totalorder %s127, %s141
    %p143 = scmp.eq.s32.totalorder %s19, 0
    %p144 = por %p142, %p143
    %s145 = ssub.s32 %s20, %s32
    %s146 = ssub.s32 %s21, %s28
    %s147 = sor.u32 %s145, %s146
    %p148 = scmp.eq.s32.totalorder %s147, 0
    %s150 = sadd.s32 %s149, 1
    %s151 = scalar_select %p148, %s149, %s150
    %p154 = pneg %p148
    %p155 = scmp.eq.s32.totalorder %s13, 1
    %p156 = por %p154, %p155
    %p157 = scmp.ne.s32.totalorder %s149, %s152
    %p158 = scmp.eq.s32.totalorder %s13, 0
    %p159 = por %p157, %p158
    %p160 = scmp.ne.s32.totalorder %s149, %s152
    %p161 = scmp.eq.s32.totalorder %s18, 1
    %p162 = por %p160, %p161
    %p163 = scmp.ne.s32.totalorder %s152, %s153
    %p164 = scmp.eq.s32.totalorder %s18, 0
    %p165 = por %p163, %p164
    %p166 = scmp.ne.s32.totalorder %s152, %s153
    %p167 = scmp.eq.s32.totalorder %s19, 1
    %p168 = por %p166, %p167
    %p170 = scmp.ne.s32.totalorder %s153, %s169
    %p171 = scmp.eq.s32.totalorder %s19, 0
    %p172 = por %p170, %p171
    %s173 = ssub.s32 %s20, %s32
    %s174 = ssub.s32 %s21, %s28
    %s175 = sor.u32 %s173, %s174
    %p176 = scmp.eq.s32.totalorder %s175, 0
    %s178 = sadd.s32 %s177, 1
    %s179 = scalar_select %p176, %s177, %s178
    %p182 = pneg %p176
    %p183 = scmp.eq.s32.totalorder %s13, 1
    %p184 = por %p182, %p183
    %p185 = scmp.ne.s32.totalorder %s177, %s180
    %p186 = scmp.eq.s32.totalorder %s13, 0
    %p187 = por %p185, %p186
    %p188 = scmp.ne.s32.totalorder %s177, %s180
    %p189 = scmp.eq.s32.totalorder %s18, 1
    %p190 = por %p188, %p189
    %p191 = scmp.ne.s32.totalorder %s180, %s181
    %p192 = scmp.eq.s32.totalorder %s18, 0
    %p193 = por %p191, %p192
    %p194 = scmp.ne.s32.totalorder %s180, %s181
    %p195 = scmp.eq.s32.totalorder %s19, 1
    %p196 = por %p194, %p195
    %p198 = scmp.ne.s32.totalorder %s181, %s197
    %p199 = scmp.eq.s32.totalorder %s19, 0
    %p200 = por %p198, %p199
    %p201 = scmp.le.s32.totalorder 1, %s13
    %p202 = scmp.lt.s32.totalorder %s13, 3
    %p203 = pnand %p201, %p202
    %p204 = pneg %p203
    // Predicated region
    $region9: #{frru_forward.5} parent=5 // pred_check
      _
    $region10: #{frru_forward.5} parent=5 // pred_check_branch
      %206 = sbr.rel (%p203) target = $region12
    $region11: #{frru_forward.5} parent=5 // pred_region
      %s207 = ssub.s32 %s13, 1
      // Predicated region
      $region13: #{frru_forward.5} parent=11 // pred_check
        %p208 = pneg %p74
      $region14: #{frru_forward.5} parent=11 // pred_check_branch
        %210 = sbr.rel (%p208) target = $region16
      $region15: #{frru_forward.5} parent=11 // pred_region
        _
      $region16: #{frru_forward.5} parent=11 // pred_fallthru
        _
      // Predicated region
      $region17: #{frru_forward.5} parent=11 // pred_check
        %p211 = pneg %p95
      $region18: #{frru_forward.5} parent=11 // pred_check_branch
        %213 = sbr.rel (%p211) target = $region20
      $region19: #{frru_forward.5} parent=11 // pred_region
        _
      $region20: #{frru_forward.5} parent=11 // pred_fallthru
        _
      // Predicated region
      $region21: #{frru_forward.5} parent=11 // pred_check
        %p214 = pneg %p116
      $region22: #{frru_forward.5} parent=11 // pred_check_branch
        %216 = sbr.rel (%p214) target = $region24
      $region23: #{frru_forward.5} parent=11 // pred_region
        _
      $region24: #{frru_forward.5} parent=11 // pred_fallthru
        _
      // Predicated region
      $region25: #{frru_forward.5} parent=11 // pred_check
        %p217 = pneg %p137
      $region26: #{frru_forward.5} parent=11 // pred_check_branch
        %219 = sbr.rel (%p217) target = $region28
      $region27: #{frru_forward.5} parent=11 // pred_region
        _
      $region28: #{frru_forward.5} parent=11 // pred_fallthru
        _
    $region12: #{frru_forward.5} parent=5 // pred_fallthru
      _
    %p220 = scmp.lt.s32.totalorder %s13, 2
    // Predicated region
    $region29: #{frru_forward.5} parent=5 // pred_check
      %p221 = pneg %p220
    $region30: #{frru_forward.5} parent=5 // pred_check_branch
      %223 = sbr.rel (%p221) target = $region32
    $region31: #{frru_forward.5} parent=5 // pred_region
      // Predicated region
      $region33: #{frru_forward.5} parent=31 // pred_check
        %p224 = pneg %p47
      $region34: #{frru_forward.5} parent=31 // pred_check_branch
        %226 = sbr.rel (%p224) target = $region36
      $region35: #{frru_forward.5} parent=31 // pred_region
        %s227 = smul.u32 8, %s21
        %p228 = scmp.lt.s32.totalorder %s20, 1
        %s229 = scalar_select %p228, %s20, 1
        %p230 = scmp.lt.s32.totalorder %s227, 7
        %s231 = scalar_select %p230, %s227, 7
        %s232 = smul.addr %s229, 8
        %s233 = sadd.s32 %s231, %s232
        %s234 = smul.addr %s233, 8
        %s235 = scalar_lea.vmem %s0, %s234
        %s236 = smul.u32 8, %s21
      $region36: #{frru_forward.5} parent=31 // pred_fallthru
        _
    $region32: #{frru_forward.5} parent=5 // pred_fallthru
      _
    %p237 = scmp.le.s32.totalorder 1, %s13
    %p238 = scmp.lt.s32.totalorder %s13, 3
    %p239 = pnand %p237, %p238
    %p240 = pneg %p239
    // Predicated region
    $region37: #{frru_forward.5} parent=5 // pred_check
      _
    $region38: #{frru_forward.5} parent=5 // pred_check_branch
      %242 = sbr.rel (%p239) target = $region40
    $region39: #{frru_forward.5} parent=5 // pred_region
      %s243 = ssub.s32 %s13, 1
      %s244 = smul.u32 8, %s23
      %p245 = scmp.lt.s32.totalorder %s22, 1
      %s246 = scalar_select %p245, %s22, 1
      %p247 = scmp.lt.s32.totalorder %s244, 7
      %s248 = scalar_select %p247, %s244, 7
      %s249 = smul.addr %s246, 8
      %s250 = sadd.s32 %s248, %s249
      %s251 = smul.addr %s250, 8
      %s252 = scalar_lea.vmem %s0, %s251
      %p253 = pneg %p53
      %p254 = pneg %p50
      %p255 = pneg %p74
      %p256 = pneg %p71
      %p257 = pneg %p95
      %p258 = pneg %p92
      %p259 = pneg %p116
      %p260 = pneg %p113
      %p261 = pneg %p137
      %p262 = pneg %p134
      %p263 = pneg %p165
      %p264 = pneg %p162
      %p265 = scmp.lt.s32.totalorder %s22, 1
      %s266 = scalar_select %p265, %s22, 1
      %p267 = scmp.lt.s32.totalorder %s23, 0
      %s268 = scalar_select %p267, %s23, 0
      %s269 = smul.addr %s266, 2
      %s270 = sadd.s32 %s268, %s269
      %s271 = smul.addr %s270, 8
      %s272 = scalar_lea.vmem %s5, %s271
      %p273 = pneg %p193
      %p274 = pneg %p190
      %p275 = scmp.lt.s32.totalorder %s22, 1
      %s276 = scalar_select %p275, %s22, 1
      %p277 = scmp.lt.s32.totalorder %s23, 0
      %s278 = scalar_select %p277, %s23, 0
      %s279 = smul.addr %s276, 4
      %s280 = sadd.s32 %s278, %s279
      %s281 = smul.addr %s280, 8
      %s282 = scalar_lea.vmem %s6, %s281
      %s283 = smul.u32 8, %s23
      %p284 = scmp.lt.s32.totalorder %s22, 1
      %s285 = scalar_select %p284, %s22, 1
      %p286 = scmp.lt.s32.totalorder %s283, 7
      %s287 = scalar_select %p286, %s283, 7
      %s288 = smul.addr %s285, 8
      %s289 = sadd.s32 %s287, %s288
      %s290 = smul.addr %s289, 8
      %s291 = scalar_lea.vmem %s0, %s290
      %s292 = smul.u32 8, %s23
      %p293 = scmp.lt.s32.totalorder %s22, 1
      %s294 = scalar_select %p293, %s22, 1
      %p295 = scmp.lt.s32.totalorder %s23, 0
      %s296 = scalar_select %p295, %s23, 0
      %s297 = smul.addr %s294, 2
      %s298 = sadd.s32 %s296, %s297
      %s299 = smul.addr %s298, 8
      %s300 = scalar_lea.vmem %s5, %s299
      %p301 = scmp.lt.s32.totalorder %s22, 1
      %s302 = scalar_select %p301, %s22, 1
      %p303 = scmp.lt.s32.totalorder %s23, 0
      %s304 = scalar_select %p303, %s23, 0
      %s305 = smul.addr %s302, 4
      %s306 = sadd.s32 %s304, %s305
      %s307 = smul.addr %s306, 8
      %s308 = scalar_lea.vmem %s6, %s307
      %v310 = vld [vmem:[%s291] sm:$0xff]
      %v311 = vld [vmem:[%s291 + $0x8] sm:$0xff]
      %v312 = vld [vmem:[%s291 + $0x10] sm:$0xff]
      %v313 = vld [vmem:[%s291 + $0x18] sm:$0xff]
      %v314 = vld [vmem:[%s291 + $0x20] sm:$0xff]
      %v315 = vld [vmem:[%s291 + $0x28] sm:$0xff]
      %v316 = vld [vmem:[%s291 + $0x30] sm:$0xff]
      %v317 = vld [vmem:[%s291 + $0x38] sm:$0xff]
      %v318 = vld [vmem:[%s1] sm:$0x1]
      %v320 = vlaneseq
      %v321 = vshrl.u32 %v320, 7
      %v322 = vsub.s32 0, %v321
      %v323 = vrot.slane %v318, %v322
      %v325 = vmul.f32 %v310, %v323
      %v326 = vmul.f32 %v311, %v323
      %v327 = vmul.f32 %v312, %v323
      %v328 = vmul.f32 %v313, %v323
      %v329 = vmul.f32 %v314, %v323
      %v330 = vmul.f32 %v315, %v323
      %v331 = vmul.f32 %v316, %v323
      %v332 = vmul.f32 %v317, %v323
      %v333 = vld [vmem:[%s2] sm:$0x1]
      %v335 = vlaneseq
      %v336 = vshrl.u32 %v335, 7
      %v337 = vsub.s32 0, %v336
      %v338 = vrot.slane %v333, %v337
      %v340 = vadd.f32 %v325, %v338
      %v341 = vadd.f32 %v326, %v338
      %v342 = vadd.f32 %v327, %v338
      %v343 = vadd.f32 %v328, %v338
      %v344 = vadd.f32 %v329, %v338
      %v345 = vadd.f32 %v330, %v338
      %v346 = vadd.f32 %v331, %v338
      %v347 = vadd.f32 %v332, %v338
      %v348 = vmax.f32 %v340, 0.0
      %v349 = vmax.f32 %v341, 0.0
      %v350 = vmax.f32 %v342, 0.0
      %v351 = vmax.f32 %v343, 0.0
      %v352 = vmax.f32 %v344, 0.0
      %v353 = vmax.f32 %v345, 0.0
      %v354 = vmax.f32 %v346, 0.0
      %v355 = vmax.f32 %v347, 0.0
      %356 = vxpose.xlu0.b32.start [1/16] %v348, 128
      %357 = vxpose.xlu0.b32.cont [2/16] %v349, 128
      %358 = vxpose.xlu0.b32.cont [3/16] %v350, 128
      %359 = vxpose.xlu0.b32.cont [4/16] %v351, 128
      %360 = vxpose.xlu0.b32.cont [5/16] %v352, 128
      %361 = vxpose.xlu0.b32.cont [6/16] %v353, 128
      %362 = vxpose.xlu0.b32.cont [7/16] %v354, 128
      %363 = vxpose.xlu0.b32.cont [8/16] %v355, 128
      %364 = vxpose.xlu0.b32.cont [9/16] 0.0, 128
      %365 = vxpose.xlu0.b32.cont [10/16] 0.0, 128
      %366 = vxpose.xlu0.b32.cont [11/16] 0.0, 128
      %367 = vxpose.xlu0.b32.cont [12/16] 0.0, 128
      %368 = vxpose.xlu0.b32.cont [13/16] 0.0, 128
      %369 = vxpose.xlu0.b32.cont [14/16] 0.0, 128
      %370 = vxpose.xlu0.b32.cont [15/16] 0.0, 128
      %371 = vxpose.xlu0.b32.end [16/16] 0.0, 128
      %v372 = vpop.trf.xlu0
      %v373 = vpop.trf.xlu0
      %v374 = vpop.trf.xlu0
      %v375 = vpop.trf.xlu0
      %v376 = vpop.trf.xlu0
      %v377 = vpop.trf.xlu0
      %v378 = vpop.trf.xlu0
      %v379 = vpop.trf.xlu0
      %v380 = vpop.trf.xlu0
      %v381 = vpop.trf.xlu0
      %v382 = vpop.trf.xlu0
      %v383 = vpop.trf.xlu0
      %v384 = vpop.trf.xlu0
      %v385 = vpop.trf.xlu0
      %v386 = vpop.trf.xlu0
      %v387 = vpop.trf.xlu0
      %vm388 = vcmask 523264
      %389 = vst.msk [vmem:[%s300] sm:$0xff] %vm388, %v372
      %390 = vst.msk [vmem:[%s300 + $0x8] sm:$0xff] %vm388, %v373
      %v391 = vpack.c.bf16 %v349, %v348
      %v392 = vpack.c.bf16 %v351, %v350
      %v393 = vpack.c.bf16 %v353, %v352
      %v394 = vpack.c.bf16 %v355, %v354
      %v395 = vld [vmem:[%s3] sm:$0xf]
      %v396 = vld [vmem:[%s3 + $0x4] sm:$0xf]
      %v397 = vld [vmem:[%s4] sm:$0x1]
      %v399 = vlaneseq
      %v400 = vshrl.u32 %v399, 7
      %v401 = vsub.s32 0, %v400
      %v402 = vrot.slane %v397, %v401
      %v406 = vunpack.c.l.b16 %v395
      %v407 = vunpack.c.l.b16 %v396
      %v408 = vpack.c.b16 %v407, %v406
      %vm410 = vcmask 130048
      %v412 = vsel %vm410, %v391, 0
      %v415 = vsel %vm410, %v392, 0
      %v418 = vsel %vm410, %v393, 0
      %v421 = vsel %vm410, %v394, 0
      %423 = vmatprep.subr.bf16.mxu0 0
      %424 = vmatpush1.bf16.msra.mxu0 %v408
      %425 = vmatprep.subr.bf16.mxu0 0
      %426 = vmatpush1.bf16.msra.mxu0 0
      %427 = vmatprep.subr.bf16.mxu0 0
      %428 = vmatpush1.bf16.msra.mxu0 0
      %429 = vmatprep.subr.bf16.mxu0 0
      %430 = vmatpush1.bf16.msra.mxu0 0
      %431 = vmatprep.subr.bf16.mxu0 0
      %432 = vmatpush1.bf16.msra.mxu0 0
      %433 = vmatprep.subr.bf16.mxu0 0
      %434 = vmatpush1.bf16.msra.mxu0 0
      %435 = vmatprep.subr.bf16.mxu0 0
      %436 = vmatpush1.bf16.msra.mxu0 0
      %437 = vmatprep.subr.bf16.mxu0 0
      %438 = vmatpush1.bf16.msra.mxu0 0
      %439 = vmatprep.subr.bf16.mxu0 0
      %440 = vmatpush1.bf16.msra.mxu0 0
      %441 = vmatprep.subr.bf16.mxu0 0
      %442 = vmatpush1.bf16.msra.mxu0 0
      %443 = vmatprep.subr.bf16.mxu0 0
      %444 = vmatpush1.bf16.msra.mxu0 0
      %445 = vmatprep.subr.bf16.mxu0 0
      %446 = vmatpush1.bf16.msra.mxu0 0
      %447 = vmatprep.subr.bf16.mxu0 0
      %448 = vmatpush1.bf16.msra.mxu0 0
      %449 = vmatprep.subr.bf16.mxu0 0
      %450 = vmatpush1.bf16.msra.mxu0 0
      %451 = vmatprep.subr.bf16.mxu0 0
      %452 = vmatpush1.bf16.msra.mxu0 0
      %453 = vmatprep.subr.bf16.mxu0 0
      %454 = vmatpush1.bf16.msra.mxu0 0
      %455 = vmatprep.mubr.bf16.mxu0 0
      %456 = vmatmul.mubr.bf16.gmra.mrb[0].mxu0 %v412
      %v457 = vpop.f32.mrb[0].mxu0
      %v458 = vadd.f32 %v402, %v457
      %v459 = vpop.f32.mrb[0].mxu0
      %v460 = vpop.f32.mrb[0].mxu0
      %v461 = vadd.f32 %v402, %v460
      %v462 = vpop.f32.mrb[0].mxu0
      %463 = vmatprep.mubr.bf16.mxu0 0
      %464 = vmatmul.mubr.bf16.gmra.mrb[0].mxu0 %v415
      %v465 = vpop.f32.mrb[0].mxu0
      %v466 = vadd.f32 %v402, %v465
      %v467 = vpop.f32.mrb[0].mxu0
      %v468 = vpop.f32.mrb[0].mxu0
      %v469 = vadd.f32 %v402, %v468
      %v470 = vpop.f32.mrb[0].mxu0
      %471 = vmatprep.mubr.bf16.mxu0 0
      %472 = vmatmul.mubr.bf16.gmra.mrb[0].mxu0 %v418
      %v473 = vpop.f32.mrb[0].mxu0
      %v474 = vadd.f32 %v402, %v473
      %v475 = vpop.f32.mrb[0].mxu0
      %v476 = vpop.f32.mrb[0].mxu0
      %v477 = vadd.f32 %v402, %v476
      %v478 = vpop.f32.mrb[0].mxu0
      %479 = vmatprep.mubr.bf16.mxu0 0
      %480 = vmatmul.mubr.bf16.gmra.mrb[0].mxu0 %v421
      %v481 = vpop.f32.mrb[0].mxu0
      %v482 = vadd.f32 %v402, %v481
      %v483 = vpop.f32.mrb[0].mxu0
      %v484 = vpop.f32.mrb[0].mxu0
      %v485 = vadd.f32 %v402, %v484
      %v486 = vpop.f32.mrb[0].mxu0
      %487 = vdwg.mxu0
      %488 = vxpose.xlu0.b32.start [1/16] %v458, 128
      %489 = vxpose.xlu0.b32.cont [2/16] %v461, 128
      %490 = vxpose.xlu0.b32.cont [3/16] %v466, 128
      %491 = vxpose.xlu0.b32.cont [4/16] %v469, 128
      %492 = vxpose.xlu0.b32.cont [5/16] %v474, 128
      %493 = vxpose.xlu0.b32.cont [6/16] %v477, 128
      %494 = vxpose.xlu0.b32.cont [7/16] %v482, 128
      %495 = vxpose.xlu0.b32.cont [8/16] %v485, 128
      %496 = vxpose.xlu0.b32.cont [9/16] 0.0, 128
      %497 = vxpose.xlu0.b32.cont [10/16] 0.0, 128
      %498 = vxpose.xlu0.b32.cont [11/16] 0.0, 128
      %499 = vxpose.xlu0.b32.cont [12/16] 0.0, 128
      %500 = vxpose.xlu0.b32.cont [13/16] 0.0, 128
      %501 = vxpose.xlu0.b32.cont [14/16] 0.0, 128
      %502 = vxpose.xlu0.b32.cont [15/16] 0.0, 128
      %503 = vxpose.xlu0.b32.end [16/16] 0.0, 128
      %v504 = vpop.trf.xlu0
      %v505 = vpop.trf.xlu0
      %v506 = vpop.trf.xlu0
      %v507 = vpop.trf.xlu0
      %v508 = vpop.trf.xlu0
      %v509 = vpop.trf.xlu0
      %v510 = vpop.trf.xlu0
      %v511 = vpop.trf.xlu0
      %v512 = vpop.trf.xlu0
      %v513 = vpop.trf.xlu0
      %v514 = vpop.trf.xlu0
      %v515 = vpop.trf.xlu0
      %v516 = vpop.trf.xlu0
      %v517 = vpop.trf.xlu0
      %v518 = vpop.trf.xlu0
      %v519 = vpop.trf.xlu0
      %520 = vst.msk [vmem:[%s308] sm:$0xff] %vm388, %v504
      %521 = vst.msk [vmem:[%s308 + $0x8] sm:$0xff] %vm388, %v505
      %522 = vst.msk [vmem:[%s308 + $0x10] sm:$0xff] %vm388, %v506
      %523 = vst.msk [vmem:[%s308 + $0x18] sm:$0xff] %vm388, %v507
      %p524 = scmp.lt.s32.totalorder %s22, 1
      %s525 = scalar_select %p524, %s22, 1
      %p526 = scmp.lt.s32.totalorder %s23, 0
      %s527 = scalar_select %p526, %s23, 0
      %s528 = smul.addr %s525, 2
      %s529 = sadd.s32 %s527, %s528
      %s530 = smul.addr %s529, 8
      %s531 = scalar_lea.vmem %s5, %s530
      %p532 = scmp.lt.s32.totalorder %s22, 1
      %s533 = scalar_select %p532, %s22, 1
      %p534 = scmp.lt.s32.totalorder %s23, 0
      %s535 = scalar_select %p534, %s23, 0
      %s536 = smul.addr %s533, 4
      %s537 = sadd.s32 %s535, %s536
      %s538 = smul.addr %s537, 8
      %s539 = scalar_lea.vmem %s6, %s538
      // Predicated region
      $region41: #{frru_forward.5} parent=39 // pred_check
        %p540 = pneg %p162
      $region42: #{frru_forward.5} parent=39 // pred_check_branch
        %542 = sbr.rel (%p540) target = $region44
      $region43: #{frru_forward.5} parent=39 // pred_region
        _
      $region44: #{frru_forward.5} parent=39 // pred_fallthru
        _
      // Predicated region
      $region45: #{frru_forward.5} parent=39 // pred_check
        %p543 = pneg %p190
      $region46: #{frru_forward.5} parent=39 // pred_check_branch
        %545 = sbr.rel (%p543) target = $region48
      $region47: #{frru_forward.5} parent=39 // pred_region
        _
      $region48: #{frru_forward.5} parent=39 // pred_fallthru
        _
    $region40: #{frru_forward.5} parent=5 // pred_fallthru
      _
    %p546 = scmp.le.s32.totalorder 2, %s13
    // Predicated region
    $region49: #{frru_forward.5} parent=5 // pred_check
      %p547 = pneg %p546
    $region50: #{frru_forward.5} parent=5 // pred_check_branch
      %549 = sbr.rel (%p547) target = $region52
    $region51: #{frru_forward.5} parent=5 // pred_region
      %s550 = ssub.s32 %s13, 2
      // Predicated region
      $region53: #{frru_forward.5} parent=51 // pred_check
        %p551 = pneg %p168
      $region54: #{frru_forward.5} parent=51 // pred_check_branch
        %553 = sbr.rel (%p551) target = $region56
      $region55: #{frru_forward.5} parent=51 // pred_region
        %p554 = scmp.lt.s32.totalorder %s24, 1
        %s555 = scalar_select %p554, %s24, 1
        %p556 = scmp.lt.s32.totalorder %s25, 0
        %s557 = scalar_select %p556, %s25, 0
        %s558 = smul.addr %s555, 2
        %s559 = sadd.s32 %s557, %s558
        %s560 = smul.addr %s559, 8
        %s561 = scalar_lea.vmem %s5, %s560
      $region56: #{frru_forward.5} parent=51 // pred_fallthru
        _
      // Predicated region
      $region57: #{frru_forward.5} parent=51 // pred_check
        %p562 = pneg %p196
      $region58: #{frru_forward.5} parent=51 // pred_check_branch
        %564 = sbr.rel (%p562) target = $region60
      $region59: #{frru_forward.5} parent=51 // pred_region
        %p565 = scmp.lt.s32.totalorder %s24, 1
        %s566 = scalar_select %p565, %s24, 1
        %p567 = scmp.lt.s32.totalorder %s25, 0
        %s568 = scalar_select %p567, %s25, 0
        %s569 = smul.addr %s566, 4
        %s570 = sadd.s32 %s568, %s569
        %s571 = smul.addr %s570, 8
        %s572 = scalar_lea.vmem %s6, %s571
      $region60: #{frru_forward.5} parent=51 // pred_fallthru
        _
    $region52: #{frru_forward.5} parent=5 // pred_fallthru
      _
  $region6: #{frru_forward.5} parent=0 // loop_footer
    %s17 = sadd.s32 1, %s13
  $region7: #{frru_forward.5} parent=0 // loop_footer_branch
    %12 = sbr.rel target = $region3
  $region8: #{frru_forward.5} parent=0 // loop_exit
    _

// kernel: frru_forward.4
$region0: #{frru_forward.4}
  #allocation0 [shape = 'u32[]', space=smem, size = 0x4, offset = 0x4, fixed_abs, tag = 'smem constant byte address 0x4 - core index']
  #allocation1 [shape = 'u32[144,128]{1,0:T(1,128)}', space=vmem, size = 0x12000, scoped, tag = 'internal scratch']
  #allocation2 [shape = 'bf16[10,10,16]{2,1,0:T(8,128)(2,1)}', space=vmem, size = 0xa000, scoped, tag = 'scratch operand']
  %s0 = inlined_call_operand.vmem [shape: f32[2,8,8,16], index: 0, kind: input, shape index: {}]
  %s1 = inlined_call_operand.vmem [shape: f32[1,16], index: 1, kind: input, shape index: {}]
  %s2 = inlined_call_operand.vmem [shape: f32[1,16], index: 2, kind: input, shape index: {}]
  %s3 = inlined_call_operand.vmem [shape: bf16[144,16], index: 3, kind: input, shape index: {}]
  %s4 = inlined_call_operand.vmem [shape: f32[2,8,8,16], index: 4, kind: output, shape index: {0}]
  %s5 = inlined_call_operand.vmem [shape: f32[2,2,16], index: 5, kind: output, shape index: {1}]
  %6 = xla_tuple %s4, %s5
  %s7 = sld [smem:[#allocation0]]
  $region57: #{frru_forward.4} parent=0
    _
  %s9 = ssub.s32 1, %s7
  %s10 = scalar_select 0, %s9, %s7
  loop: start=0, step=1, limit=4
  $region2: #{frru_forward.4} parent=0 // loop_pre_header
    _
  $region3: #{frru_forward.4} parent=0 // loop_header
    %s12 = sphi 0, %s16
    %p13 = scmp.ge.s32.totalorder %s12, 4
    %s22 = sphi 0, %s24
    %s25 = sphi 0, %s22
    %s26 = sphi 0, %s25
    %s42 = sphi 0, %s26
    %s46 = sphi 0, %s46
    %s48 = sphi 0, %s46
    %s49 = sphi 0, %s48
    %s63 = sphi 0, %s49
    %s67 = sphi 0, %s67
    %s69 = sphi 0, %s67
    %s70 = sphi 0, %s69
    %s84 = sphi 0, %s70
    %s88 = sphi 0, %s88
    %s90 = sphi 0, %s88
    %s91 = sphi 0, %s90
    %s105 = sphi 0, %s91
    %s111 = sphi 0, %s113
    %s114 = sphi 0, %s111
    %s115 = sphi 0, %s114
    %s131 = sphi 0, %s115
    %s137 = sphi 0, %s139
    %s140 = sphi 0, %s137
    %s141 = sphi 0, %s140
    %s157 = sphi 0, %s141
  $region4: #{frru_forward.4} parent=0 // loop_header_branch
    %15 = sbr.rel (%p13) target = $region8
  $region5: #{frru_forward.4} parent=0 // loop_body
    %s17 = ssub.s32 %s12, 1
    %s18 = ssub.s32 %s12, 2
    %s19 = sadd.s32 %s12, 1
    %s20 = ssub.s32 %s12, %s19
    %p21 = scmp.eq.s32.totalorder %s20, 0
    %s23 = sadd.s32 %s22, 1
    %s24 = scalar_select %p21, %s22, %s23
    %p27 = pneg %p21
    %p28 = scmp.eq.s32.totalorder %s12, 1
    %p29 = por %p27, %p28
    %p30 = scmp.ne.s32.totalorder %s22, %s25
    %p31 = scmp.eq.s32.totalorder %s12, 0
    %p32 = por %p30, %p31
    %p33 = scmp.ne.s32.totalorder %s22, %s25
    %p34 = scmp.eq.s32.totalorder %s17, 1
    %p35 = por %p33, %p34
    %p36 = scmp.ne.s32.totalorder %s25, %s26
    %p37 = scmp.eq.s32.totalorder %s17, 0
    %p38 = por %p36, %p37
    %p39 = scmp.ne.s32.totalorder %s25, %s26
    %p40 = scmp.eq.s32.totalorder %s18, 1
    %p41 = por %p39, %p40
    %p43 = scmp.ne.s32.totalorder %s26, %s42
    %p44 = scmp.eq.s32.totalorder %s18, 0
    %p45 = por %p43, %p44
    %s47 = sadd.s32 %s46, 1
    %p50 = scmp.eq.s32.totalorder %s12, 1
    %p51 = scmp.ne.s32.totalorder %s46, %s48
    %p52 = scmp.eq.s32.totalorder %s12, 0
    %p53 = por %p51, %p52
    %p54 = scmp.ne.s32.totalorder %s46, %s48
    %p55 = scmp.eq.s32.totalorder %s17, 1
    %p56 = por %p54, %p55
    %p57 = scmp.ne.s32.totalorder %s48, %s49
    %p58 = scmp.eq.s32.totalorder %s17, 0
    %p59 = por %p57, %p58
    %p60 = scmp.ne.s32.totalorder %s48, %s49
    %p61 = scmp.eq.s32.totalorder %s18, 1
    %p62 = por %p60, %p61
    %p64 = scmp.ne.s32.totalorder %s49, %s63
    %p65 = scmp.eq.s32.totalorder %s18, 0
    %p66 = por %p64, %p65
    %s68 = sadd.s32 %s67, 1
    %p71 = scmp.eq.s32.totalorder %s12, 1
    %p72 = scmp.ne.s32.totalorder %s67, %s69
    %p73 = scmp.eq.s32.totalorder %s12, 0
    %p74 = por %p72, %p73
    %p75 = scmp.ne.s32.totalorder %s67, %s69
    %p76 = scmp.eq.s32.totalorder %s17, 1
    %p77 = por %p75, %p76
    %p78 = scmp.ne.s32.totalorder %s69, %s70
    %p79 = scmp.eq.s32.totalorder %s17, 0
    %p80 = por %p78, %p79
    %p81 = scmp.ne.s32.totalorder %s69, %s70
    %p82 = scmp.eq.s32.totalorder %s18, 1
    %p83 = por %p81, %p82
    %p85 = scmp.ne.s32.totalorder %s70, %s84
    %p86 = scmp.eq.s32.totalorder %s18, 0
    %p87 = por %p85, %p86
    %s89 = sadd.s32 %s88, 1
    %p92 = scmp.eq.s32.totalorder %s12, 1
    %p93 = scmp.ne.s32.totalorder %s88, %s90
    %p94 = scmp.eq.s32.totalorder %s12, 0
    %p95 = por %p93, %p94
    %p96 = scmp.ne.s32.totalorder %s88, %s90
    %p97 = scmp.eq.s32.totalorder %s17, 1
    %p98 = por %p96, %p97
    %p99 = scmp.ne.s32.totalorder %s90, %s91
    %p100 = scmp.eq.s32.totalorder %s17, 0
    %p101 = por %p99, %p100
    %p102 = scmp.ne.s32.totalorder %s90, %s91
    %p103 = scmp.eq.s32.totalorder %s18, 1
    %p104 = por %p102, %p103
    %p106 = scmp.ne.s32.totalorder %s91, %s105
    %p107 = scmp.eq.s32.totalorder %s18, 0
    %p108 = por %p106, %p107
    %s109 = ssub.s32 %s12, %s19
    %p110 = scmp.eq.s32.totalorder %s109, 0
    %s112 = sadd.s32 %s111, 1
    %s113 = scalar_select %p110, %s111, %s112
    %p116 = pneg %p110
    %p117 = scmp.eq.s32.totalorder %s12, 1
    %p118 = por %p116, %p117
    %p119 = scmp.ne.s32.totalorder %s111, %s114
    %p120 = scmp.eq.s32.totalorder %s12, 0
    %p121 = por %p119, %p120
    %p122 = scmp.ne.s32.totalorder %s111, %s114
    %p123 = scmp.eq.s32.totalorder %s17, 1
    %p124 = por %p122, %p123
    %p125 = scmp.ne.s32.totalorder %s114, %s115
    %p126 = scmp.eq.s32.totalorder %s17, 0
    %p127 = por %p125, %p126
    %p128 = scmp.ne.s32.totalorder %s114, %s115
    %p129 = scmp.eq.s32.totalorder %s18, 1
    %p130 = por %p128, %p129
    %p132 = scmp.ne.s32.totalorder %s115, %s131
    %p133 = scmp.eq.s32.totalorder %s18, 0
    %p134 = por %p132, %p133
    %s135 = ssub.s32 %s12, %s19
    %p136 = scmp.eq.s32.totalorder %s135, 0
    %s138 = sadd.s32 %s137, 1
    %s139 = scalar_select %p136, %s137, %s138
    %p142 = pneg %p136
    %p143 = scmp.eq.s32.totalorder %s12, 1
    %p144 = por %p142, %p143
    %p145 = scmp.ne.s32.totalorder %s137, %s140
    %p146 = scmp.eq.s32.totalorder %s12, 0
    %p147 = por %p145, %p146
    %p148 = scmp.ne.s32.totalorder %s137, %s140
    %p149 = scmp.eq.s32.totalorder %s17, 1
    %p150 = por %p148, %p149
    %p151 = scmp.ne.s32.totalorder %s140, %s141
    %p152 = scmp.eq.s32.totalorder %s17, 0
    %p153 = por %p151, %p152
    %p154 = scmp.ne.s32.totalorder %s140, %s141
    %p155 = scmp.eq.s32.totalorder %s18, 1
    %p156 = por %p154, %p155
    %p158 = scmp.ne.s32.totalorder %s141, %s157
    %p159 = scmp.eq.s32.totalorder %s18, 0
    %p160 = por %p158, %p159
    %p161 = scmp.le.s32.totalorder 1, %s12
    %p162 = scmp.lt.s32.totalorder %s12, 3
    %p163 = pnand %p161, %p162
    %p164 = pneg %p163
    // Predicated region
    $region9: #{frru_forward.4} parent=5 // pred_check
      _
    $region10: #{frru_forward.4} parent=5 // pred_check_branch
      %166 = sbr.rel (%p163) target = $region12
    $region11: #{frru_forward.4} parent=5 // pred_region
      %s167 = ssub.s32 %s12, 1
      // Predicated region
      $region13: #{frru_forward.4} parent=11 // pred_check
        %p168 = pneg %p59
      $region14: #{frru_forward.4} parent=11 // pred_check_branch
        %170 = sbr.rel (%p168) target = $region16
      $region15: #{frru_forward.4} parent=11 // pred_region
        _
      $region16: #{frru_forward.4} parent=11 // pred_fallthru
        _
      // Predicated region
      $region17: #{frru_forward.4} parent=11 // pred_check
        %p171 = pneg %p80
      $region18: #{frru_forward.4} parent=11 // pred_check_branch
        %173 = sbr.rel (%p171) target = $region20
      $region19: #{frru_forward.4} parent=11 // pred_region
        _
      $region20: #{frru_forward.4} parent=11 // pred_fallthru
        _
      // Predicated region
      $region21: #{frru_forward.4} parent=11 // pred_check
        %p174 = pneg %p101
      $region22: #{frru_forward.4} parent=11 // pred_check_branch
        %176 = sbr.rel (%p174) target = $region24
      $region23: #{frru_forward.4} parent=11 // pred_region
        _
      $region24: #{frru_forward.4} parent=11 // pred_fallthru
        _
    $region12: #{frru_forward.4} parent=5 // pred_fallthru
      _
    %p177 = scmp.lt.s32.totalorder %s12, 2
    // Predicated region
    $region25: #{frru_forward.4} parent=5 // pred_check
      %p178 = pneg %p177
    $region26: #{frru_forward.4} parent=5 // pred_check_branch
      %180 = sbr.rel (%p178) target = $region28
    $region27: #{frru_forward.4} parent=5 // pred_region
      // Predicated region
      $region29: #{frru_forward.4} parent=27 // pred_check
        %p181 = pneg %p32
      $region30: #{frru_forward.4} parent=27 // pred_check_branch
        %183 = sbr.rel (%p181) target = $region32
      $region31: #{frru_forward.4} parent=27 // pred_region
        %p184 = scmp.lt.s32.totalorder %s12, 1
        %s185 = scalar_select %p184, %s12, 1
        %s186 = smul.addr %s185, 8
        %s187 = smul.addr %s186, 8
        %s188 = scalar_lea.vmem %s0, %s187
      $region32: #{frru_forward.4} parent=27 // pred_fallthru
        _
    $region28: #{frru_forward.4} parent=5 // pred_fallthru
      _
    %p189 = scmp.le.s32.totalorder 1, %s12
    %p190 = scmp.lt.s32.totalorder %s12, 3
    %p191 = pnand %p189, %p190
    %p192 = pneg %p191
    // Predicated region
    $region33: #{frru_forward.4} parent=5 // pred_check
      _
    $region34: #{frru_forward.4} parent=5 // pred_check_branch
      %194 = sbr.rel (%p191) target = $region36
    $region35: #{frru_forward.4} parent=5 // pred_region
      %s195 = ssub.s32 %s12, 1
      %p196 = scmp.lt.s32.totalorder %s17, 1
      %s197 = scalar_select %p196, %s17, 1
      %s198 = smul.addr %s197, 8
      %s199 = smul.addr %s198, 8
      %s200 = scalar_lea.vmem %s0, %s199
      %p201 = pneg %p38
      %p202 = pneg %p35
      %p203 = pneg %p59
      %p204 = pneg %p56
      %p205 = pneg %p80
      %p206 = pneg %p77
      %p207 = pneg %p101
      %p208 = pneg %p98
      %p209 = pneg %p127
      %p210 = pneg %p124
      %p211 = scmp.lt.s32.totalorder %s17, 1
      %s212 = scalar_select %p211, %s17, 1
      %s213 = smul.addr %s212, 8
      %s214 = smul.addr %s213, 8
      %s215 = scalar_lea.vmem %s4, %s214
      %p216 = pneg %p153
      %p217 = pneg %p150
      %p218 = scmp.lt.s32.totalorder %s17, 1
      %s219 = scalar_select %p218, %s17, 1
      %s220 = smul.addr %s219, 2
      %s221 = scalar_lea.vmem %s5, %s220
      %p222 = scmp.lt.s32.totalorder %s17, 1
      %s223 = scalar_select %p222, %s17, 1
      %s224 = smul.addr %s223, 8
      %s225 = smul.addr %s224, 8
      %s226 = scalar_lea.vmem %s0, %s225
      %p227 = scmp.lt.s32.totalorder %s17, 1
      %s228 = scalar_select %p227, %s17, 1
      %s229 = smul.addr %s228, 8
      %s230 = smul.addr %s229, 8
      %s231 = scalar_lea.vmem %s4, %s230
      %p232 = scmp.lt.s32.totalorder %s17, 1
      %s233 = scalar_select %p232, %s17, 1
      %s234 = smul.addr %s233, 2
      %s235 = scalar_lea.vmem %s5, %s234
      %v237 = vld [vmem:[%s226] sm:$0xff]
      %v238 = vld [vmem:[%s226 + $0x8] sm:$0xff]
      %v239 = vld [vmem:[%s226 + $0x10] sm:$0xff]
      %v240 = vld [vmem:[%s226 + $0x18] sm:$0xff]
      %v241 = vld [vmem:[%s226 + $0x20] sm:$0xff]
      %v242 = vld [vmem:[%s226 + $0x28] sm:$0xff]
      %v243 = vld [vmem:[%s226 + $0x30] sm:$0xff]
      %v244 = vld [vmem:[%s226 + $0x38] sm:$0xff]
      %v245 = vld [vmem:[%s1] sm:$0x1]
      %v247 = vlaneseq
      %v248 = vshrl.u32 %v247, 7
      %v249 = vsub.s32 0, %v248
      %v250 = vrot.slane %v245, %v249
      %v252 = vmul.f32 %v237, %v250
      %v253 = vmul.f32 %v238, %v250
      %v254 = vmul.f32 %v239, %v250
      %v255 = vmul.f32 %v240, %v250
      %v256 = vmul.f32 %v241, %v250
      %v257 = vmul.f32 %v242, %v250
      %v258 = vmul.f32 %v243, %v250
      %v259 = vmul.f32 %v244, %v250
      %v260 = vld [vmem:[%s2] sm:$0x1]
      %v262 = vlaneseq
      %v263 = vshrl.u32 %v262, 7
      %v264 = vsub.s32 0, %v263
      %v265 = vrot.slane %v260, %v264
      %v267 = vadd.f32 %v252, %v265
      %v268 = vadd.f32 %v253, %v265
      %v269 = vadd.f32 %v254, %v265
      %v270 = vadd.f32 %v255, %v265
      %v271 = vadd.f32 %v256, %v265
      %v272 = vadd.f32 %v257, %v265
      %v273 = vadd.f32 %v258, %v265
      %v274 = vadd.f32 %v259, %v265
      %v275 = vmax.f32 %v267, 0.0
      %v276 = vmax.f32 %v268, 0.0
      %v277 = vmax.f32 %v269, 0.0
      %v278 = vmax.f32 %v270, 0.0
      %v279 = vmax.f32 %v271, 0.0
      %v280 = vmax.f32 %v272, 0.0
      %v281 = vmax.f32 %v273, 0.0
      %v282 = vmax.f32 %v274, 0.0
      %vm283 = vcmask 125952
      %284 = vst.msk [vmem:[#allocation2] sm:$0xf] %vm283, 0
      %vm285 = vcmask 122880
      %286 = vst.msk [vmem:[#allocation2 + $0x4] sm:$0x1] %vm285, 0
      %287 = vst.msk [vmem:[#allocation2 + $0x8] sm:$0xf] %vm283, 0
      %288 = vst.msk [vmem:[#allocation2 + $0xc] sm:$0x1] %vm285, 0
      %289 = vst.msk [vmem:[#allocation2 + $0x10] sm:$0xf] %vm283, 0
      %290 = vst.msk [vmem:[#allocation2 + $0x14] sm:$0x1] %vm285, 0
      %291 = vst.msk [vmem:[#allocation2 + $0x18] sm:$0xf] %vm283, 0
      %292 = vst.msk [vmem:[#allocation2 + $0x1c] sm:$0x1] %vm285, 0
      %293 = vst.msk [vmem:[#allocation2 + $0x20] sm:$0xf] %vm283, 0
      %294 = vst.msk [vmem:[#allocation2 + $0x24] sm:$0x1] %vm285, 0
      %295 = vst.msk [vmem:[#allocation2 + $0x28] sm:$0xf] %vm283, 0
      %296 = vst.msk [vmem:[#allocation2 + $0x2c] sm:$0x1] %vm285, 0
      %297 = vst.msk [vmem:[#allocation2 + $0x30] sm:$0xf] %vm283, 0
      %298 = vst.msk [vmem:[#allocation2 + $0x34] sm:$0x1] %vm285, 0
      %299 = vst.msk [vmem:[#allocation2 + $0x38] sm:$0xf] %vm283, 0
      %300 = vst.msk [vmem:[#allocation2 + $0x3c] sm:$0x1] %vm285, 0
      %301 = vst.msk [vmem:[#allocation2 + $0x40] sm:$0xf] %vm283, 0
      %302 = vst.msk [vmem:[#allocation2 + $0x44] sm:$0x1] %vm285, 0
      %303 = vst.msk [vmem:[#allocation2 + $0x48] sm:$0xf] %vm283, 0
      %304 = vst.msk [vmem:[#allocation2 + $0x4c] sm:$0x1] %vm285, 0
      %v305 = vpack.c.bf16 %v275, %v275
      %v306 = vpack.c.bf16 %v276, %v276
      %v307 = vpack.c.bf16 %v277, %v277
      %v308 = vpack.c.bf16 %v278, %v278
      %v309 = vpack.c.bf16 %v279, %v279
      %v310 = vpack.c.bf16 %v280, %v280
      %v311 = vpack.c.bf16 %v281, %v281
      %v312 = vpack.c.bf16 %v282, %v282
      %v321 = vunpack.c.l.b16 %v305
      %v322 = vunpack.c.l.b16 %v306
      %v323 = vunpack.c.l.b16 %v307
      %v324 = vunpack.c.l.b16 %v308
      %v325 = vunpack.c.l.b16 %v309
      %v326 = vunpack.c.l.b16 %v310
      %v327 = vunpack.c.l.b16 %v311
      %v328 = vunpack.c.l.b16 %v312
      %v329 = vpack.c.b16 %v321, %v321
      %v330 = vpack.c.b16 %v322, %v322
      %v331 = vpack.c.b16 %v323, %v323
      %v332 = vpack.c.b16 %v324, %v324
      %v333 = vpack.c.b16 %v325, %v325
      %v334 = vpack.c.b16 %v326, %v326
      %v335 = vpack.c.b16 %v327, %v327
      %v336 = vpack.c.b16 %v328, %v328
      %v338 = vshrl.u32 %v329, 16
      %v340 = vrot.slane %v338, 7
      %v341 = vshll.u32 %v329, 16
      %v343 = vor.u32 %v340, %v341
      %v344 = vrot.slane %v340, 4
      %v346 = vshrl.u32 %v330, 16
      %v348 = vrot.slane %v346, 7
      %v349 = vshll.u32 %v330, 16
      %v351 = vor.u32 %v348, %v349
      %v352 = vrot.slane %v348, 4
      %v354 = vshrl.u32 %v331, 16
      %v356 = vrot.slane %v354, 7
      %v357 = vshll.u32 %v331, 16
      %v359 = vor.u32 %v356, %v357
      %v360 = vrot.slane %v356, 4
      %v362 = vshrl.u32 %v332, 16
      %v364 = vrot.slane %v362, 7
      %v365 = vshll.u32 %v332, 16
      %v367 = vor.u32 %v364, %v365
      %v368 = vrot.slane %v364, 4
      %v370 = vshrl.u32 %v333, 16
      %v372 = vrot.slane %v370, 7
      %v373 = vshll.u32 %v333, 16
      %v375 = vor.u32 %v372, %v373
      %v376 = vrot.slane %v372, 4
      %v378 = vshrl.u32 %v334, 16
      %v380 = vrot.slane %v378, 7
      %v381 = vshll.u32 %v334, 16
      %v383 = vor.u32 %v380, %v381
      %v384 = vrot.slane %v380, 4
      %v386 = vshrl.u32 %v335, 16
      %v388 = vrot.slane %v386, 7
      %v389 = vshll.u32 %v335, 16
      %v391 = vor.u32 %v388, %v389
      %v392 = vrot.slane %v388, 4
      %v394 = vshrl.u32 %v336, 16
      %v396 = vrot.slane %v394, 7
      %v397 = vshll.u32 %v336, 16
      %v399 = vor.u32 %v396, %v397
      %v400 = vrot.slane %v396, 4
      %s417 = scalar_lea.vmem [#allocation2], 8
      %vm418 = vcmask 125952
      %vm419 = vsmask.f32 7938
      %vm420 = vmand %vm418, %vm419
      %v421 = vld [vmem:[%s417] sm:$0xf]
      %v422 = vsel %vm420, %v343, %v421
      %423 = vst [vmem:[%s417] sm:$0xf] %v422
      %vm424 = vcmask 122880
      %vm425 = vsmask.f32 256
      %vm426 = vmand %vm424, %vm425
      %v427 = vld [vmem:[%s417 + $0x4] sm:$0x1]
      %v428 = vsel %vm426, %v344, %v427
      %429 = vst [vmem:[%s417 + $0x4] sm:$0x1] %v428
      %v430 = vld [vmem:[%s417 + $0x8] sm:$0xf]
      %v431 = vsel %vm420, %v351, %v430
      %432 = vst [vmem:[%s417 + $0x8] sm:$0xf] %v431
      %v433 = vld [vmem:[%s417 + $0xc] sm:$0x1]
      %v434 = vsel %vm426, %v352, %v433
      %435 = vst [vmem:[%s417 + $0xc] sm:$0x1] %v434
      %v436 = vld [vmem:[%s417 + $0x10] sm:$0xf]
      %v437 = vsel %vm420, %v359, %v436
      %438 = vst [vmem:[%s417 + $0x10] sm:$0xf] %v437
      %v439 = vld [vmem:[%s417 + $0x14] sm:$0x1]
      %v440 = vsel %vm426, %v360, %v439
      %441 = vst [vmem:[%s417 + $0x14] sm:$0x1] %v440
      %v442 = vld [vmem:[%s417 + $0x18] sm:$0xf]
      %v443 = vsel %vm420, %v367, %v442
      %444 = vst [vmem:[%s417 + $0x18] sm:$0xf] %v443
      %v445 = vld [vmem:[%s417 + $0x1c] sm:$0x1]
      %v446 = vsel %vm426, %v368, %v445
      %447 = vst [vmem:[%s417 + $0x1c] sm:$0x1] %v446
      %v448 = vld [vmem:[%s417 + $0x20] sm:$0xf]
      %v449 = vsel %vm420, %v375, %v448
      %450 = vst [vmem:[%s417 + $0x20] sm:$0xf] %v449
      %v451 = vld [vmem:[%s417 + $0x24] sm:$0x1]
      %v452 = vsel %vm426, %v376, %v451
      %453 = vst [vmem:[%s417 + $0x24] sm:$0x1] %v452
      %v454 = vld [vmem:[%s417 + $0x28] sm:$0xf]
      %v455 = vsel %vm420, %v383, %v454
      %456 = vst [vmem:[%s417 + $0x28] sm:$0xf] %v455
      %v457 = vld [vmem:[%s417 + $0x2c] sm:$0x1]
      %v458 = vsel %vm426, %v384, %v457
      %459 = vst [vmem:[%s417 + $0x2c] sm:$0x1] %v458
      %v460 = vld [vmem:[%s417 + $0x30] sm:$0xf]
      %v461 = vsel %vm420, %v391, %v460
      %462 = vst [vmem:[%s417 + $0x30] sm:$0xf] %v461
      %v463 = vld [vmem:[%s417 + $0x34] sm:$0x1]
      %v464 = vsel %vm426, %v392, %v463
      %465 = vst [vmem:[%s417 + $0x34] sm:$0x1] %v464
      %v466 = vld [vmem:[%s417 + $0x38] sm:$0xf]
      %v467 = vsel %vm420, %v399, %v466
      %468 = vst [vmem:[%s417 + $0x38] sm:$0xf] %v467
      %v469 = vld [vmem:[%s417 + $0x3c] sm:$0x1]
      %v470 = vsel %vm426, %v400, %v469
      %471 = vst [vmem:[%s417 + $0x3c] sm:$0x1] %v470
      %v472 = vld [vmem:[#allocation2] sm:$0xf]
      %v473 = vld [vmem:[#allocation2 + $0x8] sm:$0xf]
      %v474 = vld [vmem:[#allocation2 + $0x10] sm:$0xf]
      %v475 = vld [vmem:[#allocation2 + $0x18] sm:$0xf]
      %v476 = vld [vmem:[#allocation2 + $0x20] sm:$0xf]
      %v477 = vld [vmem:[#allocation2 + $0x28] sm:$0xf]
      %v478 = vld [vmem:[#allocation2 + $0x30] sm:$0xf]
      %v479 = vld [vmem:[#allocation2 + $0x38] sm:$0xf]
      %v480 = vld [vmem:[%s3] sm:$0xf]
      %v481 = vld [vmem:[%s3 + $0x4] sm:$0xf]
      %v482 = vld [vmem:[#allocation2 + $0x4] sm:$0x1]
      %v483 = vld [vmem:[#allocation2 + $0xc] sm:$0x1]
      %v484 = vld [vmem:[#allocation2 + $0x14] sm:$0x1]
      %v485 = vld [vmem:[#allocation2 + $0x1c] sm:$0x1]
      %v486 = vld [vmem:[#allocation2 + $0x24] sm:$0x1]
      %v487 = vld [vmem:[#allocation2 + $0x2c] sm:$0x1]
      %v488 = vld [vmem:[#allocation2 + $0x34] sm:$0x1]
      %v489 = vld [vmem:[#allocation2 + $0x3c] sm:$0x1]
      %vm490 = vsmask.f32 3328
      %vm491 = vsmask.f32 7440
      %vm492 = vmor %vm490, %vm491
      %v494 = vshrl.u32 %v472, 16
      %v496 = vrot.slane %v494, 4
      %v497 = vshll.u32 %v472, 16
      %v499 = vrot.slane %v497, 5
      %v500 = vor.u32 %v496, %v499
      %v501 = vrot.slane %v500, 4
      %v503 = vshll.u32 %v482, 16
      %v505 = vrot.slane %v503, 5
      %v506 = vsel %vm492, %v501, %v505
      %v508 = vshrl.u32 %v473, 16
      %v510 = vrot.slane %v508, 4
      %v511 = vshll.u32 %v473, 16
      %v513 = vrot.slane %v511, 5
      %v514 = vor.u32 %v510, %v513
      %v515 = vrot.slane %v514, 4
      %v517 = vshll.u32 %v483, 16
      %v519 = vrot.slane %v517, 5
      %v520 = vsel %vm492, %v515, %v519
      %v522 = vshrl.u32 %v474, 16
      %v524 = vrot.slane %v522, 4
      %v525 = vshll.u32 %v474, 16
      %v527 = vrot.slane %v525, 5
      %v528 = vor.u32 %v524, %v527
      %v529 = vrot.slane %v528, 4
      %v531 = vshll.u32 %v484, 16
      %v533 = vrot.slane %v531, 5
      %v534 = vsel %vm492, %v529, %v533
      %v536 = vshrl.u32 %v475, 16
      %v538 = vrot.slane %v536, 4
      %v539 = vshll.u32 %v475, 16
      %v541 = vrot.slane %v539, 5
      %v542 = vor.u32 %v538, %v541
      %v543 = vrot.slane %v542, 4
      %v545 = vshll.u32 %v485, 16
      %v547 = vrot.slane %v545, 5
      %v548 = vsel %vm492, %v543, %v547
      %v550 = vshrl.u32 %v476, 16
      %v552 = vrot.slane %v550, 4
      %v553 = vshll.u32 %v476, 16
      %v555 = vrot.slane %v553, 5
      %v556 = vor.u32 %v552, %v555
      %v557 = vrot.slane %v556, 4
      %v559 = vshll.u32 %v486, 16
      %v561 = vrot.slane %v559, 5
      %v562 = vsel %vm492, %v557, %v561
      %v564 = vshrl.u32 %v477, 16
      %v566 = vrot.slane %v564, 4
      %v567 = vshll.u32 %v477, 16
      %v569 = vrot.slane %v567, 5
      %v570 = vor.u32 %v566, %v569
      %v571 = vrot.slane %v570, 4
      %v573 = vshll.u32 %v487, 16
      %v575 = vrot.slane %v573, 5
      %v576 = vsel %vm492, %v571, %v575
      %v578 = vshrl.u32 %v478, 16
      %v580 = vrot.slane %v578, 4
      %v581 = vshll.u32 %v478, 16
      %v583 = vrot.slane %v581, 5
      %v584 = vor.u32 %v580, %v583
      %v585 = vrot.slane %v584, 4
      %v587 = vshll.u32 %v488, 16
      %v589 = vrot.slane %v587, 5
      %v590 = vsel %vm492, %v585, %v589
      %v592 = vshrl.u32 %v479, 16
      %v594 = vrot.slane %v592, 4
      %v595 = vshll.u32 %v479, 16
      %v597 = vrot.slane %v595, 5
      %v598 = vor.u32 %v594, %v597
      %v599 = vrot.slane %v598, 4
      %v601 = vshll.u32 %v489, 16
      %v603 = vrot.slane %v601, 5
      %v604 = vsel %vm492, %v599, %v603
      %v605 = vld [vmem:[%s3 + $0x8] sm:$0xf]
      %v606 = vld [vmem:[%s3 + $0xc] sm:$0xf]
      %v607 = vunpack.c.l.b16 %v506
      %v608 = vunpack.c.l.b16 %v520
      %v609 = vunpack.c.l.b16 %v534
      %v610 = vunpack.c.l.b16 %v548
      %v611 = vunpack.c.l.b16 %v562
      %v612 = vunpack.c.l.b16 %v576
      %v613 = vunpack.c.l.b16 %v590
      %v614 = vunpack.c.l.b16 %v604
      %v615 = vpack.c.b16 %v608, %v607
      %v616 = vpack.c.b16 %v610, %v609
      %v617 = vpack.c.b16 %v612, %v611
      %v618 = vpack.c.b16 %v614, %v613
      %v621 = vunpack.c.l.b16 %v605
      %v622 = vunpack.c.l.b16 %v606
      %v623 = vpack.c.b16 %v622, %v621
      %vm625 = vcmask 130048
      %v627 = vsel %vm625, %v615, 0
      %v630 = vsel %vm625, %v616, 0
      %v633 = vsel %vm625, %v617, 0
      %v636 = vsel %vm625, %v618, 0
      %638 = vmatprep.subr.bf16.mxu0 0
      %639 = vmatpush1.bf16.msra.mxu0 %v623
      %640 = vmatprep.subr.bf16.mxu0 0
      %641 = vmatpush1.bf16.msra.mxu0 0
      %642 = vmatprep.subr.bf16.mxu0 0
      %643 = vmatpush1.bf16.msra.mxu0 0
      %644 = vmatprep.subr.bf16.mxu0 0
      %645 = vmatpush1.bf16.msra.mxu0 0
      %646 = vmatprep.subr.bf16.mxu0 0
      %647 = vmatpush1.bf16.msra.mxu0 0
      %648 = vmatprep.subr.bf16.mxu0 0
      %649 = vmatpush1.bf16.msra.mxu0 0
      %650 = vmatprep.subr.bf16.mxu0 0
      %651 = vmatpush1.bf16.msra.mxu0 0
      %652 = vmatprep.subr.bf16.mxu0 0
      %653 = vmatpush1.bf16.msra.mxu0 0
      %654 = vmatprep.subr.bf16.mxu0 0
      %655 = vmatpush1.bf16.msra.mxu0 0
      %656 = vmatprep.subr.bf16.mxu0 0
      %657 = vmatpush1.bf16.msra.mxu0 0
      %658 = vmatprep.subr.bf16.mxu0 0
      %659 = vmatpush1.bf16.msra.mxu0 0
      %660 = vmatprep.subr.bf16.mxu0 0
      %661 = vmatpush1.bf16.msra.mxu0 0
      %662 = vmatprep.subr.bf16.mxu0 0
      %663 = vmatpush1.bf16.msra.mxu0 0
      %664 = vmatprep.subr.bf16.mxu0 0
      %665 = vmatpush1.bf16.msra.mxu0 0
      %666 = vmatprep.subr.bf16.mxu0 0
      %667 = vmatpush1.bf16.msra.mxu0 0
      %668 = vmatprep.subr.bf16.mxu0 0
      %669 = vmatpush1.bf16.msra.mxu0 0
      %670 = vmatprep.mubr.bf16.mxu0 0
      %671 = vmatmul.mubr.bf16.gmra.mrb[0].mxu0 %v627
      %v672 = vpop.f32.mrb[0].mxu0
      %v673 = vadd.f32 0.0, %v672
      %v674 = vpop.f32.mrb[0].mxu0
      %v675 = vpop.f32.mrb[0].mxu0
      %v676 = vadd.f32 0.0, %v675
      %v677 = vpop.f32.mrb[0].mxu0
      %678 = vmatprep.mubr.bf16.mxu0 0
      %679 = vmatmul.mubr.bf16.gmra.mrb[0].mxu0 %v630
      %v680 = vpop.f32.mrb[0].mxu0
      %v681 = vadd.f32 0.0, %v680
      %v682 = vpop.f32.mrb[0].mxu0
      %v683 = vpop.f32.mrb[0].mxu0
      %v684 = vadd.f32 0.0, %v683
      %v685 = vpop.f32.mrb[0].mxu0
      %686 = vmatprep.mubr.bf16.mxu0 0
      %687 = vmatmul.mubr.bf16.gmra.mrb[0].mxu0 %v633
      %v688 = vpop.f32.mrb[0].mxu0
      %v689 = vadd.f32 0.0, %v688
      %v690 = vpop.f32.mrb[0].mxu0
      %v691 = vpop.f32.mrb[0].mxu0
      %v692 = vadd.f32 0.0, %v691
      %v693 = vpop.f32.mrb[0].mxu0
      %694 = vmatprep.mubr.bf16.mxu0 0
      %695 = vmatmul.mubr.bf16.gmra.mrb[0].mxu0 %v636
      %v696 = vpop.f32.mrb[0].mxu0
      %v697 = vadd.f32 0.0, %v696
      %v698 = vpop.f32.mrb[0].mxu0
      %v699 = vpop.f32.mrb[0].mxu0
      %v700 = vadd.f32 0.0, %v699
      %v701 = vpop.f32.mrb[0].mxu0
      %702 = vdwg.mxu0
      %v711 = vunpack.c.l.b16 %v472
      %v712 = vunpack.c.l.b16 %v473
      %v713 = vunpack.c.l.b16 %v474
      %v714 = vunpack.c.l.b16 %v475
      %v715 = vunpack.c.l.b16 %v476
      %v716 = vunpack.c.l.b16 %v477
      %v717 = vunpack.c.l.b16 %v478
      %v718 = vunpack.c.l.b16 %v479
      %v719 = vpack.c.b16 %v712, %v711
      %v720 = vpack.c.b16 %v714, %v713
      %v721 = vpack.c.b16 %v716, %v715
      %v722 = vpack.c.b16 %v718, %v717
      %v725 = vunpack.c.l.b16 %v480
      %v726 = vunpack.c.l.b16 %v481
      %v727 = vpack.c.b16 %v726, %v725
      %v730 = vsel %vm625, %v719, 0
      %v733 = vsel %vm625, %v720, 0
      %v736 = vsel %vm625, %v721, 0
      %v739 = vsel %vm625, %v722, 0
      %741 = vmatprep.subr.bf16.mxu0 0
      %742 = vmatpush1.bf16.msra.mxu0 %v727
      %743 = vmatprep.subr.bf16.mxu0 0
      %744 = vmatpush1.bf16.msra.mxu0 0
      %745 = vmatprep.subr.bf16.mxu0 0
      %746 = vmatpush1.bf16.msra.mxu0 0
      %747 = vmatprep.subr.bf16.mxu0 0
      %748 = vmatpush1.bf16.msra.mxu0 0
      %749 = vmatprep.subr.bf16.mxu0 0
      %750 = vmatpush1.bf16.msra.mxu0 0
      %751 = vmatprep.subr.bf16.mxu0 0
      %752 = vmatpush1.bf16.msra.mxu0 0
      %753 = vmatprep.subr.bf16.mxu0 0
      %754 = vmatpush1.bf16.msra.mxu0 0
      %755 = vmatprep.subr.bf16.mxu0 0
      %756 = vmatpush1.bf16.msra.mxu0 0
      %757 = vmatprep.subr.bf16.mxu0 0
      %758 = vmatpush1.bf16.msra.mxu0 0
      %759 = vmatprep.subr.bf16.mxu0 0
      %760 = vmatpush1.bf16.msra.mxu0 0
      %761 = vmatprep.subr.bf16.mxu0 0
      %762 = vmatpush1.bf16.msra.mxu0 0
      %763 = vmatprep.subr.bf16.mxu0 0
      %764 = vmatpush1.bf16.msra.mxu0 0
      %765 = vmatprep.subr.bf16.mxu0 0
      %766 = vmatpush1.bf16.msra.mxu0 0
      %767 = vmatprep.subr.bf16.mxu0 0
      %768 = vmatpush1.bf16.msra.mxu0 0
      %769 = vmatprep.subr.bf16.mxu0 0
      %770 = vmatpush1.bf16.msra.mxu0 0
      %771 = vmatprep.subr.bf16.mxu0 0
      %772 = vmatpush1.bf16.msra.mxu0 0
      %773 = vmatprep.mubr.bf16.mxu0 0
      %774 = vmatmul.mubr.bf16.gmra.mrb[0].mxu0 %v730
      %v775 = vpop.f32.mrb[0].mxu0
      %v776 = vadd.f32 %v673, %v775
      %v777 = vpop.f32.mrb[0].mxu0
      %v778 = vpop.f32.mrb[0].mxu0
      %v779 = vadd.f32 %v676, %v778
      %v780 = vpop.f32.mrb[0].mxu0
      %781 = vmatprep.mubr.bf16.mxu0 0
      %782 = vmatmul.mubr.bf16.gmra.mrb[0].mxu0 %v733
      %v783 = vpop.f32.mrb[0].mxu0
      %v784 = vadd.f32 %v681, %v783
      %v785 = vpop.f32.mrb[0].mxu0
      %v786 = vpop.f32.mrb[0].mxu0
      %v787 = vadd.f32 %v684, %v786
      %v788 = vpop.f32.mrb[0].mxu0
      %789 = vmatprep.mubr.bf16.mxu0 0
      %790 = vmatmul.mubr.bf16.gmra.mrb[0].mxu0 %v736
      %v791 = vpop.f32.mrb[0].mxu0
      %v792 = vadd.f32 %v689, %v791
      %v793 = vpop.f32.mrb[0].mxu0
      %v794 = vpop.f32.mrb[0].mxu0
      %v795 = vadd.f32 %v692, %v794
      %v796 = vpop.f32.mrb[0].mxu0
      %797 = vmatprep.mubr.bf16.mxu0 0
      %798 = vmatmul.mubr.bf16.gmra.mrb[0].mxu0 %v739
      %v799 = vpop.f32.mrb[0].mxu0
      %v800 = vadd.f32 %v697, %v799
      %v801 = vpop.f32.mrb[0].mxu0
      %v802 = vpop.f32.mrb[0].mxu0
      %v803 = vadd.f32 %v700, %v802
      %v804 = vpop.f32.mrb[0].mxu0
      %805 = vdwg.mxu0
      %v806 = vld [vmem:[#allocation2] sm:$0xe]
      %v807 = vld [vmem:[#allocation2 + $0x8] sm:$0xe]
      %v808 = vld [vmem:[#allocation2 + $0x10] sm:$0xe]
      %v809 = vld [vmem:[#allocation2 + $0x18] sm:$0xe]
      %v810 = vld [vmem:[#allocation2 + $0x20] sm:$0xe]
      %v811 = vld [vmem:[#allocation2 + $0x28] sm:$0xe]
      %v812 = vld [vmem:[#allocation2 + $0x30] sm:$0xe]
      %v813 = vld [vmem:[#allocation2 + $0x38] sm:$0xe]
      %vm830 = vcmask 1042432
      %vm831 = vcmask 1046532
      %vm832 = vmor %vm830, %vm831
      %v833 = vrot.slane %v806, 5
      %v834 = vrot.slane %v833, 4
      %v835 = vrot.slane %v482, 5
      %v836 = vsel %vm832, %v834, %v835
      %v837 = vrot.slane %v807, 5
      %v838 = vrot.slane %v837, 4
      %v839 = vrot.slane %v483, 5
      %v840 = vsel %vm832, %v838, %v839
      %v841 = vrot.slane %v808, 5
      %v842 = vrot.slane %v841, 4
      %v843 = vrot.slane %v484, 5
      %v844 = vsel %vm832, %v842, %v843
      %v845 = vrot.slane %v809, 5
      %v846 = vrot.slane %v845, 4
      %v847 = vrot.slane %v485, 5
      %v848 = vsel %vm832, %v846, %v847
      %v849 = vrot.slane %v810, 5
      %v850 = vrot.slane %v849, 4
      %v851 = vrot.slane %v486, 5
      %v852 = vsel %vm832, %v850, %v851
      %v853 = vrot.slane %v811, 5
      %v854 = vrot.slane %v853, 4
      %v855 = vrot.slane %v487, 5
      %v856 = vsel %vm832, %v854, %v855
      %v857 = vrot.slane %v812, 5
      %v858 = vrot.slane %v857, 4
      %v859 = vrot.slane %v488, 5
      %v860 = vsel %vm832, %v858, %v859
      %v861 = vrot.slane %v813, 5
      %v862 = vrot.slane %v861, 4
      %v863 = vrot.slane %v489, 5
      %v864 = vsel %vm832, %v862, %v863
      %v865 = vld [vmem:[%s3 + $0x10] sm:$0xf]
      %v866 = vld [vmem:[%s3 + $0x14] sm:$0xf]
      %v867 = vunpack.c.l.b16 %v836
      %v868 = vunpack.c.l.b16 %v840
      %v869 = vunpack.c.l.b16 %v844
      %v870 = vunpack.c.l.b16 %v848
      %v871 = vunpack.c.l.b16 %v852
      %v872 = vunpack.c.l.b16 %v856
      %v873 = vunpack.c.l.b16 %v860
      %v874 = vunpack.c.l.b16 %v864
      %v875 = vpack.c.b16 %v868, %v867
      %v876 = vpack.c.b16 %v870, %v869
      %v877 = vpack.c.b16 %v872, %v871
      %v878 = vpack.c.b16 %v874, %v873
      %v881 = vunpack.c.l.b16 %v865
      %v882 = vunpack.c.l.b16 %v866
      %v883 = vpack.c.b16 %v882, %v881
      %v886 = vsel %vm625, %v875, 0
      %v889 = vsel %vm625, %v876, 0
      %v892 = vsel %vm625, %v877, 0
      %v895 = vsel %vm625, %v878, 0
      %897 = vmatprep.subr.bf16.mxu0 0
      %898 = vmatpush1.bf16.msra.mxu0 %v883
      %899 = vmatprep.subr.bf16.mxu0 0
      %900 = vmatpush1.bf16.msra.mxu0 0
      %901 = vmatprep.subr.bf16.mxu0 0
      %902 = vmatpush1.bf16.msra.mxu0 0
      %903 = vmatprep.subr.bf16.mxu0 0
      %904 = vmatpush1.bf16.msra.mxu0 0
      %905 = vmatprep.subr.bf16.mxu0 0
      %906 = vmatpush1.bf16.msra.mxu0 0
      %907 = vmatprep.subr.bf16.mxu0 0
      %908 = vmatpush1.bf16.msra.mxu0 0
      %909 = vmatprep.subr.bf16.mxu0 0
      %910 = vmatpush1.bf16.msra.mxu0 0
      %911 = vmatprep.subr.bf16.mxu0 0
      %912 = vmatpush1.bf16.msra.mxu0 0
      %913 = vmatprep.subr.bf16.mxu0 0
      %914 = vmatpush1.bf16.msra.mxu0 0
      %915 = vmatprep.subr.bf16.mxu0 0
      %916 = vmatpush1.bf16.msra.mxu0 0
      %917 = vmatprep.subr.bf16.mxu0 0
      %918 = vmatpush1.bf16.msra.mxu0 0
      %919 = vmatprep.subr.bf16.mxu0 0
      %920 = vmatpush1.bf16.msra.mxu0 0
      %921 = vmatprep.subr.bf16.mxu0 0
      %922 = vmatpush1.bf16.msra.mxu0 0
      %923 = vmatprep.subr.bf16.mxu0 0
      %924 = vmatpush1.bf16.msra.mxu0 0
      %925 = vmatprep.subr.bf16.mxu0 0
      %926 = vmatpush1.bf16.msra.mxu0 0
      %927 = vmatprep.subr.bf16.mxu0 0
      %928 = vmatpush1.bf16.msra.mxu0 0
      %929 = vmatprep.mubr.bf16.mxu0 0
      %930 = vmatmul.mubr.bf16.gmra.mrb[0].mxu0 %v886
      %v931 = vpop.f32.mrb[0].mxu0
      %v932 = vadd.f32 0.0, %v931
      %v933 = vpop.f32.mrb[0].mxu0
      %v934 = vpop.f32.mrb[0].mxu0
      %v935 = vadd.f32 0.0, %v934
      %v936 = vpop.f32.mrb[0].mxu0
      %937 = vmatprep.mubr.bf16.mxu0 0
      %938 = vmatmul.mubr.bf16.gmra.mrb[0].mxu0 %v889
      %v939 = vpop.f32.mrb[0].mxu0
      %v940 = vadd.f32 0.0, %v939
      %v941 = vpop.f32.mrb[0].mxu0
      %v942 = vpop.f32.mrb[0].mxu0
      %v943 = vadd.f32 0.0, %v942
      %v944 = vpop.f32.mrb[0].mxu0
      %945 = vmatprep.mubr.bf16.mxu0 0
      %946 = vmatmul.mubr.bf16.gmra.mrb[0].mxu0 %v892
      %v947 = vpop.f32.mrb[0].mxu0
      %v948 = vadd.f32 0.0, %v947
      %v949 = vpop.f32.mrb[0].mxu0
      %v950 = vpop.f32.mrb[0].mxu0
      %v951 = vadd.f32 0.0, %v950
      %v952 = vpop.f32.mrb[0].mxu0
      %953 = vmatprep.mubr.bf16.mxu0 0
      %954 = vmatmul.mubr.bf16.gmra.mrb[0].mxu0 %v895
      %v955 = vpop.f32.mrb[0].mxu0
      %v956 = vadd.f32 0.0, %v955
      %v957 = vpop.f32.mrb[0].mxu0
      %v958 = vpop.f32.mrb[0].mxu0
      %v959 = vadd.f32 0.0, %v958
      %v960 = vpop.f32.mrb[0].mxu0
      %961 = vdwg.mxu0
      %v962 = vadd.f32 %v776, %v932
      %v963 = vadd.f32 %v779, %v935
      %v964 = vadd.f32 %v784, %v940
      %v965 = vadd.f32 %v787, %v943
      %v966 = vadd.f32 %v792, %v948
      %v967 = vadd.f32 %v795, %v951
      %v968 = vadd.f32 %v800, %v956
      %v969 = vadd.f32 %v803, %v959
      %v970 = vld [vmem:[%s417] sm:$0xf]
      %v971 = vld [vmem:[%s417 + $0x8] sm:$0xf]
      %v972 = vld [vmem:[%s417 + $0x10] sm:$0xf]
      %v973 = vld [vmem:[%s417 + $0x18] sm:$0xf]
      %v974 = vld [vmem:[%s417 + $0x20] sm:$0xf]
      %v975 = vld [vmem:[%s417 + $0x28] sm:$0xf]
      %v976 = vld [vmem:[%s417 + $0x30] sm:$0xf]
      %v977 = vld [vmem:[%s417 + $0x38] sm:$0xf]
      %v978 = vld [vmem:[%s3 + $0x18] sm:$0xf]
      %v979 = vld [vmem:[%s3 + $0x1c] sm:$0xf]
      %v988 = vunpack.c.l.b16 %v970
      %v989 = vunpack.c.l.b16 %v971
      %v990 = vunpack.c.l.b16 %v972
      %v991 = vunpack.c.l.b16 %v973
      %v992 = vunpack.c.l.b16 %v974
      %v993 = vunpack.c.l.b16 %v975
      %v994 = vunpack.c.l.b16 %v976
      %v995 = vunpack.c.l.b16 %v977
      %v996 = vpack.c.b16 %v989, %v988
      %v997 = vpack.c.b16 %v991, %v990
      %v998 = vpack.c.b16 %v993, %v992
      %v999 = vpack.c.b16 %v995, %v994
      %v1002 = vunpack.c.l.b16 %v978
      %v1003 = vunpack.c.l.b16 %v979
      %v1004 = vpack.c.b16 %v1003, %v1002
      %v1007 = vsel %vm625, %v996, 0
      %v1010 = vsel %vm625, %v997, 0
      %v1013 = vsel %vm625, %v998, 0
      %v1016 = vsel %vm625, %v999, 0
      %1018 = vmatprep.subr.bf16.mxu0 0
      %1019 = vmatpush1.bf16.msra.mxu0 %v1004
      %1020 = vmatprep.subr.bf16.mxu0 0
      %1021 = vmatpush1.bf16.msra.mxu0 0
      %1022 = vmatprep.subr.bf16.mxu0 0
      %1023 = vmatpush1.bf16.msra.mxu0 0
      %1024 = vmatprep.subr.bf16.mxu0 0
      %1025 = vmatpush1.bf16.msra.mxu0 0
      %1026 = vmatprep.subr.bf16.mxu0 0
      %1027 = vmatpush1.bf16.msra.mxu0 0
      %1028 = vmatprep.subr.bf16.mxu0 0
      %1029 = vmatpush1.bf16.msra.mxu0 0
      %1030 = vmatprep.subr.bf16.mxu0 0
      %1031 = vmatpush1.bf16.msra.mxu0 0
      %1032 = vmatprep.subr.bf16.mxu0 0
      %1033 = vmatpush1.bf16.msra.mxu0 0
      %1034 = vmatprep.subr.bf16.mxu0 0
      %1035 = vmatpush1.bf16.msra.mxu0 0
      %1036 = vmatprep.subr.bf16.mxu0 0
      %1037 = vmatpush1.bf16.msra.mxu0 0
      %1038 = vmatprep.subr.bf16.mxu0 0
      %1039 = vmatpush1.bf16.msra.mxu0 0
      %1040 = vmatprep.subr.bf16.mxu0 0
      %1041 = vmatpush1.bf16.msra.mxu0 0
      %1042 = vmatprep.subr.bf16.mxu0 0
      %1043 = vmatpush1.bf16.msra.mxu0 0
      %1044 = vmatprep.subr.bf16.mxu0 0
      %1045 = vmatpush1.bf16.msra.mxu0 0
      %1046 = vmatprep.subr.bf16.mxu0 0
      %1047 = vmatpush1.bf16.msra.mxu0 0
      %1048 = vmatprep.subr.bf16.mxu0 0
      %1049 = vmatpush1.bf16.msra.mxu0 0
      %1050 = vmatprep.mubr.bf16.mxu0 0
      %1051 = vmatmul.mubr.bf16.gmra.mrb[0].mxu0 %v1007
      %v1052 = vpop.f32.mrb[0].mxu0
      %v1053 = vadd.f32 0.0, %v1052
      %v1054 = vpop.f32.mrb[0].mxu0
      %v1055 = vpop.f32.mrb[0].mxu0
      %v1056 = vadd.f32 0.0, %v1055
      %v1057 = vpop.f32.mrb[0].mxu0
      %1058 = vmatprep.mubr.bf16.mxu0 0
      %1059 = vmatmul.mubr.bf16.gmra.mrb[0].mxu0 %v1010
      %v1060 = vpop.f32.mrb[0].mxu0
      %v1061 = vadd.f32 0.0, %v1060
      %v1062 = vpop.f32.mrb[0].mxu0
      %v1063 = vpop.f32.mrb[0].mxu0
      %v1064 = vadd.f32 0.0, %v1063
      %v1065 = vpop.f32.mrb[0].mxu0
      %1066 = vmatprep.mubr.bf16.mxu0 0
      %1067 = vmatmul.mubr.bf16.gmra.mrb[0].mxu0 %v1013
      %v1068 = vpop.f32.mrb[0].mxu0
      %v1069 = vadd.f32 0.0, %v1068
      %v1070 = vpop.f32.mrb[0].mxu0
      %v1071 = vpop.f32.mrb[0].mxu0
      %v1072 = vadd.f32 0.0, %v1071
      %v1073 = vpop.f32.mrb[0].mxu0
      %1074 = vmatprep.mubr.bf16.mxu0 0
      %1075 = vmatmul.mubr.bf16.gmra.mrb[0].mxu0 %v1016
      %v1076 = vpop.f32.mrb[0].mxu0
      %v1077 = vadd.f32 0.0, %v1076
      %v1078 = vpop.f32.mrb[0].mxu0
      %v1079 = vpop.f32.mrb[0].mxu0
      %v1080 = vadd.f32 0.0, %v1079
      %v1081 = vpop.f32.mrb[0].mxu0
      %1082 = vdwg.mxu0
      %v1083 = vadd.f32 %v962, %v1053
      %v1084 = vadd.f32 %v963, %v1056
      %v1085 = vadd.f32 %v964, %v1061
      %v1086 = vadd.f32 %v965, %v1064
      %v1087 = vadd.f32 %v966, %v1069
      %v1088 = vadd.f32 %v967, %v1072
      %v1089 = vadd.f32 %v968, %v1077
      %v1090 = vadd.f32 %v969, %v1080
      %v1091 = vld [vmem:[%s417] sm:$0xf]
      %v1092 = vld [vmem:[%s417 + $0x4] sm:$0x1]
      %v1093 = vld [vmem:[%s417 + $0x8] sm:$0xf]
      %v1094 = vld [vmem:[%s417 + $0xc] sm:$0x1]
      %v1095 = vld [vmem:[%s417 + $0x10] sm:$0xf]
      %v1096 = vld [vmem:[%s417 + $0x14] sm:$0x1]
      %v1097 = vld [vmem:[%s417 + $0x18] sm:$0xf]
      %v1098 = vld [vmem:[%s417 + $0x1c] sm:$0x1]
      %v1099 = vld [vmem:[%s417 + $0x20] sm:$0xf]
      %v1100 = vld [vmem:[%s417 + $0x24] sm:$0x1]
      %v1101 = vld [vmem:[%s417 + $0x28] sm:$0xf]
      %v1102 = vld [vmem:[%s417 + $0x2c] sm:$0x1]
      %v1103 = vld [vmem:[%s417 + $0x30] sm:$0xf]
      %v1104 = vld [vmem:[%s417 + $0x34] sm:$0x1]
      %v1105 = vld [vmem:[%s417 + $0x38] sm:$0xf]
      %v1106 = vld [vmem:[%s417 + $0x3c] sm:$0x1]
      %v1108 = vshrl.u32 %v1091, 16
      %v1110 = vrot.slane %v1108, 4
      %v1111 = vshll.u32 %v1091, 16
      %v1113 = vrot.slane %v1111, 5
      %v1114 = vor.u32 %v1110, %v1113
      %v1115 = vrot.slane %v1114, 4
      %v1117 = vshll.u32 %v1092, 16
      %v1119 = vrot.slane %v1117, 5
      %v1120 = vsel %vm492, %v1115, %v1119
      %v1122 = vshrl.u32 %v1093, 16
      %v1124 = vrot.slane %v1122, 4
      %v1125 = vshll.u32 %v1093, 16
      %v1127 = vrot.slane %v1125, 5
      %v1128 = vor.u32 %v1124, %v1127
      %v1129 = vrot.slane %v1128, 4
      %v1131 = vshll.u32 %v1094, 16
      %v1133 = vrot.slane %v1131, 5
      %v1134 = vsel %vm492, %v1129, %v1133
      %v1136 = vshrl.u32 %v1095, 16
      %v1138 = vrot.slane %v1136, 4
      %v1139 = vshll.u32 %v1095, 16
      %v1141 = vrot.slane %v1139, 5
      %v1142 = vor.u32 %v1138, %v1141
      %v1143 = vrot.slane %v1142, 4
      %v1145 = vshll.u32 %v1096, 16
      %v1147 = vrot.slane %v1145, 5
      %v1148 = vsel %vm492, %v1143, %v1147
      %v1150 = vshrl.u32 %v1097, 16
      %v1152 = vrot.slane %v1150, 4
      %v1153 = vshll.u32 %v1097, 16
      %v1155 = vrot.slane %v1153, 5
      %v1156 = vor.u32 %v1152, %v1155
      %v1157 = vrot.slane %v1156, 4
      %v1159 = vshll.u32 %v1098, 16
      %v1161 = vrot.slane %v1159, 5
      %v1162 = vsel %vm492, %v1157, %v1161
      %v1164 = vshrl.u32 %v1099, 16
      %v1166 = vrot.slane %v1164, 4
      %v1167 = vshll.u32 %v1099, 16
      %v1169 = vrot.slane %v1167, 5
      %v1170 = vor.u32 %v1166, %v1169
      %v1171 = vrot.slane %v1170, 4
      %v1173 = vshll.u32 %v1100, 16
      %v1175 = vrot.slane %v1173, 5
      %v1176 = vsel %vm492, %v1171, %v1175
      %v1178 = vshrl.u32 %v1101, 16
      %v1180 = vrot.slane %v1178, 4
      %v1181 = vshll.u32 %v1101, 16
      %v1183 = vrot.slane %v1181, 5
      %v1184 = vor.u32 %v1180, %v1183
      %v1185 = vrot.slane %v1184, 4
      %v1187 = vshll.u32 %v1102, 16
      %v1189 = vrot.slane %v1187, 5
      %v1190 = vsel %vm492, %v1185, %v1189
      %v1192 = vshrl.u32 %v1103, 16
      %v1194 = vrot.slane %v1192, 4
      %v1195 = vshll.u32 %v1103, 16
      %v1197 = vrot.slane %v1195, 5
      %v1198 = vor.u32 %v1194, %v1197
      %v1199 = vrot.slane %v1198, 4
      %v1201 = vshll.u32 %v1104, 16
      %v1203 = vrot.slane %v1201, 5
      %v1204 = vsel %vm492, %v1199, %v1203
      %v1206 = vshrl.u32 %v1105, 16
      %v1208 = vrot.slane %v1206, 4
      %v1209 = vshll.u32 %v1105, 16
      %v1211 = vrot.slane %v1209, 5
      %v1212 = vor.u32 %v1208, %v1211
      %v1213 = vrot.slane %v1212, 4
      %v1215 = vshll.u32 %v1106, 16
      %v1217 = vrot.slane %v1215, 5
      %v1218 = vsel %vm492, %v1213, %v1217
      %v1219 = vld [vmem:[%s3 + $0x20] sm:$0xf]
      %v1220 = vld [vmem:[%s3 + $0x24] sm:$0xf]
      %v1221 = vunpack.c.l.b16 %v1120
      %v1222 = vunpack.c.l.b16 %v1134
      %v1223 = vunpack.c.l.b16 %v1148
      %v1224 = vunpack.c.l.b16 %v1162
      %v1225 = vunpack.c.l.b16 %v1176
      %v1226 = vunpack.c.l.b16 %v1190
      %v1227 = vunpack.c.l.b16 %v1204
      %v1228 = vunpack.c.l.b16 %v1218
      %v1229 = vpack.c.b16 %v1222, %v1221
      %v1230 = vpack.c.b16 %v1224, %v1223
      %v1231 = vpack.c.b16 %v1226, %v1225
      %v1232 = vpack.c.b16 %v1228, %v1227
      %v1235 = vunpack.c.l.b16 %v1219
      %v1236 = vunpack.c.l.b16 %v1220
      %v1237 = vpack.c.b16 %v1236, %v1235
      %v1240 = vsel %vm625, %v1229, 0
      %v1243 = vsel %vm625, %v1230, 0
      %v1246 = vsel %vm625, %v1231, 0
      %v1249 = vsel %vm625, %v1232, 0
      %1251 = vmatprep.subr.bf16.mxu0 0
      %1252 = vmatpush1.bf16.msra.mxu0 %v1237
      %1253 = vmatprep.subr.bf16.mxu0 0
      %1254 = vmatpush1.bf16.msra.mxu0 0
      %1255 = vmatprep.subr.bf16.mxu0 0
      %1256 = vmatpush1.bf16.msra.mxu0 0
      %1257 = vmatprep.subr.bf16.mxu0 0
      %1258 = vmatpush1.bf16.msra.mxu0 0
      %1259 = vmatprep.subr.bf16.mxu0 0
      %1260 = vmatpush1.bf16.msra.mxu0 0
      %1261 = vmatprep.subr.bf16.mxu0 0
      %1262 = vmatpush1.bf16.msra.mxu0 0
      %1263 = vmatprep.subr.bf16.mxu0 0
      %1264 = vmatpush1.bf16.msra.mxu0 0
      %1265 = vmatprep.subr.bf16.mxu0 0
      %1266 = vmatpush1.bf16.msra.mxu0 0
      %1267 = vmatprep.subr.bf16.mxu0 0
      %1268 = vmatpush1.bf16.msra.mxu0 0
      %1269 = vmatprep.subr.bf16.mxu0 0
      %1270 = vmatpush1.bf16.msra.mxu0 0
      %1271 = vmatprep.subr.bf16.mxu0 0
      %1272 = vmatpush1.bf16.msra.mxu0 0
      %1273 = vmatprep.subr.bf16.mxu0 0
      %1274 = vmatpush1.bf16.msra.mxu0 0
      %1275 = vmatprep.subr.bf16.mxu0 0
      %1276 = vmatpush1.bf16.msra.mxu0 0
      %1277 = vmatprep.subr.bf16.mxu0 0
      %1278 = vmatpush1.bf16.msra.mxu0 0
      %1279 = vmatprep.subr.bf16.mxu0 0
      %1280 = vmatpush1.bf16.msra.mxu0 0
      %1281 = vmatprep.subr.bf16.mxu0 0
      %1282 = vmatpush1.bf16.msra.mxu0 0
      %1283 = vmatprep.mubr.bf16.mxu0 0
      %1284 = vmatmul.mubr.bf16.gmra.mrb[0].mxu0 %v1240
      %v1285 = vpop.f32.mrb[0].mxu0
      %v1286 = vadd.f32 0.0, %v1285
      %v1287 = vpop.f32.mrb[0].mxu0
      %v1288 = vpop.f32.mrb[0].mxu0
      %v1289 = vadd.f32 0.0, %v1288
      %v1290 = vpop.f32.mrb[0].mxu0
      %1291 = vmatprep.mubr.bf16.mxu0 0
      %1292 = vmatmul.mubr.bf16.gmra.mrb[0].mxu0 %v1243
      %v1293 = vpop.f32.mrb[0].mxu0
      %v1294 = vadd.f32 0.0, %v1293
      %v1295 = vpop.f32.mrb[0].mxu0
      %v1296 = vpop.f32.mrb[0].mxu0
      %v1297 = vadd.f32 0.0, %v1296
      %v1298 = vpop.f32.mrb[0].mxu0
      %1299 = vmatprep.mubr.bf16.mxu0 0
      %1300 = vmatmul.mubr.bf16.gmra.mrb[0].mxu0 %v1246
      %v1301 = vpop.f32.mrb[0].mxu0
      %v1302 = vadd.f32 0.0, %v1301
      %v1303 = vpop.f32.mrb[0].mxu0
      %v1304 = vpop.f32.mrb[0].mxu0
      %v1305 = vadd.f32 0.0, %v1304
      %v1306 = vpop.f32.mrb[0].mxu0
      %1307 = vmatprep.mubr.bf16.mxu0 0
      %1308 = vmatmul.mubr.bf16.gmra.mrb[0].mxu0 %v1249
      %v1309 = vpop.f32.mrb[0].mxu0
      %v1310 = vadd.f32 0.0, %v1309
      %v1311 = vpop.f32.mrb[0].mxu0
      %v1312 = vpop.f32.mrb[0].mxu0
      %v1313 = vadd.f32 0.0, %v1312
      %v1314 = vpop.f32.mrb[0].mxu0
      %1315 = vdwg.mxu0
      %v1316 = vadd.f32 %v1083, %v1286
      %v1317 = vadd.f32 %v1084, %v1289
      %v1318 = vadd.f32 %v1085, %v1294
      %v1319 = vadd.f32 %v1086, %v1297
      %v1320 = vadd.f32 %v1087, %v1302
      %v1321 = vadd.f32 %v1088, %v1305
      %v1322 = vadd.f32 %v1089, %v1310
      %v1323 = vadd.f32 %v1090, %v1313
      %v1324 = vld [vmem:[%s417] sm:$0xe]
      %v1325 = vld [vmem:[%s417 + $0x8] sm:$0xe]
      %v1326 = vld [vmem:[%s417 + $0x10] sm:$0xe]
      %v1327 = vld [vmem:[%s417 + $0x18] sm:$0xe]
      %v1328 = vld [vmem:[%s417 + $0x20] sm:$0xe]
      %v1329 = vld [vmem:[%s417 + $0x28] sm:$0xe]
      %v1330 = vld [vmem:[%s417 + $0x30] sm:$0xe]
      %v1331 = vld [vmem:[%s417 + $0x38] sm:$0xe]
      %v1348 = vrot.slane %v1324, 5
      %v1349 = vrot.slane %v1348, 4
      %v1350 = vrot.slane %v1092, 5
      %v1351 = vsel %vm832, %v1349, %v1350
      %v1352 = vrot.slane %v1325, 5
      %v1353 = vrot.slane %v1352, 4
      %v1354 = vrot.slane %v1094, 5
      %v1355 = vsel %vm832, %v1353, %v1354
      %v1356 = vrot.slane %v1326, 5
      %v1357 = vrot.slane %v1356, 4
      %v1358 = vrot.slane %v1096, 5
      %v1359 = vsel %vm832, %v1357, %v1358
      %v1360 = vrot.slane %v1327, 5
      %v1361 = vrot.slane %v1360, 4
      %v1362 = vrot.slane %v1098, 5
      %v1363 = vsel %vm832, %v1361, %v1362
      %v1364 = vrot.slane %v1328, 5
      %v1365 = vrot.slane %v1364, 4
      %v1366 = vrot.slane %v1100, 5
      %v1367 = vsel %vm832, %v1365, %v1366
      %v1368 = vrot.slane %v1329, 5
      %v1369 = vrot.slane %v1368, 4
      %v1370 = vrot.slane %v1102, 5
      %v1371 = vsel %vm832, %v1369, %v1370
      %v1372 = vrot.slane %v1330, 5
      %v1373 = vrot.slane %v1372, 4
      %v1374 = vrot.slane %v1104, 5
      %v1375 = vsel %vm832, %v1373, %v1374
      %v1376 = vrot.slane %v1331, 5
      %v1377 = vrot.slane %v1376, 4
      %v1378 = vrot.slane %v1106, 5
      %v1379 = vsel %vm832, %v1377, %v1378
      %v1380 = vld [vmem:[%s3 + $0x28] sm:$0xf]
      %v1381 = vld [vmem:[%s3 + $0x2c] sm:$0xf]
      %v1382 = vunpack.c.l.b16 %v1351
      %v1383 = vunpack.c.l.b16 %v1355
      %v1384 = vunpack.c.l.b16 %v1359
      %v1385 = vunpack.c.l.b16 %v1363
      %v1386 = vunpack.c.l.b16 %v1367
      %v1387 = vunpack.c.l.b16 %v1371
      %v1388 = vunpack.c.l.b16 %v1375
      %v1389 = vunpack.c.l.b16 %v1379
      %v1390 = vpack.c.b16 %v1383, %v1382
      %v1391 = vpack.c.b16 %v1385, %v1384
      %v1392 = vpack.c.b16 %v1387, %v1386
      %v1393 = vpack.c.b16 %v1389, %v1388
      %v1396 = vunpack.c.l.b16 %v1380
      %v1397 = vunpack.c.l.b16 %v1381
      %v1398 = vpack.c.b16 %v1397, %v1396
      %v1401 = vsel %vm625, %v1390, 0
      %v1404 = vsel %vm625, %v1391, 0
      %v1407 = vsel %vm625, %v1392, 0
      %v1410 = vsel %vm625, %v1393, 0
      %1412 = vmatprep.subr.bf16.mxu0 0
      %1413 = vmatpush1.bf16.msra.mxu0 %v1398
      %1414 = vmatprep.subr.bf16.mxu0 0
      %1415 = vmatpush1.bf16.msra.mxu0 0
      %1416 = vmatprep.subr.bf16.mxu0 0
      %1417 = vmatpush1.bf16.msra.mxu0 0
      %1418 = vmatprep.subr.bf16.mxu0 0
      %1419 = vmatpush1.bf16.msra.mxu0 0
      %1420 = vmatprep.subr.bf16.mxu0 0
      %1421 = vmatpush1.bf16.msra.mxu0 0
      %1422 = vmatprep.subr.bf16.mxu0 0
      %1423 = vmatpush1.bf16.msra.mxu0 0
      %1424 = vmatprep.subr.bf16.mxu0 0
      %1425 = vmatpush1.bf16.msra.mxu0 0
      %1426 = vmatprep.subr.bf16.mxu0 0
      %1427 = vmatpush1.bf16.msra.mxu0 0
      %1428 = vmatprep.subr.bf16.mxu0 0
      %1429 = vmatpush1.bf16.msra.mxu0 0
      %1430 = vmatprep.subr.bf16.mxu0 0
      %1431 = vmatpush1.bf16.msra.mxu0 0
      %1432 = vmatprep.subr.bf16.mxu0 0
      %1433 = vmatpush1.bf16.msra.mxu0 0
      %1434 = vmatprep.subr.bf16.mxu0 0
      %1435 = vmatpush1.bf16.msra.mxu0 0
      %1436 = vmatprep.subr.bf16.mxu0 0
      %1437 = vmatpush1.bf16.msra.mxu0 0
      %1438 = vmatprep.subr.bf16.mxu0 0
      %1439 = vmatpush1.bf16.msra.mxu0 0
      %1440 = vmatprep.subr.bf16.mxu0 0
      %1441 = vmatpush1.bf16.msra.mxu0 0
      %1442 = vmatprep.subr.bf16.mxu0 0
      %1443 = vmatpush1.bf16.msra.mxu0 0
      %1444 = vmatprep.mubr.bf16.mxu0 0
      %1445 = vmatmul.mubr.bf16.gmra.mrb[0].mxu0 %v1401
      %v1446 = vpop.f32.mrb[0].mxu0
      %v1447 = vadd.f32 0.0, %v1446
      %v1448 = vpop.f32.mrb[0].mxu0
      %v1449 = vpop.f32.mrb[0].mxu0
      %v1450 = vadd.f32 0.0, %v1449
      %v1451 = vpop.f32.mrb[0].mxu0
      %1452 = vmatprep.mubr.bf16.mxu0 0
      %1453 = vmatmul.mubr.bf16.gmra.mrb[0].mxu0 %v1404
      %v1454 = vpop.f32.mrb[0].mxu0
      %v1455 = vadd.f32 0.0, %v1454
      %v1456 = vpop.f32.mrb[0].mxu0
      %v1457 = vpop.f32.mrb[0].mxu0
      %v1458 = vadd.f32 0.0, %v1457
      %v1459 = vpop.f32.mrb[0].mxu0
      %1460 = vmatprep.mubr.bf16.mxu0 0
      %1461 = vmatmul.mubr.bf16.gmra.mrb[0].mxu0 %v1407
      %v1462 = vpop.f32.mrb[0].mxu0
      %v1463 = vadd.f32 0.0, %v1462
      %v1464 = vpop.f32.mrb[0].mxu0
      %v1465 = vpop.f32.mrb[0].mxu0
      %v1466 = vadd.f32 0.0, %v1465
      %v1467 = vpop.f32.mrb[0].mxu0
      %1468 = vmatprep.mubr.bf16.mxu0 0
      %1469 = vmatmul.mubr.bf16.gmra.mrb[0].mxu0 %v1410
      %v1470 = vpop.f32.mrb[0].mxu0
      %v1471 = vadd.f32 0.0, %v1470
      %v1472 = vpop.f32.mrb[0].mxu0
      %v1473 = vpop.f32.mrb[0].mxu0
      %v1474 = vadd.f32 0.0, %v1473
      %v1475 = vpop.f32.mrb[0].mxu0
      %1476 = vdwg.mxu0
      %v1477 = vadd.f32 %v1316, %v1447
      %v1478 = vadd.f32 %v1317, %v1450
      %v1479 = vadd.f32 %v1318, %v1455
      %v1480 = vadd.f32 %v1319, %v1458
      %v1481 = vadd.f32 %v1320, %v1463
      %v1482 = vadd.f32 %v1321, %v1466
      %v1483 = vadd.f32 %v1322, %v1471
      %v1484 = vadd.f32 %v1323, %v1474
      %s1485 = scalar_lea.vmem [#allocation2], 16
      %v1486 = vld [vmem:[%s1485] sm:$0xf]
      %v1487 = vld [vmem:[%s1485 + $0x8] sm:$0xf]
      %v1488 = vld [vmem:[%s1485 + $0x10] sm:$0xf]
      %v1489 = vld [vmem:[%s1485 + $0x18] sm:$0xf]
      %v1490 = vld [vmem:[%s1485 + $0x20] sm:$0xf]
      %v1491 = vld [vmem:[%s1485 + $0x28] sm:$0xf]
      %v1492 = vld [vmem:[%s1485 + $0x30] sm:$0xf]
      %v1493 = vld [vmem:[%s1485 + $0x38] sm:$0xf]
      %v1494 = vld [vmem:[%s3 + $0x30] sm:$0xf]
      %v1495 = vld [vmem:[%s3 + $0x34] sm:$0xf]
      %v1504 = vunpack.c.l.b16 %v1486
      %v1505 = vunpack.c.l.b16 %v1487
      %v1506 = vunpack.c.l.b16 %v1488
      %v1507 = vunpack.c.l.b16 %v1489
      %v1508 = vunpack.c.l.b16 %v1490
      %v1509 = vunpack.c.l.b16 %v1491
      %v1510 = vunpack.c.l.b16 %v1492
      %v1511 = vunpack.c.l.b16 %v1493
      %v1512 = vpack.c.b16 %v1505, %v1504
      %v1513 = vpack.c.b16 %v1507, %v1506
      %v1514 = vpack.c.b16 %v1509, %v1508
      %v1515 = vpack.c.b16 %v1511, %v1510
      %v1518 = vunpack.c.l.b16 %v1494
      %v1519 = vunpack.c.l.b16 %v1495
      %v1520 = vpack.c.b16 %v1519, %v1518
      %v1523 = vsel %vm625, %v1512, 0
      %v1526 = vsel %vm625, %v1513, 0
      %v1529 = vsel %vm625, %v1514, 0
      %v1532 = vsel %vm625, %v1515, 0
      %1534 = vmatprep.subr.bf16.mxu0 0
      %1535 = vmatpush1.bf16.msra.mxu0 %v1520
      %1536 = vmatprep.subr.bf16.mxu0 0
      %1537 = vmatpush1.bf16.msra.mxu0 0
      %1538 = vmatprep.subr.bf16.mxu0 0
      %1539 = vmatpush1.bf16.msra.mxu0 0
      %1540 = vmatprep.subr.bf16.mxu0 0
      %1541 = vmatpush1.bf16.msra.mxu0 0
      %1542 = vmatprep.subr.bf16.mxu0 0
      %1543 = vmatpush1.bf16.msra.mxu0 0
      %1544 = vmatprep.subr.bf16.mxu0 0
      %1545 = vmatpush1.bf16.msra.mxu0 0
      %1546 = vmatprep.subr.bf16.mxu0 0
      %1547 = vmatpush1.bf16.msra.mxu0 0
      %1548 = vmatprep.subr.bf16.mxu0 0
      %1549 = vmatpush1.bf16.msra.mxu0 0
      %1550 = vmatprep.subr.bf16.mxu0 0
      %1551 = vmatpush1.bf16.msra.mxu0 0
      %1552 = vmatprep.subr.bf16.mxu0 0
      %1553 = vmatpush1.bf16.msra.mxu0 0
      %1554 = vmatprep.subr.bf16.mxu0 0
      %1555 = vmatpush1.bf16.msra.mxu0 0
      %1556 = vmatprep.subr.bf16.mxu0 0
      %1557 = vmatpush1.bf16.msra.mxu0 0
      %1558 = vmatprep.subr.bf16.mxu0 0
      %1559 = vmatpush1.bf16.msra.mxu0 0
      %1560 = vmatprep.subr.bf16.mxu0 0
      %1561 = vmatpush1.bf16.msra.mxu0 0
      %1562 = vmatprep.subr.bf16.mxu0 0
      %1563 = vmatpush1.bf16.msra.mxu0 0
      %1564 = vmatprep.subr.bf16.mxu0 0
      %1565 = vmatpush1.bf16.msra.mxu0 0
      %1566 = vmatprep.mubr.bf16.mxu0 0
      %1567 = vmatmul.mubr.bf16.gmra.mrb[0].mxu0 %v1523
      %v1568 = vpop.f32.mrb[0].mxu0
      %v1569 = vadd.f32 0.0, %v1568
      %v1570 = vpop.f32.mrb[0].mxu0
      %v1571 = vpop.f32.mrb[0].mxu0
      %v1572 = vadd.f32 0.0, %v1571
      %v1573 = vpop.f32.mrb[0].mxu0
      %1574 = vmatprep.mubr.bf16.mxu0 0
      %1575 = vmatmul.mubr.bf16.gmra.mrb[0].mxu0 %v1526
      %v1576 = vpop.f32.mrb[0].mxu0
      %v1577 = vadd.f32 0.0, %v1576
      %v1578 = vpop.f32.mrb[0].mxu0
      %v1579 = vpop.f32.mrb[0].mxu0
      %v1580 = vadd.f32 0.0, %v1579
      %v1581 = vpop.f32.mrb[0].mxu0
      %1582 = vmatprep.mubr.bf16.mxu0 0
      %1583 = vmatmul.mubr.bf16.gmra.mrb[0].mxu0 %v1529
      %v1584 = vpop.f32.mrb[0].mxu0
      %v1585 = vadd.f32 0.0, %v1584
      %v1586 = vpop.f32.mrb[0].mxu0
      %v1587 = vpop.f32.mrb[0].mxu0
      %v1588 = vadd.f32 0.0, %v1587
      %v1589 = vpop.f32.mrb[0].mxu0
      %1590 = vmatprep.mubr.bf16.mxu0 0
      %1591 = vmatmul.mubr.bf16.gmra.mrb[0].mxu0 %v1532
      %v1592 = vpop.f32.mrb[0].mxu0
      %v1593 = vadd.f32 0.0, %v1592
      %v1594 = vpop.f32.mrb[0].mxu0
      %v1595 = vpop.f32.mrb[0].mxu0
      %v1596 = vadd.f32 0.0, %v1595
      %v1597 = vpop.f32.mrb[0].mxu0
      %1598 = vdwg.mxu0
      %v1599 = vadd.f32 %v1477, %v1569
      %v1600 = vadd.f32 %v1478, %v1572
      %v1601 = vadd.f32 %v1479, %v1577
      %v1602 = vadd.f32 %v1480, %v1580
      %v1603 = vadd.f32 %v1481, %v1585
      %v1604 = vadd.f32 %v1482, %v1588
      %v1605 = vadd.f32 %v1483, %v1593
      %v1606 = vadd.f32 %v1484, %v1596
      %v1607 = vld [vmem:[%s1485] sm:$0xf]
      %v1608 = vld [vmem:[%s1485 + $0x4] sm:$0x1]
      %v1609 = vld [vmem:[%s1485 + $0x8] sm:$0xf]
      %v1610 = vld [vmem:[%s1485 + $0xc] sm:$0x1]
      %v1611 = vld [vmem:[%s1485 + $0x10] sm:$0xf]
      %v1612 = vld [vmem:[%s1485 + $0x14] sm:$0x1]
      %v1613 = vld [vmem:[%s1485 + $0x18] sm:$0xf]
      %v1614 = vld [vmem:[%s1485 + $0x1c] sm:$0x1]
      %v1615 = vld [vmem:[%s1485 + $0x20] sm:$0xf]
      %v1616 = vld [vmem:[%s1485 + $0x24] sm:$0x1]
      %v1617 = vld [vmem:[%s1485 + $0x28] sm:$0xf]
      %v1618 = vld [vmem:[%s1485 + $0x2c] sm:$0x1]
      %v1619 = vld [vmem:[%s1485 + $0x30] sm:$0xf]
      %v1620 = vld [vmem:[%s1485 + $0x34] sm:$0x1]
      %v1621 = vld [vmem:[%s1485 + $0x38] sm:$0xf]
      %v1622 = vld [vmem:[%s1485 + $0x3c] sm:$0x1]
      %v1624 = vshrl.u32 %v1607, 16
      %v1626 = vrot.slane %v1624, 4
      %v1627 = vshll.u32 %v1607, 16
      %v1629 = vrot.slane %v1627, 5
      %v1630 = vor.u32 %v1626, %v1629
      %v1631 = vrot.slane %v1630, 4
      %v1633 = vshll.u32 %v1608, 16
      %v1635 = vrot.slane %v1633, 5
      %v1636 = vsel %vm492, %v1631, %v1635
      %v1638 = vshrl.u32 %v1609, 16
      %v1640 = vrot.slane %v1638, 4
      %v1641 = vshll.u32 %v1609, 16
      %v1643 = vrot.slane %v1641, 5
      %v1644 = vor.u32 %v1640, %v1643
      %v1645 = vrot.slane %v1644, 4
      %v1647 = vshll.u32 %v1610, 16
      %v1649 = vrot.slane %v1647, 5
      %v1650 = vsel %vm492, %v1645, %v1649
      %v1652 = vshrl.u32 %v1611, 16
      %v1654 = vrot.slane %v1652, 4
      %v1655 = vshll.u32 %v1611, 16
      %v1657 = vrot.slane %v1655, 5
      %v1658 = vor.u32 %v1654, %v1657
      %v1659 = vrot.slane %v1658, 4
      %v1661 = vshll.u32 %v1612, 16
      %v1663 = vrot.slane %v1661, 5
      %v1664 = vsel %vm492, %v1659, %v1663
      %v1666 = vshrl.u32 %v1613, 16
      %v1668 = vrot.slane %v1666, 4
      %v1669 = vshll.u32 %v1613, 16
      %v1671 = vrot.slane %v1669, 5
      %v1672 = vor.u32 %v1668, %v1671
      %v1673 = vrot.slane %v1672, 4
      %v1675 = vshll.u32 %v1614, 16
      %v1677 = vrot.slane %v1675, 5
      %v1678 = vsel %vm492, %v1673, %v1677
      %v1680 = vshrl.u32 %v1615, 16
      %v1682 = vrot.slane %v1680, 4
      %v1683 = vshll.u32 %v1615, 16
      %v1685 = vrot.slane %v1683, 5
      %v1686 = vor.u32 %v1682, %v1685
      %v1687 = vrot.slane %v1686, 4
      %v1689 = vshll.u32 %v1616, 16
      %v1691 = vrot.slane %v1689, 5
      %v1692 = vsel %vm492, %v1687, %v1691
      %v1694 = vshrl.u32 %v1617, 16
      %v1696 = vrot.slane %v1694, 4
      %v1697 = vshll.u32 %v1617, 16
      %v1699 = vrot.slane %v1697, 5
      %v1700 = vor.u32 %v1696, %v1699
      %v1701 = vrot.slane %v1700, 4
      %v1703 = vshll.u32 %v1618, 16
      %v1705 = vrot.slane %v1703, 5
      %v1706 = vsel %vm492, %v1701, %v1705
      %v1708 = vshrl.u32 %v1619, 16
      %v1710 = vrot.slane %v1708, 4
      %v1711 = vshll.u32 %v1619, 16
      %v1713 = vrot.slane %v1711, 5
      %v1714 = vor.u32 %v1710, %v1713
      %v1715 = vrot.slane %v1714, 4
      %v1717 = vshll.u32 %v1620, 16
      %v1719 = vrot.slane %v1717, 5
      %v1720 = vsel %vm492, %v1715, %v1719
      %v1722 = vshrl.u32 %v1621, 16
      %v1724 = vrot.slane %v1722, 4
      %v1725 = vshll.u32 %v1621, 16
      %v1727 = vrot.slane %v1725, 5
      %v1728 = vor.u32 %v1724, %v1727
      %v1729 = vrot.slane %v1728, 4
      %v1731 = vshll.u32 %v1622, 16
      %v1733 = vrot.slane %v1731, 5
      %v1734 = vsel %vm492, %v1729, %v1733
      %v1735 = vld [vmem:[%s3 + $0x38] sm:$0xf]
      %v1736 = vld [vmem:[%s3 + $0x3c] sm:$0xf]
      %v1737 = vunpack.c.l.b16 %v1636
      %v1738 = vunpack.c.l.b16 %v1650
      %v1739 = vunpack.c.l.b16 %v1664
      %v1740 = vunpack.c.l.b16 %v1678
      %v1741 = vunpack.c.l.b16 %v1692
      %v1742 = vunpack.c.l.b16 %v1706
      %v1743 = vunpack.c.l.b16 %v1720
      %v1744 = vunpack.c.l.b16 %v1734
      %v1745 = vpack.c.b16 %v1738, %v1737
      %v1746 = vpack.c.b16 %v1740, %v1739
      %v1747 = vpack.c.b16 %v1742, %v1741
      %v1748 = vpack.c.b16 %v1744, %v1743
      %v1751 = vunpack.c.l.b16 %v1735
      %v1752 = vunpack.c.l.b16 %v1736
      %v1753 = vpack.c.b16 %v1752, %v1751
      %v1756 = vsel %vm625, %v1745, 0
      %v1759 = vsel %vm625, %v1746, 0
      %v1762 = vsel %vm625, %v1747, 0
      %v1765 = vsel %vm625, %v1748, 0
      %1767 = vmatprep.subr.bf16.mxu0 0
      %1768 = vmatpush1.bf16.msra.mxu0 %v1753
      %1769 = vmatprep.subr.bf16.mxu0 0
      %1770 = vmatpush1.bf16.msra.mxu0 0
      %1771 = vmatprep.subr.bf16.mxu0 0
      %1772 = vmatpush1.bf16.msra.mxu0 0
      %1773 = vmatprep.subr.bf16.mxu0 0
      %1774 = vmatpush1.bf16.msra.mxu0 0
      %1775 = vmatprep.subr.bf16.mxu0 0
      %1776 = vmatpush1.bf16.msra.mxu0 0
      %1777 = vmatprep.subr.bf16.mxu0 0
      %1778 = vmatpush1.bf16.msra.mxu0 0
      %1779 = vmatprep.subr.bf16.mxu0 0
      %1780 = vmatpush1.bf16.msra.mxu0 0
      %1781 = vmatprep.subr.bf16.mxu0 0
      %1782 = vmatpush1.bf16.msra.mxu0 0
      %1783 = vmatprep.subr.bf16.mxu0 0
      %1784 = vmatpush1.bf16.msra.mxu0 0
      %1785 = vmatprep.subr.bf16.mxu0 0
      %1786 = vmatpush1.bf16.msra.mxu0 0
      %1787 = vmatprep.subr.bf16.mxu0 0
      %1788 = vmatpush1.bf16.msra.mxu0 0
      %1789 = vmatprep.subr.bf16.mxu0 0
      %1790 = vmatpush1.bf16.msra.mxu0 0
      %1791 = vmatprep.subr.bf16.mxu0 0
      %1792 = vmatpush1.bf16.msra.mxu0 0
      %1793 = vmatprep.subr.bf16.mxu0 0
      %1794 = vmatpush1.bf16.msra.mxu0 0
      %1795 = vmatprep.subr.bf16.mxu0 0
      %1796 = vmatpush1.bf16.msra.mxu0 0
      %1797 = vmatprep.subr.bf16.mxu0 0
      %1798 = vmatpush1.bf16.msra.mxu0 0
      %1799 = vmatprep.mubr.bf16.mxu0 0
      %1800 = vmatmul.mubr.bf16.gmra.mrb[0].mxu0 %v1756
      %v1801 = vpop.f32.mrb[0].mxu0
      %v1802 = vadd.f32 0.0, %v1801
      %v1803 = vpop.f32.mrb[0].mxu0
      %v1804 = vpop.f32.mrb[0].mxu0
      %v1805 = vadd.f32 0.0, %v1804
      %v1806 = vpop.f32.mrb[0].mxu0
      %1807 = vmatprep.mubr.bf16.mxu0 0
      %1808 = vmatmul.mubr.bf16.gmra.mrb[0].mxu0 %v1759
      %v1809 = vpop.f32.mrb[0].mxu0
      %v1810 = vadd.f32 0.0, %v1809
      %v1811 = vpop.f32.mrb[0].mxu0
      %v1812 = vpop.f32.mrb[0].mxu0
      %v1813 = vadd.f32 0.0, %v1812
      %v1814 = vpop.f32.mrb[0].mxu0
      %1815 = vmatprep.mubr.bf16.mxu0 0
      %1816 = vmatmul.mubr.bf16.gmra.mrb[0].mxu0 %v1762
      %v1817 = vpop.f32.mrb[0].mxu0
      %v1818 = vadd.f32 0.0, %v1817
      %v1819 = vpop.f32.mrb[0].mxu0
      %v1820 = vpop.f32.mrb[0].mxu0
      %v1821 = vadd.f32 0.0, %v1820
      %v1822 = vpop.f32.mrb[0].mxu0
      %1823 = vmatprep.mubr.bf16.mxu0 0
      %1824 = vmatmul.mubr.bf16.gmra.mrb[0].mxu0 %v1765
      %v1825 = vpop.f32.mrb[0].mxu0
      %v1826 = vadd.f32 0.0, %v1825
      %v1827 = vpop.f32.mrb[0].mxu0
      %v1828 = vpop.f32.mrb[0].mxu0
      %v1829 = vadd.f32 0.0, %v1828
      %v1830 = vpop.f32.mrb[0].mxu0
      %1831 = vdwg.mxu0
      %v1832 = vadd.f32 %v1599, %v1802
      %v1833 = vadd.f32 %v1600, %v1805
      %v1834 = vadd.f32 %v1601, %v1810
      %v1835 = vadd.f32 %v1602, %v1813
      %v1836 = vadd.f32 %v1603, %v1818
      %v1837 = vadd.f32 %v1604, %v1821
      %v1838 = vadd.f32 %v1605, %v1826
      %v1839 = vadd.f32 %v1606, %v1829
      %v1840 = vld [vmem:[%s1485] sm:$0xe]
      %v1841 = vld [vmem:[%s1485 + $0x8] sm:$0xe]
      %v1842 = vld [vmem:[%s1485 + $0x10] sm:$0xe]
      %v1843 = vld [vmem:[%s1485 + $0x18] sm:$0xe]
      %v1844 = vld [vmem:[%s1485 + $0x20] sm:$0xe]
      %v1845 = vld [vmem:[%s1485 + $0x28] sm:$0xe]
      %v1846 = vld [vmem:[%s1485 + $0x30] sm:$0xe]
      %v1847 = vld [vmem:[%s1485 + $0x38] sm:$0xe]
      %v1864 = vrot.slane %v1840, 5
      %v1865 = vrot.slane %v1864, 4
      %v1866 = vrot.slane %v1608, 5
      %v1867 = vsel %vm832, %v1865, %v1866
      %v1868 = vrot.slane %v1841, 5
      %v1869 = vrot.slane %v1868, 4
      %v1870 = vrot.slane %v1610, 5
      %v1871 = vsel %vm832, %v1869, %v1870
      %v1872 = vrot.slane %v1842, 5
      %v1873 = vrot.slane %v1872, 4
      %v1874 = vrot.slane %v1612, 5
      %v1875 = vsel %vm832, %v1873, %v1874
      %v1876 = vrot.slane %v1843, 5
      %v1877 = vrot.slane %v1876, 4
      %v1878 = vrot.slane %v1614, 5
      %v1879 = vsel %vm832, %v1877, %v1878
      %v1880 = vrot.slane %v1844, 5
      %v1881 = vrot.slane %v1880, 4
      %v1882 = vrot.slane %v1616, 5
      %v1883 = vsel %vm832, %v1881, %v1882
      %v1884 = vrot.slane %v1845, 5
      %v1885 = vrot.slane %v1884, 4
      %v1886 = vrot.slane %v1618, 5
      %v1887 = vsel %vm832, %v1885, %v1886
      %v1888 = vrot.slane %v1846, 5
      %v1889 = vrot.slane %v1888, 4
      %v1890 = vrot.slane %v1620, 5
      %v1891 = vsel %vm832, %v1889, %v1890
      %v1892 = vrot.slane %v1847, 5
      %v1893 = vrot.slane %v1892, 4
      %v1894 = vrot.slane %v1622, 5
      %v1895 = vsel %vm832, %v1893, %v1894
      %v1896 = vld [vmem:[%s3 + $0x40] sm:$0xf]
      %v1897 = vld [vmem:[%s3 + $0x44] sm:$0xf]
      %v1898 = vunpack.c.l.b16 %v1867
      %v1899 = vunpack.c.l.b16 %v1871
      %v1900 = vunpack.c.l.b16 %v1875
      %v1901 = vunpack.c.l.b16 %v1879
      %v1902 = vunpack.c.l.b16 %v1883
      %v1903 = vunpack.c.l.b16 %v1887
      %v1904 = vunpack.c.l.b16 %v1891
      %v1905 = vunpack.c.l.b16 %v1895
      %v1906 = vpack.c.b16 %v1899, %v1898
      %v1907 = vpack.c.b16 %v1901, %v1900
      %v1908 = vpack.c.b16 %v1903, %v1902
      %v1909 = vpack.c.b16 %v1905, %v1904
      %v1912 = vunpack.c.l.b16 %v1896
      %v1913 = vunpack.c.l.b16 %v1897
      %v1914 = vpack.c.b16 %v1913, %v1912
      %v1917 = vsel %vm625, %v1906, 0
      %v1920 = vsel %vm625, %v1907, 0
      %v1923 = vsel %vm625, %v1908, 0
      %v1926 = vsel %vm625, %v1909, 0
      %1928 = vmatprep.subr.bf16.mxu0 0
      %1929 = vmatpush1.bf16.msra.mxu0 %v1914
      %1930 = vmatprep.subr.bf16.mxu0 0
      %1931 = vmatpush1.bf16.msra.mxu0 0
      %1932 = vmatprep.subr.bf16.mxu0 0
      %1933 = vmatpush1.bf16.msra.mxu0 0
      %1934 = vmatprep.subr.bf16.mxu0 0
      %1935 = vmatpush1.bf16.msra.mxu0 0
      %1936 = vmatprep.subr.bf16.mxu0 0
      %1937 = vmatpush1.bf16.msra.mxu0 0
      %1938 = vmatprep.subr.bf16.mxu0 0
      %1939 = vmatpush1.bf16.msra.mxu0 0
      %1940 = vmatprep.subr.bf16.mxu0 0
      %1941 = vmatpush1.bf16.msra.mxu0 0
      %1942 = vmatprep.subr.bf16.mxu0 0
      %1943 = vmatpush1.bf16.msra.mxu0 0
      %1944 = vmatprep.subr.bf16.mxu0 0
      %1945 = vmatpush1.bf16.msra.mxu0 0
      %1946 = vmatprep.subr.bf16.mxu0 0
      %1947 = vmatpush1.bf16.msra.mxu0 0
      %1948 = vmatprep.subr.bf16.mxu0 0
      %1949 = vmatpush1.bf16.msra.mxu0 0
      %1950 = vmatprep.subr.bf16.mxu0 0
      %1951 = vmatpush1.bf16.msra.mxu0 0
      %1952 = vmatprep.subr.bf16.mxu0 0
      %1953 = vmatpush1.bf16.msra.mxu0 0
      %1954 = vmatprep.subr.bf16.mxu0 0
      %1955 = vmatpush1.bf16.msra.mxu0 0
      %1956 = vmatprep.subr.bf16.mxu0 0
      %1957 = vmatpush1.bf16.msra.mxu0 0
      %1958 = vmatprep.subr.bf16.mxu0 0
      %1959 = vmatpush1.bf16.msra.mxu0 0
      %1960 = vmatprep.mubr.bf16.mxu0 0
      %1961 = vmatmul.mubr.bf16.gmra.mrb[0].mxu0 %v1917
      %v1962 = vpop.f32.mrb[0].mxu0
      %v1963 = vadd.f32 0.0, %v1962
      %v1964 = vpop.f32.mrb[0].mxu0
      %v1965 = vpop.f32.mrb[0].mxu0
      %v1966 = vadd.f32 0.0, %v1965
      %v1967 = vpop.f32.mrb[0].mxu0
      %1968 = vmatprep.mubr.bf16.mxu0 0
      %1969 = vmatmul.mubr.bf16.gmra.mrb[0].mxu0 %v1920
      %v1970 = vpop.f32.mrb[0].mxu0
      %v1971 = vadd.f32 0.0, %v1970
      %v1972 = vpop.f32.mrb[0].mxu0
      %v1973 = vpop.f32.mrb[0].mxu0
      %v1974 = vadd.f32 0.0, %v1973
      %v1975 = vpop.f32.mrb[0].mxu0
      %1976 = vmatprep.mubr.bf16.mxu0 0
      %1977 = vmatmul.mubr.bf16.gmra.mrb[0].mxu0 %v1923
      %v1978 = vpop.f32.mrb[0].mxu0
      %v1979 = vadd.f32 0.0, %v1978
      %v1980 = vpop.f32.mrb[0].mxu0
      %v1981 = vpop.f32.mrb[0].mxu0
      %v1982 = vadd.f32 0.0, %v1981
      %v1983 = vpop.f32.mrb[0].mxu0
      %1984 = vmatprep.mubr.bf16.mxu0 0
      %1985 = vmatmul.mubr.bf16.gmra.mrb[0].mxu0 %v1926
      %v1986 = vpop.f32.mrb[0].mxu0
      %v1987 = vadd.f32 0.0, %v1986
      %v1988 = vpop.f32.mrb[0].mxu0
      %v1989 = vpop.f32.mrb[0].mxu0
      %v1990 = vadd.f32 0.0, %v1989
      %v1991 = vpop.f32.mrb[0].mxu0
      %1992 = vdwg.mxu0
      %v1993 = vadd.f32 %v1832, %v1963
      %v1994 = vadd.f32 %v1833, %v1966
      %v1995 = vadd.f32 %v1834, %v1971
      %v1996 = vadd.f32 %v1835, %v1974
      %v1997 = vadd.f32 %v1836, %v1979
      %v1998 = vadd.f32 %v1837, %v1982
      %v1999 = vadd.f32 %v1838, %v1987
      %v2000 = vadd.f32 %v1839, %v1990
      %2001 = vst.msk [vmem:[%s231] sm:$0xff] %vm625, %v1993
      %2002 = vst.msk [vmem:[%s231 + $0x8] sm:$0xff] %vm625, %v1994
      %2003 = vst.msk [vmem:[%s231 + $0x10] sm:$0xff] %vm625, %v1995
      %2004 = vst.msk [vmem:[%s231 + $0x18] sm:$0xff] %vm625, %v1996
      %2005 = vst.msk [vmem:[%s231 + $0x20] sm:$0xff] %vm625, %v1997
      %2006 = vst.msk [vmem:[%s231 + $0x28] sm:$0xff] %vm625, %v1998
      %2007 = vst.msk [vmem:[%s231 + $0x30] sm:$0xff] %vm625, %v1999
      %2008 = vst.msk [vmem:[%s231 + $0x38] sm:$0xff] %vm625, %v2000
      %v2009 = vsel %vm625, %v1993, 0.0
      %v2010 = vsel %vm625, %v1994, 0.0
      %v2011 = vadd.f32 %v2009, %v2010
      %v2012 = vsel %vm625, %v1995, 0.0
      %v2013 = vadd.f32 %v2011, %v2012
      %v2014 = vsel %vm625, %v1996, 0.0
      %v2015 = vadd.f32 %v2013, %v2014
      %v2016 = vsel %vm625, %v1997, 0.0
      %v2017 = vadd.f32 %v2015, %v2016
      %v2018 = vsel %vm625, %v1998, 0.0
      %v2019 = vadd.f32 %v2017, %v2018
      %v2020 = vsel %vm625, %v1999, 0.0
      %v2021 = vadd.f32 %v2019, %v2020
      %v2022 = vsel %vm625, %v2000, 0.0
      %v2023 = vadd.f32 %v2021, %v2022
      %v2024 = vrot.slane %v2023, 4
      %v2025 = vadd.f32 %v2023, %v2024
      %v2026 = vrot.slane %v2025, 2
      %v2027 = vadd.f32 %v2025, %v2026
      %v2028 = vrot.slane %v2027, 1
      %v2029 = vadd.f32 %v2027, %v2028
      %2030 = vst.msk [vmem:[%s235] sm:$0x1] %vm285, %v2029
      %v2031 = vmul.f32 %v1993, %v1993
      %v2032 = vmul.f32 %v1994, %v1994
      %v2033 = vmul.f32 %v1995, %v1995
      %v2034 = vmul.f32 %v1996, %v1996
      %v2035 = vmul.f32 %v1997, %v1997
      %v2036 = vmul.f32 %v1998, %v1998
      %v2037 = vmul.f32 %v1999, %v1999
      %v2038 = vmul.f32 %v2000, %v2000
      %v2039 = vsel %vm625, %v2031, 0.0
      %v2040 = vsel %vm625, %v2032, 0.0
      %v2041 = vadd.f32 %v2039, %v2040
      %v2042 = vsel %vm625, %v2033, 0.0
      %v2043 = vadd.f32 %v2041, %v2042
      %v2044 = vsel %vm625, %v2034, 0.0
      %v2045 = vadd.f32 %v2043, %v2044
      %v2046 = vsel %vm625, %v2035, 0.0
      %v2047 = vadd.f32 %v2045, %v2046
      %v2048 = vsel %vm625, %v2036, 0.0
      %v2049 = vadd.f32 %v2047, %v2048
      %v2050 = vsel %vm625, %v2037, 0.0
      %v2051 = vadd.f32 %v2049, %v2050
      %v2052 = vsel %vm625, %v2038, 0.0
      %v2053 = vadd.f32 %v2051, %v2052
      %v2054 = vrot.slane %v2053, 4
      %v2055 = vadd.f32 %v2053, %v2054
      %v2056 = vrot.slane %v2055, 2
      %v2057 = vadd.f32 %v2055, %v2056
      %v2058 = vrot.slane %v2057, 1
      %v2059 = vadd.f32 %v2057, %v2058
      %2060 = vst.msk [vmem:[%s235 + $0x1] sm:$0x1] %vm285, %v2059
      %p2061 = scmp.lt.s32.totalorder %s17, 1
      %s2062 = scalar_select %p2061, %s17, 1
      %s2063 = smul.addr %s2062, 8
      %s2064 = smul.addr %s2063, 8
      %s2065 = scalar_lea.vmem %s4, %s2064
      %p2066 = scmp.lt.s32.totalorder %s17, 1
      %s2067 = scalar_select %p2066, %s17, 1
      %s2068 = smul.addr %s2067, 2
      %s2069 = scalar_lea.vmem %s5, %s2068
      // Predicated region
      $region37: #{frru_forward.4} parent=35 // pred_check
        %p2070 = pneg %p124
      $region38: #{frru_forward.4} parent=35 // pred_check_branch
        %2072 = sbr.rel (%p2070) target = $region40
      $region39: #{frru_forward.4} parent=35 // pred_region
        _
      $region40: #{frru_forward.4} parent=35 // pred_fallthru
        _
      // Predicated region
      $region41: #{frru_forward.4} parent=35 // pred_check
        %p2073 = pneg %p150
      $region42: #{frru_forward.4} parent=35 // pred_check_branch
        %2075 = sbr.rel (%p2073) target = $region44
      $region43: #{frru_forward.4} parent=35 // pred_region
        _
      $region44: #{frru_forward.4} parent=35 // pred_fallthru
        _
    $region36: #{frru_forward.4} parent=5 // pred_fallthru
      _
    %p2076 = scmp.le.s32.totalorder 2, %s12
    // Predicated region
    $region45: #{frru_forward.4} parent=5 // pred_check
      %p2077 = pneg %p2076
    $region46: #{frru_forward.4} parent=5 // pred_check_branch
      %2079 = sbr.rel (%p2077) target = $region48
    $region47: #{frru_forward.4} parent=5 // pred_region
      %s2080 = ssub.s32 %s12, 2
      // Predicated region
      $region49: #{frru_forward.4} parent=47 // pred_check
        %p2081 = pneg %p130
      $region50: #{frru_forward.4} parent=47 // pred_check_branch
        %2083 = sbr.rel (%p2081) target = $region52
      $region51: #{frru_forward.4} parent=47 // pred_region
        %p2084 = scmp.lt.s32.totalorder %s18, 1
        %s2085 = scalar_select %p2084, %s18, 1
        %s2086 = smul.addr %s2085, 8
        %s2087 = smul.addr %s2086, 8
        %s2088 = scalar_lea.vmem %s4, %s2087
      $region52: #{frru_forward.4} parent=47 // pred_fallthru
        _
      // Predicated region
      $region53: #{frru_forward.4} parent=47 // pred_check
        %p2089 = pneg %p156
      $region54: #{frru_forward.4} parent=47 // pred_check_branch
        %2091 = sbr.rel (%p2089) target = $region56
      $region55: #{frru_forward.4} parent=47 // pred_region
        %p2092 = scmp.lt.s32.totalorder %s18, 1
        %s2093 = scalar_select %p2092, %s18, 1
        %s2094 = smul.addr %s2093, 2
        %s2095 = scalar_lea.vmem %s5, %s2094
      $region56: #{frru_forward.4} parent=47 // pred_fallthru
        _
    $region48: #{frru_forward.4} parent=5 // pred_fallthru
      _
  $region6: #{frru_forward.4} parent=0 // loop_footer
    %s16 = sadd.s32 1, %s12
  $region7: #{frru_forward.4} parent=0 // loop_footer_branch
    %11 = sbr.rel target = $region3
  $region8: #{frru_forward.4} parent=0 // loop_exit
    _

// kernel: frru_forward.3
$region0: #{frru_forward.3}
  #allocation0 [shape = 'u32[]', space=smem, size = 0x4, offset = 0x4, fixed_abs, tag = 'smem constant byte address 0x4 - core index']
  #allocation1 [shape = 'u32[144,128]{1,0:T(1,128)}', space=vmem, size = 0x12000, scoped, tag = 'internal scratch']
  #allocation2 [shape = 'bf16[10,10,36]{2,1,0:T(8,128)(2,1)}', space=vmem, size = 0xa000, scoped, tag = 'scratch operand']
  %s0 = inlined_call_operand.vmem [shape: f32[2,8,8,4], index: 0, kind: input, shape index: {}]
  %s1 = inlined_call_operand.vmem [shape: f32[2,8,8,32], index: 1, kind: input, shape index: {}]
  %s2 = inlined_call_operand.vmem [shape: bf16[324,16], index: 2, kind: input, shape index: {}]
  %s3 = inlined_call_operand.vmem [shape: f32[2,8,8,16], index: 3, kind: output, shape index: {0}]
  %s4 = inlined_call_operand.vmem [shape: f32[2,2,16], index: 4, kind: output, shape index: {1}]
  %5 = xla_tuple %s3, %s4
  %s6 = sld [smem:[#allocation0]]
  $region53: #{frru_forward.3} parent=0
    _
  %s8 = ssub.s32 1, %s6
  %s9 = scalar_select 0, %s8, %s6
  loop: start=0, step=1, limit=4
  $region2: #{frru_forward.3} parent=0 // loop_pre_header
    _
  $region3: #{frru_forward.3} parent=0 // loop_header
    %s11 = sphi 0, %s15
    %p12 = scmp.ge.s32.totalorder %s11, 4
    %s21 = sphi 0, %s23
    %s24 = sphi 0, %s21
    %s25 = sphi 0, %s24
    %s41 = sphi 0, %s25
    %s47 = sphi 0, %s49
    %s50 = sphi 0, %s47
    %s51 = sphi 0, %s50
    %s67 = sphi 0, %s51
    %s71 = sphi 0, %s71
    %s73 = sphi 0, %s71
    %s74 = sphi 0, %s73
    %s88 = sphi 0, %s74
    %s94 = sphi 0, %s96
    %s97 = sphi 0, %s94
    %s98 = sphi 0, %s97
    %s114 = sphi 0, %s98
    %s120 = sphi 0, %s122
    %s123 = sphi 0, %s120
    %s124 = sphi 0, %s123
    %s140 = sphi 0, %s124
  $region4: #{frru_forward.3} parent=0 // loop_header_branch
    %14 = sbr.rel (%p12) target = $region8
  $region5: #{frru_forward.3} parent=0 // loop_body
    %s16 = ssub.s32 %s11, 1
    %s17 = ssub.s32 %s11, 2
    %s18 = sadd.s32 %s11, 1
    %s19 = ssub.s32 %s11, %s18
    %p20 = scmp.eq.s32.totalorder %s19, 0
    %s22 = sadd.s32 %s21, 1
    %s23 = scalar_select %p20, %s21, %s22
    %p26 = pneg %p20
    %p27 = scmp.eq.s32.totalorder %s11, 1
    %p28 = por %p26, %p27
    %p29 = scmp.ne.s32.totalorder %s21, %s24
    %p30 = scmp.eq.s32.totalorder %s11, 0
    %p31 = por %p29, %p30
    %p32 = scmp.ne.s32.totalorder %s21, %s24
    %p33 = scmp.eq.s32.totalorder %s16, 1
    %p34 = por %p32, %p33
    %p35 = scmp.ne.s32.totalorder %s24, %s25
    %p36 = scmp.eq.s32.totalorder %s16, 0
    %p37 = por %p35, %p36
    %p38 = scmp.ne.s32.totalorder %s24, %s25
    %p39 = scmp.eq.s32.totalorder %s17, 1
    %p40 = por %p38, %p39
    %p42 = scmp.ne.s32.totalorder %s25, %s41
    %p43 = scmp.eq.s32.totalorder %s17, 0
    %p44 = por %p42, %p43
    %s45 = ssub.s32 %s11, %s18
    %p46 = scmp.eq.s32.totalorder %s45, 0
    %s48 = sadd.s32 %s47, 1
    %s49 = scalar_select %p46, %s47, %s48
    %p52 = pneg %p46
    %p53 = scmp.eq.s32.totalorder %s11, 1
    %p54 = por %p52, %p53
    %p55 = scmp.ne.s32.totalorder %s47, %s50
    %p56 = scmp.eq.s32.totalorder %s11, 0
    %p57 = por %p55, %p56
    %p58 = scmp.ne.s32.totalorder %s47, %s50
    %p59 = scmp.eq.s32.totalorder %s16, 1
    %p60 = por %p58, %p59
    %p61 = scmp.ne.s32.totalorder %s50, %s51
    %p62 = scmp.eq.s32.totalorder %s16, 0
    %p63 = por %p61, %p62
    %p64 = scmp.ne.s32.totalorder %s50, %s51
    %p65 = scmp.eq.s32.totalorder %s17, 1
    %p66 = por %p64, %p65
    %p68 = scmp.ne.s32.totalorder %s51, %s67
    %p69 = scmp.eq.s32.totalorder %s17, 0
    %p70 = por %p68, %p69
    %s72 = sadd.s32 %s71, 1
    %p75 = scmp.eq.s32.totalorder %s11, 1
    %p76 = scmp.ne.s32.totalorder %s71, %s73
    %p77 = scmp.eq.s32.totalorder %s11, 0
    %p78 = por %p76, %p77
    %p79 = scmp.ne.s32.totalorder %s71, %s73
    %p80 = scmp.eq.s32.totalorder %s16, 1
    %p81 = por %p79, %p80
    %p82 = scmp.ne.s32.totalorder %s73, %s74
    %p83 = scmp.eq.s32.totalorder %s16, 0
    %p84 = por %p82, %p83
    %p85 = scmp.ne.s32.totalorder %s73, %s74
    %p86 = scmp.eq.s32.totalorder %s17, 1
    %p87 = por %p85, %p86
    %p89 = scmp.ne.s32.totalorder %s74, %s88
    %p90 = scmp.eq.s32.totalorder %s17, 0
    %p91 = por %p89, %p90
    %s92 = ssub.s32 %s11, %s18
    %p93 = scmp.eq.s32.totalorder %s92, 0
    %s95 = sadd.s32 %s94, 1
    %s96 = scalar_select %p93, %s94, %s95
    %p99 = pneg %p93
    %p100 = scmp.eq.s32.totalorder %s11, 1
    %p101 = por %p99, %p100
    %p102 = scmp.ne.s32.totalorder %s94, %s97
    %p103 = scmp.eq.s32.totalorder %s11, 0
    %p104 = por %p102, %p103
    %p105 = scmp.ne.s32.totalorder %s94, %s97
    %p106 = scmp.eq.s32.totalorder %s16, 1
    %p107 = por %p105, %p106
    %p108 = scmp.ne.s32.totalorder %s97, %s98
    %p109 = scmp.eq.s32.totalorder %s16, 0
    %p110 = por %p108, %p109
    %p111 = scmp.ne.s32.totalorder %s97, %s98
    %p112 = scmp.eq.s32.totalorder %s17, 1
    %p113 = por %p111, %p112
    %p115 = scmp.ne.s32.totalorder %s98, %s114
    %p116 = scmp.eq.s32.totalorder %s17, 0
    %p117 = por %p115, %p116
    %s118 = ssub.s32 %s11, %s18
    %p119 = scmp.eq.s32.totalorder %s118, 0
    %s121 = sadd.s32 %s120, 1
    %s122 = scalar_select %p119, %s120, %s121
    %p125 = pneg %p119
    %p126 = scmp.eq.s32.totalorder %s11, 1
    %p127 = por %p125, %p126
    %p128 = scmp.ne.s32.totalorder %s120, %s123
    %p129 = scmp.eq.s32.totalorder %s11, 0
    %p130 = por %p128, %p129
    %p131 = scmp.ne.s32.totalorder %s120, %s123
    %p132 = scmp.eq.s32.totalorder %s16, 1
    %p133 = por %p131, %p132
    %p134 = scmp.ne.s32.totalorder %s123, %s124
    %p135 = scmp.eq.s32.totalorder %s16, 0
    %p136 = por %p134, %p135
    %p137 = scmp.ne.s32.totalorder %s123, %s124
    %p138 = scmp.eq.s32.totalorder %s17, 1
    %p139 = por %p137, %p138
    %p141 = scmp.ne.s32.totalorder %s124, %s140
    %p142 = scmp.eq.s32.totalorder %s17, 0
    %p143 = por %p141, %p142
    %p144 = scmp.le.s32.totalorder 1, %s11
    %p145 = scmp.lt.s32.totalorder %s11, 3
    %p146 = pnand %p144, %p145
    %p147 = pneg %p146
    // Predicated region
    $region9: #{frru_forward.3} parent=5 // pred_check
      _
    $region10: #{frru_forward.3} parent=5 // pred_check_branch
      %149 = sbr.rel (%p146) target = $region12
    $region11: #{frru_forward.3} parent=5 // pred_region
      %s150 = ssub.s32 %s11, 1
      // Predicated region
      $region13: #{frru_forward.3} parent=11 // pred_check
        %p151 = pneg %p84
      $region14: #{frru_forward.3} parent=11 // pred_check_branch
        %153 = sbr.rel (%p151) target = $region16
      $region15: #{frru_forward.3} parent=11 // pred_region
        _
      $region16: #{frru_forward.3} parent=11 // pred_fallthru
        _
    $region12: #{frru_forward.3} parent=5 // pred_fallthru
      _
    %p154 = scmp.lt.s32.totalorder %s11, 2
    // Predicated region
    $region17: #{frru_forward.3} parent=5 // pred_check
      %p155 = pneg %p154
    $region18: #{frru_forward.3} parent=5 // pred_check_branch
      %157 = sbr.rel (%p155) target = $region20
    $region19: #{frru_forward.3} parent=5 // pred_region
      // Predicated region
      $region21: #{frru_forward.3} parent=19 // pred_check
        %p158 = pneg %p31
      $region22: #{frru_forward.3} parent=19 // pred_check_branch
        %160 = sbr.rel (%p158) target = $region24
      $region23: #{frru_forward.3} parent=19 // pred_region
        %p161 = scmp.lt.s32.totalorder %s11, 1
        %s162 = scalar_select %p161, %s11, 1
        %s163 = smul.addr %s162, 8
        %s164 = smul.addr %s163, 8
        %s165 = scalar_lea.vmem %s0, %s164
      $region24: #{frru_forward.3} parent=19 // pred_fallthru
        _
      // Predicated region
      $region25: #{frru_forward.3} parent=19 // pred_check
        %p166 = pneg %p57
      $region26: #{frru_forward.3} parent=19 // pred_check_branch
        %168 = sbr.rel (%p166) target = $region28
      $region27: #{frru_forward.3} parent=19 // pred_region
        %p169 = scmp.lt.s32.totalorder %s11, 1
        %s170 = scalar_select %p169, %s11, 1
        %s171 = smul.addr %s170, 8
        %s172 = smul.addr %s171, 8
        %s173 = scalar_lea.vmem %s1, %s172
      $region28: #{frru_forward.3} parent=19 // pred_fallthru
        _
    $region20: #{frru_forward.3} parent=5 // pred_fallthru
      _
    %p174 = scmp.le.s32.totalorder 1, %s11
    %p175 = scmp.lt.s32.totalorder %s11, 3
    %p176 = pnand %p174, %p175
    %p177 = pneg %p176
    // Predicated region
    $region29: #{frru_forward.3} parent=5 // pred_check
      _
    $region30: #{frru_forward.3} parent=5 // pred_check_branch
      %179 = sbr.rel (%p176) target = $region32
    $region31: #{frru_forward.3} parent=5 // pred_region
      %s180 = ssub.s32 %s11, 1
      %p181 = scmp.lt.s32.totalorder %s16, 1
      %s182 = scalar_select %p181, %s16, 1
      %s183 = smul.addr %s182, 8
      %s184 = smul.addr %s183, 8
      %s185 = scalar_lea.vmem %s0, %s184
      %p186 = pneg %p37
      %p187 = pneg %p34
      %p188 = scmp.lt.s32.totalorder %s16, 1
      %s189 = scalar_select %p188, %s16, 1
      %s190 = smul.addr %s189, 8
      %s191 = smul.addr %s190, 8
      %s192 = scalar_lea.vmem %s1, %s191
      %p193 = pneg %p63
      %p194 = pneg %p60
      %p195 = pneg %p84
      %p196 = pneg %p81
      %p197 = pneg %p110
      %p198 = pneg %p107
      %p199 = scmp.lt.s32.totalorder %s16, 1
      %s200 = scalar_select %p199, %s16, 1
      %s201 = smul.addr %s200, 8
      %s202 = smul.addr %s201, 8
      %s203 = scalar_lea.vmem %s3, %s202
      %p204 = pneg %p136
      %p205 = pneg %p133
      %p206 = scmp.lt.s32.totalorder %s16, 1
      %s207 = scalar_select %p206, %s16, 1
      %s208 = smul.addr %s207, 2
      %s209 = scalar_lea.vmem %s4, %s208
      %p210 = scmp.lt.s32.totalorder %s16, 1
      %s211 = scalar_select %p210, %s16, 1
      %s212 = smul.addr %s211, 8
      %s213 = smul.addr %s212, 8
      %s214 = scalar_lea.vmem %s0, %s213
      %p215 = scmp.lt.s32.totalorder %s16, 1
      %s216 = scalar_select %p215, %s16, 1
      %s217 = smul.addr %s216, 8
      %s218 = smul.addr %s217, 8
      %s219 = scalar_lea.vmem %s1, %s218
      %p220 = scmp.lt.s32.totalorder %s16, 1
      %s221 = scalar_select %p220, %s16, 1
      %s222 = smul.addr %s221, 8
      %s223 = smul.addr %s222, 8
      %s224 = scalar_lea.vmem %s3, %s223
      %p225 = scmp.lt.s32.totalorder %s16, 1
      %s226 = scalar_select %p225, %s16, 1
      %s227 = smul.addr %s226, 2
      %s228 = scalar_lea.vmem %s4, %s227
      %vm230 = vcmask 289792
      %231 = vst.msk [vmem:[#allocation2] sm:$0xf] %vm230, 0
      %vm232 = vcmask 286720
      %233 = vst.msk [vmem:[#allocation2 + $0x4] sm:$0x1] %vm232, 0
      %234 = vst.msk [vmem:[#allocation2 + $0x8] sm:$0xf] %vm230, 0
      %235 = vst.msk [vmem:[#allocation2 + $0xc] sm:$0x1] %vm232, 0
      %236 = vst.msk [vmem:[#allocation2 + $0x10] sm:$0xf] %vm230, 0
      %237 = vst.msk [vmem:[#allocation2 + $0x14] sm:$0x1] %vm232, 0
      %238 = vst.msk [vmem:[#allocation2 + $0x18] sm:$0xf] %vm230, 0
      %239 = vst.msk [vmem:[#allocation2 + $0x1c] sm:$0x1] %vm232, 0
      %240 = vst.msk [vmem:[#allocation2 + $0x20] sm:$0xf] %vm230, 0
      %241 = vst.msk [vmem:[#allocation2 + $0x24] sm:$0x1] %vm232, 0
      %242 = vst.msk [vmem:[#allocation2 + $0x28] sm:$0xf] %vm230, 0
      %243 = vst.msk [vmem:[#allocation2 + $0x2c] sm:$0x1] %vm232, 0
      %244 = vst.msk [vmem:[#allocation2 + $0x30] sm:$0xf] %vm230, 0
      %245 = vst.msk [vmem:[#allocation2 + $0x34] sm:$0x1] %vm232, 0
      %246 = vst.msk [vmem:[#allocation2 + $0x38] sm:$0xf] %vm230, 0
      %247 = vst.msk [vmem:[#allocation2 + $0x3c] sm:$0x1] %vm232, 0
      %248 = vst.msk [vmem:[#allocation2 + $0x40] sm:$0xf] %vm230, 0
      %249 = vst.msk [vmem:[#allocation2 + $0x44] sm:$0x1] %vm232, 0
      %250 = vst.msk [vmem:[#allocation2 + $0x48] sm:$0xf] %vm230, 0
      %251 = vst.msk [vmem:[#allocation2 + $0x4c] sm:$0x1] %vm232, 0
      %v252 = vld [vmem:[%s214] sm:$0xff]
      %v253 = vld [vmem:[%s214 + $0x8] sm:$0xff]
      %v254 = vld [vmem:[%s214 + $0x10] sm:$0xff]
      %v255 = vld [vmem:[%s214 + $0x18] sm:$0xff]
      %v256 = vld [vmem:[%s214 + $0x20] sm:$0xff]
      %v257 = vld [vmem:[%s214 + $0x28] sm:$0xff]
      %v258 = vld [vmem:[%s214 + $0x30] sm:$0xff]
      %v259 = vld [vmem:[%s214 + $0x38] sm:$0xff]
      %v260 = vpack.c.bf16 %v252, %v252
      %v261 = vpack.c.bf16 %v253, %v253
      %v262 = vpack.c.bf16 %v254, %v254
      %v263 = vpack.c.bf16 %v255, %v255
      %v264 = vpack.c.bf16 %v256, %v256
      %v265 = vpack.c.bf16 %v257, %v257
      %v266 = vpack.c.bf16 %v258, %v258
      %v267 = vpack.c.bf16 %v259, %v259
      %v276 = vunpack.c.l.b16 %v260
      %v277 = vunpack.c.l.b16 %v261
      %v278 = vunpack.c.l.b16 %v262
      %v279 = vunpack.c.l.b16 %v263
      %v280 = vunpack.c.l.b16 %v264
      %v281 = vunpack.c.l.b16 %v265
      %v282 = vunpack.c.l.b16 %v266
      %v283 = vunpack.c.l.b16 %v267
      %v284 = vpack.c.b16 %v276, %v276
      %v285 = vpack.c.b16 %v277, %v277
      %v286 = vpack.c.b16 %v278, %v278
      %v287 = vpack.c.b16 %v279, %v279
      %v288 = vpack.c.b16 %v280, %v280
      %v289 = vpack.c.b16 %v281, %v281
      %v290 = vpack.c.b16 %v282, %v282
      %v291 = vpack.c.b16 %v283, %v283
      %v293 = vshrl.u32 %v284, 16
      %v295 = vrot.slane %v293, 7
      %v296 = vshll.u32 %v284, 16
      %v298 = vor.u32 %v295, %v296
      %v299 = vrot.slane %v295, 4
      %v301 = vshrl.u32 %v285, 16
      %v303 = vrot.slane %v301, 7
      %v304 = vshll.u32 %v285, 16
      %v306 = vor.u32 %v303, %v304
      %v307 = vrot.slane %v303, 4
      %v309 = vshrl.u32 %v286, 16
      %v311 = vrot.slane %v309, 7
      %v312 = vshll.u32 %v286, 16
      %v314 = vor.u32 %v311, %v312
      %v315 = vrot.slane %v311, 4
      %v317 = vshrl.u32 %v287, 16
      %v319 = vrot.slane %v317, 7
      %v320 = vshll.u32 %v287, 16
      %v322 = vor.u32 %v319, %v320
      %v323 = vrot.slane %v319, 4
      %v325 = vshrl.u32 %v288, 16
      %v327 = vrot.slane %v325, 7
      %v328 = vshll.u32 %v288, 16
      %v330 = vor.u32 %v327, %v328
      %v331 = vrot.slane %v327, 4
      %v333 = vshrl.u32 %v289, 16
      %v335 = vrot.slane %v333, 7
      %v336 = vshll.u32 %v289, 16
      %v338 = vor.u32 %v335, %v336
      %v339 = vrot.slane %v335, 4
      %v341 = vshrl.u32 %v290, 16
      %v343 = vrot.slane %v341, 7
      %v344 = vshll.u32 %v290, 16
      %v346 = vor.u32 %v343, %v344
      %v347 = vrot.slane %v343, 4
      %v349 = vshrl.u32 %v291, 16
      %v351 = vrot.slane %v349, 7
      %v352 = vshll.u32 %v291, 16
      %v354 = vor.u32 %v351, %v352
      %v355 = vrot.slane %v351, 4
      %s372 = scalar_lea.vmem [#allocation2], 8
      %vm373 = vcmask 27648
      %vm374 = vsmask.f32 7938
      %vm375 = vmand %vm373, %vm374
      %v376 = vld [vmem:[%s372] sm:$0xf]
      %v377 = vsel %vm375, %v298, %v376
      %378 = vst [vmem:[%s372] sm:$0xf] %v377
      %vm379 = vcmask 24576
      %vm380 = vsmask.f32 256
      %vm381 = vmand %vm379, %vm380
      %v382 = vld [vmem:[%s372 + $0x4] sm:$0x1]
      %v383 = vsel %vm381, %v299, %v382
      %384 = vst [vmem:[%s372 + $0x4] sm:$0x1] %v383
      %v385 = vld [vmem:[%s372 + $0x8] sm:$0xf]
      %v386 = vsel %vm375, %v306, %v385
      %387 = vst [vmem:[%s372 + $0x8] sm:$0xf] %v386
      %v388 = vld [vmem:[%s372 + $0xc] sm:$0x1]
      %v389 = vsel %vm381, %v307, %v388
      %390 = vst [vmem:[%s372 + $0xc] sm:$0x1] %v389
      %v391 = vld [vmem:[%s372 + $0x10] sm:$0xf]
      %v392 = vsel %vm375, %v314, %v391
      %393 = vst [vmem:[%s372 + $0x10] sm:$0xf] %v392
      %v394 = vld [vmem:[%s372 + $0x14] sm:$0x1]
      %v395 = vsel %vm381, %v315, %v394
      %396 = vst [vmem:[%s372 + $0x14] sm:$0x1] %v395
      %v397 = vld [vmem:[%s372 + $0x18] sm:$0xf]
      %v398 = vsel %vm375, %v322, %v397
      %399 = vst [vmem:[%s372 + $0x18] sm:$0xf] %v398
      %v400 = vld [vmem:[%s372 + $0x1c] sm:$0x1]
      %v401 = vsel %vm381, %v323, %v400
      %402 = vst [vmem:[%s372 + $0x1c] sm:$0x1] %v401
      %v403 = vld [vmem:[%s372 + $0x20] sm:$0xf]
      %v404 = vsel %vm375, %v330, %v403
      %405 = vst [vmem:[%s372 + $0x20] sm:$0xf] %v404
      %v406 = vld [vmem:[%s372 + $0x24] sm:$0x1]
      %v407 = vsel %vm381, %v331, %v406
      %408 = vst [vmem:[%s372 + $0x24] sm:$0x1] %v407
      %v409 = vld [vmem:[%s372 + $0x28] sm:$0xf]
      %v410 = vsel %vm375, %v338, %v409
      %411 = vst [vmem:[%s372 + $0x28] sm:$0xf] %v410
      %v412 = vld [vmem:[%s372 + $0x2c] sm:$0x1]
      %v413 = vsel %vm381, %v339, %v412
      %414 = vst [vmem:[%s372 + $0x2c] sm:$0x1] %v413
      %v415 = vld [vmem:[%s372 + $0x30] sm:$0xf]
      %v416 = vsel %vm375, %v346, %v415
      %417 = vst [vmem:[%s372 + $0x30] sm:$0xf] %v416
      %v418 = vld [vmem:[%s372 + $0x34] sm:$0x1]
      %v419 = vsel %vm381, %v347, %v418
      %420 = vst [vmem:[%s372 + $0x34] sm:$0x1] %v419
      %v421 = vld [vmem:[%s372 + $0x38] sm:$0xf]
      %v422 = vsel %vm375, %v354, %v421
      %423 = vst [vmem:[%s372 + $0x38] sm:$0xf] %v422
      %v424 = vld [vmem:[%s372 + $0x3c] sm:$0x1]
      %v425 = vsel %vm381, %v355, %v424
      %426 = vst [vmem:[%s372 + $0x3c] sm:$0x1] %v425
      %v427 = vld [vmem:[%s219] sm:$0xff]
      %v428 = vld [vmem:[%s219 + $0x8] sm:$0xff]
      %v429 = vld [vmem:[%s219 + $0x10] sm:$0xff]
      %v430 = vld [vmem:[%s219 + $0x18] sm:$0xff]
      %v431 = vld [vmem:[%s219 + $0x20] sm:$0xff]
      %v432 = vld [vmem:[%s219 + $0x28] sm:$0xff]
      %v433 = vld [vmem:[%s219 + $0x30] sm:$0xff]
      %v434 = vld [vmem:[%s219 + $0x38] sm:$0xff]
      %v435 = vpack.c.bf16 %v427, %v427
      %v436 = vpack.c.bf16 %v428, %v428
      %v437 = vpack.c.bf16 %v429, %v429
      %v438 = vpack.c.bf16 %v430, %v430
      %v439 = vpack.c.bf16 %v431, %v431
      %v440 = vpack.c.bf16 %v432, %v432
      %v441 = vpack.c.bf16 %v433, %v433
      %v442 = vpack.c.bf16 %v434, %v434
      %v451 = vunpack.c.l.b16 %v435
      %v452 = vunpack.c.l.b16 %v436
      %v453 = vunpack.c.l.b16 %v437
      %v454 = vunpack.c.l.b16 %v438
      %v455 = vunpack.c.l.b16 %v439
      %v456 = vunpack.c.l.b16 %v440
      %v457 = vunpack.c.l.b16 %v441
      %v458 = vunpack.c.l.b16 %v442
      %v459 = vpack.c.b16 %v451, %v451
      %v460 = vpack.c.b16 %v452, %v452
      %v461 = vpack.c.b16 %v453, %v453
      %v462 = vpack.c.b16 %v454, %v454
      %v463 = vpack.c.b16 %v455, %v455
      %v464 = vpack.c.b16 %v456, %v456
      %v465 = vpack.c.b16 %v457, %v457
      %v466 = vpack.c.b16 %v458, %v458
      %v468 = vshrl.u32 %v459, 16
      %v470 = vrot.slane %v468, 7
      %v471 = vshll.u32 %v459, 16
      %v473 = vor.u32 %v470, %v471
      %v474 = vrot.slane %v470, 4
      %v476 = vshrl.u32 %v460, 16
      %v478 = vrot.slane %v476, 7
      %v479 = vshll.u32 %v460, 16
      %v481 = vor.u32 %v478, %v479
      %v482 = vrot.slane %v478, 4
      %v484 = vshrl.u32 %v461, 16
      %v486 = vrot.slane %v484, 7
      %v487 = vshll.u32 %v461, 16
      %v489 = vor.u32 %v486, %v487
      %v490 = vrot.slane %v486, 4
      %v492 = vshrl.u32 %v462, 16
      %v494 = vrot.slane %v492, 7
      %v495 = vshll.u32 %v462, 16
      %v497 = vor.u32 %v494, %v495
      %v498 = vrot.slane %v494, 4
      %v500 = vshrl.u32 %v463, 16
      %v502 = vrot.slane %v500, 7
      %v503 = vshll.u32 %v463, 16
      %v505 = vor.u32 %v502, %v503
      %v506 = vrot.slane %v502, 4
      %v508 = vshrl.u32 %v464, 16
      %v510 = vrot.slane %v508, 7
      %v511 = vshll.u32 %v464, 16
      %v513 = vor.u32 %v510, %v511
      %v514 = vrot.slane %v510, 4
      %v516 = vshrl.u32 %v465, 16
      %v518 = vrot.slane %v516, 7
      %v519 = vshll.u32 %v465, 16
      %v521 = vor.u32 %v518, %v519
      %v522 = vrot.slane %v518, 4
      %v524 = vshrl.u32 %v466, 16
      %v526 = vrot.slane %v524, 7
      %v527 = vshll.u32 %v466, 16
      %v529 = vor.u32 %v526, %v527
      %v530 = vrot.slane %v526, 4
      %531 = vrot.lane.b32.xlu0 %v473, 4
      %v532 = vpop.permute.xlu0 %531
      %533 = vrot.lane.b32.xlu0 %v474, 4
      %v534 = vpop.permute.xlu0 %533
      %535 = vrot.lane.b32.xlu0 %v481, 4
      %v536 = vpop.permute.xlu0 %535
      %537 = vrot.lane.b32.xlu0 %v482, 4
      %v538 = vpop.permute.xlu0 %537
      %539 = vrot.lane.b32.xlu0 %v489, 4
      %v540 = vpop.permute.xlu0 %539
      %541 = vrot.lane.b32.xlu0 %v490, 4
      %v542 = vpop.permute.xlu0 %541
      %543 = vrot.lane.b32.xlu0 %v497, 4
      %v544 = vpop.permute.xlu0 %543
      %545 = vrot.lane.b32.xlu0 %v498, 4
      %v546 = vpop.permute.xlu0 %545
      %547 = vrot.lane.b32.xlu0 %v505, 4
      %v548 = vpop.permute.xlu0 %547
      %549 = vrot.lane.b32.xlu0 %v506, 4
      %v550 = vpop.permute.xlu0 %549
      %551 = vrot.lane.b32.xlu0 %v513, 4
      %v552 = vpop.permute.xlu0 %551
      %553 = vrot.lane.b32.xlu0 %v514, 4
      %v554 = vpop.permute.xlu0 %553
      %555 = vrot.lane.b32.xlu0 %v521, 4
      %v556 = vpop.permute.xlu0 %555
      %557 = vrot.lane.b32.xlu0 %v522, 4
      %v558 = vpop.permute.xlu0 %557
      %559 = vrot.lane.b32.xlu0 %v529, 4
      %v560 = vpop.permute.xlu0 %559
      %561 = vrot.lane.b32.xlu0 %v530, 4
      %v562 = vpop.permute.xlu0 %561
      %vm579 = vcmask 289824
      %vm580 = vmand %vm579, %vm374
      %v581 = vld [vmem:[%s372] sm:$0xf]
      %v582 = vsel %vm580, %v532, %v581
      %583 = vst [vmem:[%s372] sm:$0xf] %v582
      %vm584 = vcmask 286752
      %vm585 = vmand %vm584, %vm380
      %v586 = vld [vmem:[%s372 + $0x4] sm:$0x1]
      %v587 = vsel %vm585, %v534, %v586
      %588 = vst [vmem:[%s372 + $0x4] sm:$0x1] %v587
      %v589 = vld [vmem:[%s372 + $0x8] sm:$0xf]
      %v590 = vsel %vm580, %v536, %v589
      %591 = vst [vmem:[%s372 + $0x8] sm:$0xf] %v590
      %v592 = vld [vmem:[%s372 + $0xc] sm:$0x1]
      %v593 = vsel %vm585, %v538, %v592
      %594 = vst [vmem:[%s372 + $0xc] sm:$0x1] %v593
      %v595 = vld [vmem:[%s372 + $0x10] sm:$0xf]
      %v596 = vsel %vm580, %v540, %v595
      %597 = vst [vmem:[%s372 + $0x10] sm:$0xf] %v596
      %v598 = vld [vmem:[%s372 + $0x14] sm:$0x1]
      %v599 = vsel %vm585, %v542, %v598
      %600 = vst [vmem:[%s372 + $0x14] sm:$0x1] %v599
      %v601 = vld [vmem:[%s372 + $0x18] sm:$0xf]
      %v602 = vsel %vm580, %v544, %v601
      %603 = vst [vmem:[%s372 + $0x18] sm:$0xf] %v602
      %v604 = vld [vmem:[%s372 + $0x1c] sm:$0x1]
      %v605 = vsel %vm585, %v546, %v604
      %606 = vst [vmem:[%s372 + $0x1c] sm:$0x1] %v605
      %v607 = vld [vmem:[%s372 + $0x20] sm:$0xf]
      %v608 = vsel %vm580, %v548, %v607
      %609 = vst [vmem:[%s372 + $0x20] sm:$0xf] %v608
      %v610 = vld [vmem:[%s372 + $0x24] sm:$0x1]
      %v611 = vsel %vm585, %v550, %v610
      %612 = vst [vmem:[%s372 + $0x24] sm:$0x1] %v611
      %v613 = vld [vmem:[%s372 + $0x28] sm:$0xf]
      %v614 = vsel %vm580, %v552, %v613
      %615 = vst [vmem:[%s372 + $0x28] sm:$0xf] %v614
      %v616 = vld [vmem:[%s372 + $0x2c] sm:$0x1]
      %v617 = vsel %vm585, %v554, %v616
      %618 = vst [vmem:[%s372 + $0x2c] sm:$0x1] %v617
      %v619 = vld [vmem:[%s372 + $0x30] sm:$0xf]
      %v620 = vsel %vm580, %v556, %v619
      %621 = vst [vmem:[%s372 + $0x30] sm:$0xf] %v620
      %v622 = vld [vmem:[%s372 + $0x34] sm:$0x1]
      %v623 = vsel %vm585, %v558, %v622
      %624 = vst [vmem:[%s372 + $0x34] sm:$0x1] %v623
      %v625 = vld [vmem:[%s372 + $0x38] sm:$0xf]
      %v626 = vsel %vm580, %v560, %v625
      %627 = vst [vmem:[%s372 + $0x38] sm:$0xf] %v626
      %v628 = vld [vmem:[%s372 + $0x3c] sm:$0x1]
      %v629 = vsel %vm585, %v562, %v628
      %630 = vst [vmem:[%s372 + $0x3c] sm:$0x1] %v629
      %v631 = vld [vmem:[#allocation2] sm:$0xf]
      %v632 = vld [vmem:[#allocation2 + $0x8] sm:$0xf]
      %v633 = vld [vmem:[#allocation2 + $0x10] sm:$0xf]
      %v634 = vld [vmem:[#allocation2 + $0x18] sm:$0xf]
      %v635 = vld [vmem:[#allocation2 + $0x20] sm:$0xf]
      %v636 = vld [vmem:[#allocation2 + $0x28] sm:$0xf]
      %v637 = vld [vmem:[#allocation2 + $0x30] sm:$0xf]
      %v638 = vld [vmem:[#allocation2 + $0x38] sm:$0xf]
      %v639 = vld [vmem:[%s2] sm:$0xf]
      %v640 = vld [vmem:[%s2 + $0x4] sm:$0xf]
      %v641 = vld [vmem:[%s2 + $0x8] sm:$0xf]
      %v642 = vld [vmem:[%s2 + $0xc] sm:$0xf]
      %v643 = vld [vmem:[%s2 + $0x10] sm:$0x3]
      %v644 = vld [vmem:[#allocation2 + $0x4] sm:$0x1]
      %v645 = vld [vmem:[#allocation2 + $0xc] sm:$0x1]
      %v646 = vld [vmem:[#allocation2 + $0x14] sm:$0x1]
      %v647 = vld [vmem:[#allocation2 + $0x1c] sm:$0x1]
      %v648 = vld [vmem:[#allocation2 + $0x24] sm:$0x1]
      %v649 = vld [vmem:[#allocation2 + $0x2c] sm:$0x1]
      %v650 = vld [vmem:[#allocation2 + $0x34] sm:$0x1]
      %v651 = vld [vmem:[#allocation2 + $0x3c] sm:$0x1]
      %vm652 = vsmask.f32 3328
      %vm653 = vsmask.f32 7440
      %vm654 = vmor %vm652, %vm653
      %v656 = vshrl.u32 %v631, 16
      %v658 = vrot.slane %v656, 4
      %v659 = vshll.u32 %v631, 16
      %v661 = vrot.slane %v659, 5
      %v662 = vor.u32 %v658, %v661
      %v663 = vrot.slane %v662, 4
      %v665 = vshll.u32 %v644, 16
      %v667 = vrot.slane %v665, 5
      %v668 = vsel %vm654, %v663, %v667
      %v670 = vshrl.u32 %v632, 16
      %v672 = vrot.slane %v670, 4
      %v673 = vshll.u32 %v632, 16
      %v675 = vrot.slane %v673, 5
      %v676 = vor.u32 %v672, %v675
      %v677 = vrot.slane %v676, 4
      %v679 = vshll.u32 %v645, 16
      %v681 = vrot.slane %v679, 5
      %v682 = vsel %vm654, %v677, %v681
      %v684 = vshrl.u32 %v633, 16
      %v686 = vrot.slane %v684, 4
      %v687 = vshll.u32 %v633, 16
      %v689 = vrot.slane %v687, 5
      %v690 = vor.u32 %v686, %v689
      %v691 = vrot.slane %v690, 4
      %v693 = vshll.u32 %v646, 16
      %v695 = vrot.slane %v693, 5
      %v696 = vsel %vm654, %v691, %v695
      %v698 = vshrl.u32 %v634, 16
      %v700 = vrot.slane %v698, 4
      %v701 = vshll.u32 %v634, 16
      %v703 = vrot.slane %v701, 5
      %v704 = vor.u32 %v700, %v703
      %v705 = vrot.slane %v704, 4
      %v707 = vshll.u32 %v647, 16
      %v709 = vrot.slane %v707, 5
      %v710 = vsel %vm654, %v705, %v709
      %v712 = vshrl.u32 %v635, 16
      %v714 = vrot.slane %v712, 4
      %v715 = vshll.u32 %v635, 16
      %v717 = vrot.slane %v715, 5
      %v718 = vor.u32 %v714, %v717
      %v719 = vrot.slane %v718, 4
      %v721 = vshll.u32 %v648, 16
      %v723 = vrot.slane %v721, 5
      %v724 = vsel %vm654, %v719, %v723
      %v726 = vshrl.u32 %v636, 16
      %v728 = vrot.slane %v726, 4
      %v729 = vshll.u32 %v636, 16
      %v731 = vrot.slane %v729, 5
      %v732 = vor.u32 %v728, %v731
      %v733 = vrot.slane %v732, 4
      %v735 = vshll.u32 %v649, 16
      %v737 = vrot.slane %v735, 5
      %v738 = vsel %vm654, %v733, %v737
      %v740 = vshrl.u32 %v637, 16
      %v742 = vrot.slane %v740, 4
      %v743 = vshll.u32 %v637, 16
      %v745 = vrot.slane %v743, 5
      %v746 = vor.u32 %v742, %v745
      %v747 = vrot.slane %v746, 4
      %v749 = vshll.u32 %v650, 16
      %v751 = vrot.slane %v749, 5
      %v752 = vsel %vm654, %v747, %v751
      %v754 = vshrl.u32 %v638, 16
      %v756 = vrot.slane %v754, 4
      %v757 = vshll.u32 %v638, 16
      %v759 = vrot.slane %v757, 5
      %v760 = vor.u32 %v756, %v759
      %v761 = vrot.slane %v760, 4
      %v763 = vshll.u32 %v651, 16
      %v765 = vrot.slane %v763, 5
      %v766 = vsel %vm654, %v761, %v765
      %v767 = vld [vmem:[%s2 + $0x10] sm:$0xc]
      %v768 = vld [vmem:[%s2 + $0x14] sm:$0xf]
      %v769 = vld [vmem:[%s2 + $0x18] sm:$0xf]
      %v770 = vld [vmem:[%s2 + $0x1c] sm:$0xf]
      %v771 = vld [vmem:[%s2 + $0x20] sm:$0xf]
      %v772 = vunpack.c.l.b16 %v668
      %v773 = vunpack.c.l.b16 %v682
      %v774 = vunpack.c.l.b16 %v696
      %v775 = vunpack.c.l.b16 %v710
      %v776 = vunpack.c.l.b16 %v724
      %v777 = vunpack.c.l.b16 %v738
      %v778 = vunpack.c.l.b16 %v752
      %v779 = vunpack.c.l.b16 %v766
      %v780 = vpack.c.b16 %v773, %v772
      %v781 = vpack.c.b16 %v775, %v774
      %v782 = vpack.c.b16 %v777, %v776
      %v783 = vpack.c.b16 %v779, %v778
      %v789 = vunpack.c.l.b16 %v767
      %v790 = vunpack.c.l.b16 %v768
      %v791 = vunpack.c.l.b16 %v769
      %v792 = vunpack.c.l.b16 %v770
      %v793 = vunpack.c.l.b16 %v771
      %v794 = vpack.c.b16 %v790, %v789
      %v795 = vpack.c.b16 %v792, %v791
      %v796 = vpack.c.b16 %v793, %v793
      %vm797 = vcmask 1045504
      %v798 = vrot.slane %v794, 2
      %v799 = vrot.slane %v795, 2
      %v800 = vsel %vm797, %v798, %v799
      %v801 = vrot.slane %v796, 2
      %v802 = vsel %vm797, %v799, %v801
      %vm805 = vcmask 293888
      %v807 = vsel %vm805, %v780, 0
      %v810 = vsel %vm805, %v781, 0
      %v813 = vsel %vm805, %v782, 0
      %v816 = vsel %vm805, %v783, 0
      %vm818 = vcmask 1041408
      %v820 = vsel %vm818, %v801, 0
      %822 = vmatprep.subr.bf16.mxu0 0
      %823 = vmatpush1.bf16.msra.mxu0 %v800
      %824 = vmatprep.subr.bf16.mxu0 0
      %825 = vmatpush1.bf16.msra.mxu0 %v802
      %826 = vmatprep.subr.bf16.mxu0 0
      %827 = vmatpush1.bf16.msra.mxu0 %v820
      %828 = vmatprep.subr.bf16.mxu0 0
      %829 = vmatpush1.bf16.msra.mxu0 0
      %830 = vmatprep.subr.bf16.mxu0 0
      %831 = vmatpush1.bf16.msra.mxu0 0
      %832 = vmatprep.subr.bf16.mxu0 0
      %833 = vmatpush1.bf16.msra.mxu0 0
      %834 = vmatprep.subr.bf16.mxu0 0
      %835 = vmatpush1.bf16.msra.mxu0 0
      %836 = vmatprep.subr.bf16.mxu0 0
      %837 = vmatpush1.bf16.msra.mxu0 0
      %838 = vmatprep.subr.bf16.mxu0 0
      %839 = vmatpush1.bf16.msra.mxu0 0
      %840 = vmatprep.subr.bf16.mxu0 0
      %841 = vmatpush1.bf16.msra.mxu0 0
      %842 = vmatprep.subr.bf16.mxu0 0
      %843 = vmatpush1.bf16.msra.mxu0 0
      %844 = vmatprep.subr.bf16.mxu0 0
      %845 = vmatpush1.bf16.msra.mxu0 0
      %846 = vmatprep.subr.bf16.mxu0 0
      %847 = vmatpush1.bf16.msra.mxu0 0
      %848 = vmatprep.subr.bf16.mxu0 0
      %849 = vmatpush1.bf16.msra.mxu0 0
      %850 = vmatprep.subr.bf16.mxu0 0
      %851 = vmatpush1.bf16.msra.mxu0 0
      %852 = vmatprep.subr.bf16.mxu0 0
      %853 = vmatpush1.bf16.msra.mxu0 0
      %854 = vmatprep.mubr.bf16.mxu0 0
      %855 = vmatmul.mubr.bf16.gmra.mrb[0].mxu0 %v807
      %v856 = vpop.f32.mrb[0].mxu0
      %v857 = vadd.f32 0.0, %v856
      %v858 = vpop.f32.mrb[0].mxu0
      %v859 = vpop.f32.mrb[0].mxu0
      %v860 = vadd.f32 0.0, %v859
      %v861 = vpop.f32.mrb[0].mxu0
      %862 = vmatprep.mubr.bf16.mxu0 0
      %863 = vmatmul.mubr.bf16.gmra.mrb[0].mxu0 %v810
      %v864 = vpop.f32.mrb[0].mxu0
      %v865 = vadd.f32 0.0, %v864
      %v866 = vpop.f32.mrb[0].mxu0
      %v867 = vpop.f32.mrb[0].mxu0
      %v868 = vadd.f32 0.0, %v867
      %v869 = vpop.f32.mrb[0].mxu0
      %870 = vmatprep.mubr.bf16.mxu0 0
      %871 = vmatmul.mubr.bf16.gmra.mrb[0].mxu0 %v813
      %v872 = vpop.f32.mrb[0].mxu0
      %v873 = vadd.f32 0.0, %v872
      %v874 = vpop.f32.mrb[0].mxu0
      %v875 = vpop.f32.mrb[0].mxu0
      %v876 = vadd.f32 0.0, %v875
      %v877 = vpop.f32.mrb[0].mxu0
      %878 = vmatprep.mubr.bf16.mxu0 0
      %879 = vmatmul.mubr.bf16.gmra.mrb[0].mxu0 %v816
      %v880 = vpop.f32.mrb[0].mxu0
      %v881 = vadd.f32 0.0, %v880
      %v882 = vpop.f32.mrb[0].mxu0
      %v883 = vpop.f32.mrb[0].mxu0
      %v884 = vadd.f32 0.0, %v883
      %v885 = vpop.f32.mrb[0].mxu0
      %886 = vdwg.mxu0
      %v895 = vunpack.c.l.b16 %v631
      %v896 = vunpack.c.l.b16 %v632
      %v897 = vunpack.c.l.b16 %v633
      %v898 = vunpack.c.l.b16 %v634
      %v899 = vunpack.c.l.b16 %v635
      %v900 = vunpack.c.l.b16 %v636
      %v901 = vunpack.c.l.b16 %v637
      %v902 = vunpack.c.l.b16 %v638
      %v903 = vpack.c.b16 %v896, %v895
      %v904 = vpack.c.b16 %v898, %v897
      %v905 = vpack.c.b16 %v900, %v899
      %v906 = vpack.c.b16 %v902, %v901
      %v912 = vunpack.c.l.b16 %v639
      %v913 = vunpack.c.l.b16 %v640
      %v914 = vunpack.c.l.b16 %v641
      %v915 = vunpack.c.l.b16 %v642
      %v916 = vunpack.c.l.b16 %v643
      %v917 = vpack.c.b16 %v913, %v912
      %v918 = vpack.c.b16 %v915, %v914
      %v919 = vpack.c.b16 %v916, %v916
      %v923 = vsel %vm805, %v903, 0
      %v926 = vsel %vm805, %v904, 0
      %v929 = vsel %vm805, %v905, 0
      %v932 = vsel %vm805, %v906, 0
      %v935 = vsel %vm818, %v919, 0
      %937 = vmatprep.subr.bf16.mxu0 0
      %938 = vmatpush1.bf16.msra.mxu0 %v917
      %939 = vmatprep.subr.bf16.mxu0 0
      %940 = vmatpush1.bf16.msra.mxu0 %v918
      %941 = vmatprep.subr.bf16.mxu0 0
      %942 = vmatpush1.bf16.msra.mxu0 %v935
      %943 = vmatprep.subr.bf16.mxu0 0
      %944 = vmatpush1.bf16.msra.mxu0 0
      %945 = vmatprep.subr.bf16.mxu0 0
      %946 = vmatpush1.bf16.msra.mxu0 0
      %947 = vmatprep.subr.bf16.mxu0 0
      %948 = vmatpush1.bf16.msra.mxu0 0
      %949 = vmatprep.subr.bf16.mxu0 0
      %950 = vmatpush1.bf16.msra.mxu0 0
      %951 = vmatprep.subr.bf16.mxu0 0
      %952 = vmatpush1.bf16.msra.mxu0 0
      %953 = vmatprep.subr.bf16.mxu0 0
      %954 = vmatpush1.bf16.msra.mxu0 0
      %955 = vmatprep.subr.bf16.mxu0 0
      %956 = vmatpush1.bf16.msra.mxu0 0
      %957 = vmatprep.subr.bf16.mxu0 0
      %958 = vmatpush1.bf16.msra.mxu0 0
      %959 = vmatprep.subr.bf16.mxu0 0
      %960 = vmatpush1.bf16.msra.mxu0 0
      %961 = vmatprep.subr.bf16.mxu0 0
      %962 = vmatpush1.bf16.msra.mxu0 0
      %963 = vmatprep.subr.bf16.mxu0 0
      %964 = vmatpush1.bf16.msra.mxu0 0
      %965 = vmatprep.subr.bf16.mxu0 0
      %966 = vmatpush1.bf16.msra.mxu0 0
      %967 = vmatprep.subr.bf16.mxu0 0
      %968 = vmatpush1.bf16.msra.mxu0 0
      %969 = vmatprep.mubr.bf16.mxu0 0
      %970 = vmatmul.mubr.bf16.gmra.mrb[0].mxu0 %v923
      %v971 = vpop.f32.mrb[0].mxu0
      %v972 = vadd.f32 %v857, %v971
      %v973 = vpop.f32.mrb[0].mxu0
      %v974 = vpop.f32.mrb[0].mxu0
      %v975 = vadd.f32 %v860, %v974
      %v976 = vpop.f32.mrb[0].mxu0
      %977 = vmatprep.mubr.bf16.mxu0 0
      %978 = vmatmul.mubr.bf16.gmra.mrb[0].mxu0 %v926
      %v979 = vpop.f32.mrb[0].mxu0
      %v980 = vadd.f32 %v865, %v979
      %v981 = vpop.f32.mrb[0].mxu0
      %v982 = vpop.f32.mrb[0].mxu0
      %v983 = vadd.f32 %v868, %v982
      %v984 = vpop.f32.mrb[0].mxu0
      %985 = vmatprep.mubr.bf16.mxu0 0
      %986 = vmatmul.mubr.bf16.gmra.mrb[0].mxu0 %v929
      %v987 = vpop.f32.mrb[0].mxu0
      %v988 = vadd.f32 %v873, %v987
      %v989 = vpop.f32.mrb[0].mxu0
      %v990 = vpop.f32.mrb[0].mxu0
      %v991 = vadd.f32 %v876, %v990
      %v992 = vpop.f32.mrb[0].mxu0
      %993 = vmatprep.mubr.bf16.mxu0 0
      %994 = vmatmul.mubr.bf16.gmra.mrb[0].mxu0 %v932
      %v995 = vpop.f32.mrb[0].mxu0
      %v996 = vadd.f32 %v881, %v995
      %v997 = vpop.f32.mrb[0].mxu0
      %v998 = vpop.f32.mrb[0].mxu0
      %v999 = vadd.f32 %v884, %v998
      %v1000 = vpop.f32.mrb[0].mxu0
      %1001 = vdwg.mxu0
      %v1002 = vld [vmem:[#allocation2] sm:$0xe]
      %v1003 = vld [vmem:[#allocation2 + $0x8] sm:$0xe]
      %v1004 = vld [vmem:[#allocation2 + $0x10] sm:$0xe]
      %v1005 = vld [vmem:[#allocation2 + $0x18] sm:$0xe]
      %v1006 = vld [vmem:[#allocation2 + $0x20] sm:$0xe]
      %v1007 = vld [vmem:[#allocation2 + $0x28] sm:$0xe]
      %v1008 = vld [vmem:[#allocation2 + $0x30] sm:$0xe]
      %v1009 = vld [vmem:[#allocation2 + $0x38] sm:$0xe]
      %vm1026 = vcmask 1042432
      %vm1027 = vcmask 1046532
      %vm1028 = vmor %vm1026, %vm1027
      %v1029 = vrot.slane %v1002, 5
      %v1030 = vrot.slane %v1029, 4
      %v1031 = vrot.slane %v644, 5
      %v1032 = vsel %vm1028, %v1030, %v1031
      %v1033 = vrot.slane %v1003, 5
      %v1034 = vrot.slane %v1033, 4
      %v1035 = vrot.slane %v645, 5
      %v1036 = vsel %vm1028, %v1034, %v1035
      %v1037 = vrot.slane %v1004, 5
      %v1038 = vrot.slane %v1037, 4
      %v1039 = vrot.slane %v646, 5
      %v1040 = vsel %vm1028, %v1038, %v1039
      %v1041 = vrot.slane %v1005, 5
      %v1042 = vrot.slane %v1041, 4
      %v1043 = vrot.slane %v647, 5
      %v1044 = vsel %vm1028, %v1042, %v1043
      %v1045 = vrot.slane %v1006, 5
      %v1046 = vrot.slane %v1045, 4
      %v1047 = vrot.slane %v648, 5
      %v1048 = vsel %vm1028, %v1046, %v1047
      %v1049 = vrot.slane %v1007, 5
      %v1050 = vrot.slane %v1049, 4
      %v1051 = vrot.slane %v649, 5
      %v1052 = vsel %vm1028, %v1050, %v1051
      %v1053 = vrot.slane %v1008, 5
      %v1054 = vrot.slane %v1053, 4
      %v1055 = vrot.slane %v650, 5
      %v1056 = vsel %vm1028, %v1054, %v1055
      %v1057 = vrot.slane %v1009, 5
      %v1058 = vrot.slane %v1057, 4
      %v1059 = vrot.slane %v651, 5
      %v1060 = vsel %vm1028, %v1058, %v1059
      %v1061 = vld [vmem:[%s2 + $0x24] sm:$0xf]
      %v1062 = vld [vmem:[%s2 + $0x28] sm:$0xf]
      %v1063 = vld [vmem:[%s2 + $0x2c] sm:$0xf]
      %v1064 = vld [vmem:[%s2 + $0x30] sm:$0xf]
      %v1065 = vld [vmem:[%s2 + $0x34] sm:$0x3]
      %v1066 = vunpack.c.l.b16 %v1032
      %v1067 = vunpack.c.l.b16 %v1036
      %v1068 = vunpack.c.l.b16 %v1040
      %v1069 = vunpack.c.l.b16 %v1044
      %v1070 = vunpack.c.l.b16 %v1048
      %v1071 = vunpack.c.l.b16 %v1052
      %v1072 = vunpack.c.l.b16 %v1056
      %v1073 = vunpack.c.l.b16 %v1060
      %v1074 = vpack.c.b16 %v1067, %v1066
      %v1075 = vpack.c.b16 %v1069, %v1068
      %v1076 = vpack.c.b16 %v1071, %v1070
      %v1077 = vpack.c.b16 %v1073, %v1072
      %v1083 = vunpack.c.l.b16 %v1061
      %v1084 = vunpack.c.l.b16 %v1062
      %v1085 = vunpack.c.l.b16 %v1063
      %v1086 = vunpack.c.l.b16 %v1064
      %v1087 = vunpack.c.l.b16 %v1065
      %v1088 = vpack.c.b16 %v1084, %v1083
      %v1089 = vpack.c.b16 %v1086, %v1085
      %v1090 = vpack.c.b16 %v1087, %v1087
      %v1094 = vsel %vm805, %v1074, 0
      %v1097 = vsel %vm805, %v1075, 0
      %v1100 = vsel %vm805, %v1076, 0
      %v1103 = vsel %vm805, %v1077, 0
      %v1106 = vsel %vm818, %v1090, 0
      %1108 = vmatprep.subr.bf16.mxu0 0
      %1109 = vmatpush1.bf16.msra.mxu0 %v1088
      %1110 = vmatprep.subr.bf16.mxu0 0
      %1111 = vmatpush1.bf16.msra.mxu0 %v1089
      %1112 = vmatprep.subr.bf16.mxu0 0
      %1113 = vmatpush1.bf16.msra.mxu0 %v1106
      %1114 = vmatprep.subr.bf16.mxu0 0
      %1115 = vmatpush1.bf16.msra.mxu0 0
      %1116 = vmatprep.subr.bf16.mxu0 0
      %1117 = vmatpush1.bf16.msra.mxu0 0
      %1118 = vmatprep.subr.bf16.mxu0 0
      %1119 = vmatpush1.bf16.msra.mxu0 0
      %1120 = vmatprep.subr.bf16.mxu0 0
      %1121 = vmatpush1.bf16.msra.mxu0 0
      %1122 = vmatprep.subr.bf16.mxu0 0
      %1123 = vmatpush1.bf16.msra.mxu0 0
      %1124 = vmatprep.subr.bf16.mxu0 0
      %1125 = vmatpush1.bf16.msra.mxu0 0
      %1126 = vmatprep.subr.bf16.mxu0 0
      %1127 = vmatpush1.bf16.msra.mxu0 0
      %1128 = vmatprep.subr.bf16.mxu0 0
      %1129 = vmatpush1.bf16.msra.mxu0 0
      %1130 = vmatprep.subr.bf16.mxu0 0
      %1131 = vmatpush1.bf16.msra.mxu0 0
      %1132 = vmatprep.subr.bf16.mxu0 0
      %1133 = vmatpush1.bf16.msra.mxu0 0
      %1134 = vmatprep.subr.bf16.mxu0 0
      %1135 = vmatpush1.bf16.msra.mxu0 0
      %1136 = vmatprep.subr.bf16.mxu0 0
      %1137 = vmatpush1.bf16.msra.mxu0 0
      %1138 = vmatprep.subr.bf16.mxu0 0
      %1139 = vmatpush1.bf16.msra.mxu0 0
      %1140 = vmatprep.mubr.bf16.mxu0 0
      %1141 = vmatmul.mubr.bf16.gmra.mrb[0].mxu0 %v1094
      %v1142 = vpop.f32.mrb[0].mxu0
      %v1143 = vadd.f32 0.0, %v1142
      %v1144 = vpop.f32.mrb[0].mxu0
      %v1145 = vpop.f32.mrb[0].mxu0
      %v1146 = vadd.f32 0.0, %v1145
      %v1147 = vpop.f32.mrb[0].mxu0
      %1148 = vmatprep.mubr.bf16.mxu0 0
      %1149 = vmatmul.mubr.bf16.gmra.mrb[0].mxu0 %v1097
      %v1150 = vpop.f32.mrb[0].mxu0
      %v1151 = vadd.f32 0.0, %v1150
      %v1152 = vpop.f32.mrb[0].mxu0
      %v1153 = vpop.f32.mrb[0].mxu0
      %v1154 = vadd.f32 0.0, %v1153
      %v1155 = vpop.f32.mrb[0].mxu0
      %1156 = vmatprep.mubr.bf16.mxu0 0
      %1157 = vmatmul.mubr.bf16.gmra.mrb[0].mxu0 %v1100
      %v1158 = vpop.f32.mrb[0].mxu0
      %v1159 = vadd.f32 0.0, %v1158
      %v1160 = vpop.f32.mrb[0].mxu0
      %v1161 = vpop.f32.mrb[0].mxu0
      %v1162 = vadd.f32 0.0, %v1161
      %v1163 = vpop.f32.mrb[0].mxu0
      %1164 = vmatprep.mubr.bf16.mxu0 0
      %1165 = vmatmul.mubr.bf16.gmra.mrb[0].mxu0 %v1103
      %v1166 = vpop.f32.mrb[0].mxu0
      %v1167 = vadd.f32 0.0, %v1166
      %v1168 = vpop.f32.mrb[0].mxu0
      %v1169 = vpop.f32.mrb[0].mxu0
      %v1170 = vadd.f32 0.0, %v1169
      %v1171 = vpop.f32.mrb[0].mxu0
      %1172 = vdwg.mxu0
      %v1173 = vadd.f32 %v972, %v1143
      %v1174 = vadd.f32 %v975, %v1146
      %v1175 = vadd.f32 %v980, %v1151
      %v1176 = vadd.f32 %v983, %v1154
      %v1177 = vadd.f32 %v988, %v1159
      %v1178 = vadd.f32 %v991, %v1162
      %v1179 = vadd.f32 %v996, %v1167
      %v1180 = vadd.f32 %v999, %v1170
      %v1181 = vld [vmem:[%s372] sm:$0xf]
      %v1182 = vld [vmem:[%s372 + $0x8] sm:$0xf]
      %v1183 = vld [vmem:[%s372 + $0x10] sm:$0xf]
      %v1184 = vld [vmem:[%s372 + $0x18] sm:$0xf]
      %v1185 = vld [vmem:[%s372 + $0x20] sm:$0xf]
      %v1186 = vld [vmem:[%s372 + $0x28] sm:$0xf]
      %v1187 = vld [vmem:[%s372 + $0x30] sm:$0xf]
      %v1188 = vld [vmem:[%s372 + $0x38] sm:$0xf]
      %v1189 = vld [vmem:[%s2 + $0x34] sm:$0xc]
      %v1190 = vld [vmem:[%s2 + $0x38] sm:$0xf]
      %v1191 = vld [vmem:[%s2 + $0x3c] sm:$0xf]
      %v1192 = vld [vmem:[%s2 + $0x40] sm:$0xf]
      %v1193 = vld [vmem:[%s2 + $0x44] sm:$0xf]
      %v1202 = vunpack.c.l.b16 %v1181
      %v1203 = vunpack.c.l.b16 %v1182
      %v1204 = vunpack.c.l.b16 %v1183
      %v1205 = vunpack.c.l.b16 %v1184
      %v1206 = vunpack.c.l.b16 %v1185
      %v1207 = vunpack.c.l.b16 %v1186
      %v1208 = vunpack.c.l.b16 %v1187
      %v1209 = vunpack.c.l.b16 %v1188
      %v1210 = vpack.c.b16 %v1203, %v1202
      %v1211 = vpack.c.b16 %v1205, %v1204
      %v1212 = vpack.c.b16 %v1207, %v1206
      %v1213 = vpack.c.b16 %v1209, %v1208
      %v1219 = vunpack.c.l.b16 %v1189
      %v1220 = vunpack.c.l.b16 %v1190
      %v1221 = vunpack.c.l.b16 %v1191
      %v1222 = vunpack.c.l.b16 %v1192
      %v1223 = vunpack.c.l.b16 %v1193
      %v1224 = vpack.c.b16 %v1220, %v1219
      %v1225 = vpack.c.b16 %v1222, %v1221
      %v1226 = vpack.c.b16 %v1223, %v1223
      %v1227 = vrot.slane %v1224, 2
      %v1228 = vrot.slane %v1225, 2
      %v1229 = vsel %vm797, %v1227, %v1228
      %v1230 = vrot.slane %v1226, 2
      %v1231 = vsel %vm797, %v1228, %v1230
      %v1235 = vsel %vm805, %v1210, 0
      %v1238 = vsel %vm805, %v1211, 0
      %v1241 = vsel %vm805, %v1212, 0
      %v1244 = vsel %vm805, %v1213, 0
      %v1247 = vsel %vm818, %v1230, 0
      %1249 = vmatprep.subr.bf16.mxu0 0
      %1250 = vmatpush1.bf16.msra.mxu0 %v1229
      %1251 = vmatprep.subr.bf16.mxu0 0
      %1252 = vmatpush1.bf16.msra.mxu0 %v1231
      %1253 = vmatprep.subr.bf16.mxu0 0
      %1254 = vmatpush1.bf16.msra.mxu0 %v1247
      %1255 = vmatprep.subr.bf16.mxu0 0
      %1256 = vmatpush1.bf16.msra.mxu0 0
      %1257 = vmatprep.subr.bf16.mxu0 0
      %1258 = vmatpush1.bf16.msra.mxu0 0
      %1259 = vmatprep.subr.bf16.mxu0 0
      %1260 = vmatpush1.bf16.msra.mxu0 0
      %1261 = vmatprep.subr.bf16.mxu0 0
      %1262 = vmatpush1.bf16.msra.mxu0 0
      %1263 = vmatprep.subr.bf16.mxu0 0
      %1264 = vmatpush1.bf16.msra.mxu0 0
      %1265 = vmatprep.subr.bf16.mxu0 0
      %1266 = vmatpush1.bf16.msra.mxu0 0
      %1267 = vmatprep.subr.bf16.mxu0 0
      %1268 = vmatpush1.bf16.msra.mxu0 0
      %1269 = vmatprep.subr.bf16.mxu0 0
      %1270 = vmatpush1.bf16.msra.mxu0 0
      %1271 = vmatprep.subr.bf16.mxu0 0
      %1272 = vmatpush1.bf16.msra.mxu0 0
      %1273 = vmatprep.subr.bf16.mxu0 0
      %1274 = vmatpush1.bf16.msra.mxu0 0
      %1275 = vmatprep.subr.bf16.mxu0 0
      %1276 = vmatpush1.bf16.msra.mxu0 0
      %1277 = vmatprep.subr.bf16.mxu0 0
      %1278 = vmatpush1.bf16.msra.mxu0 0
      %1279 = vmatprep.subr.bf16.mxu0 0
      %1280 = vmatpush1.bf16.msra.mxu0 0
      %1281 = vmatprep.mubr.bf16.mxu0 0
      %1282 = vmatmul.mubr.bf16.gmra.mrb[0].mxu0 %v1235
      %v1283 = vpop.f32.mrb[0].mxu0
      %v1284 = vadd.f32 0.0, %v1283
      %v1285 = vpop.f32.mrb[0].mxu0
      %v1286 = vpop.f32.mrb[0].mxu0
      %v1287 = vadd.f32 0.0, %v1286
      %v1288 = vpop.f32.mrb[0].mxu0
      %1289 = vmatprep.mubr.bf16.mxu0 0
      %1290 = vmatmul.mubr.bf16.gmra.mrb[0].mxu0 %v1238
      %v1291 = vpop.f32.mrb[0].mxu0
      %v1292 = vadd.f32 0.0, %v1291
      %v1293 = vpop.f32.mrb[0].mxu0
      %v1294 = vpop.f32.mrb[0].mxu0
      %v1295 = vadd.f32 0.0, %v1294
      %v1296 = vpop.f32.mrb[0].mxu0
      %1297 = vmatprep.mubr.bf16.mxu0 0
      %1298 = vmatmul.mubr.bf16.gmra.mrb[0].mxu0 %v1241
      %v1299 = vpop.f32.mrb[0].mxu0
      %v1300 = vadd.f32 0.0, %v1299
      %v1301 = vpop.f32.mrb[0].mxu0
      %v1302 = vpop.f32.mrb[0].mxu0
      %v1303 = vadd.f32 0.0, %v1302
      %v1304 = vpop.f32.mrb[0].mxu0
      %1305 = vmatprep.mubr.bf16.mxu0 0
      %1306 = vmatmul.mubr.bf16.gmra.mrb[0].mxu0 %v1244
      %v1307 = vpop.f32.mrb[0].mxu0
      %v1308 = vadd.f32 0.0, %v1307
      %v1309 = vpop.f32.mrb[0].mxu0
      %v1310 = vpop.f32.mrb[0].mxu0
      %v1311 = vadd.f32 0.0, %v1310
      %v1312 = vpop.f32.mrb[0].mxu0
      %1313 = vdwg.mxu0
      %v1314 = vadd.f32 %v1173, %v1284
      %v1315 = vadd.f32 %v1174, %v1287
      %v1316 = vadd.f32 %v1175, %v1292
      %v1317 = vadd.f32 %v1176, %v1295
      %v1318 = vadd.f32 %v1177, %v1300
      %v1319 = vadd.f32 %v1178, %v1303
      %v1320 = vadd.f32 %v1179, %v1308
      %v1321 = vadd.f32 %v1180, %v1311
      %v1322 = vld [vmem:[%s372] sm:$0xf]
      %v1323 = vld [vmem:[%s372 + $0x4] sm:$0x1]
      %v1324 = vld [vmem:[%s372 + $0x8] sm:$0xf]
      %v1325 = vld [vmem:[%s372 + $0xc] sm:$0x1]
      %v1326 = vld [vmem:[%s372 + $0x10] sm:$0xf]
      %v1327 = vld [vmem:[%s372 + $0x14] sm:$0x1]
      %v1328 = vld [vmem:[%s372 + $0x18] sm:$0xf]
      %v1329 = vld [vmem:[%s372 + $0x1c] sm:$0x1]
      %v1330 = vld [vmem:[%s372 + $0x20] sm:$0xf]
      %v1331 = vld [vmem:[%s372 + $0x24] sm:$0x1]
      %v1332 = vld [vmem:[%s372 + $0x28] sm:$0xf]
      %v1333 = vld [vmem:[%s372 + $0x2c] sm:$0x1]
      %v1334 = vld [vmem:[%s372 + $0x30] sm:$0xf]
      %v1335 = vld [vmem:[%s372 + $0x34] sm:$0x1]
      %v1336 = vld [vmem:[%s372 + $0x38] sm:$0xf]
      %v1337 = vld [vmem:[%s372 + $0x3c] sm:$0x1]
      %v1339 = vshrl.u32 %v1322, 16
      %v1341 = vrot.slane %v1339, 4
      %v1342 = vshll.u32 %v1322, 16
      %v1344 = vrot.slane %v1342, 5
      %v1345 = vor.u32 %v1341, %v1344
      %v1346 = vrot.slane %v1345, 4
      %v1348 = vshll.u32 %v1323, 16
      %v1350 = vrot.slane %v1348, 5
      %v1351 = vsel %vm654, %v1346, %v1350
      %v1353 = vshrl.u32 %v1324, 16
      %v1355 = vrot.slane %v1353, 4
      %v1356 = vshll.u32 %v1324, 16
      %v1358 = vrot.slane %v1356, 5
      %v1359 = vor.u32 %v1355, %v1358
      %v1360 = vrot.slane %v1359, 4
      %v1362 = vshll.u32 %v1325, 16
      %v1364 = vrot.slane %v1362, 5
      %v1365 = vsel %vm654, %v1360, %v1364
      %v1367 = vshrl.u32 %v1326, 16
      %v1369 = vrot.slane %v1367, 4
      %v1370 = vshll.u32 %v1326, 16
      %v1372 = vrot.slane %v1370, 5
      %v1373 = vor.u32 %v1369, %v1372
      %v1374 = vrot.slane %v1373, 4
      %v1376 = vshll.u32 %v1327, 16
      %v1378 = vrot.slane %v1376, 5
      %v1379 = vsel %vm654, %v1374, %v1378
      %v1381 = vshrl.u32 %v1328, 16
      %v1383 = vrot.slane %v1381, 4
      %v1384 = vshll.u32 %v1328, 16
      %v1386 = vrot.slane %v1384, 5
      %v1387 = vor.u32 %v1383, %v1386
      %v1388 = vrot.slane %v1387, 4
      %v1390 = vshll.u32 %v1329, 16
      %v1392 = vrot.slane %v1390, 5
      %v1393 = vsel %vm654, %v1388, %v1392
      %v1395 = vshrl.u32 %v1330, 16
      %v1397 = vrot.slane %v1395, 4
      %v1398 = vshll.u32 %v1330, 16
      %v1400 = vrot.slane %v1398, 5
      %v1401 = vor.u32 %v1397, %v1400
      %v1402 = vrot.slane %v1401, 4
      %v1404 = vshll.u32 %v1331, 16
      %v1406 = vrot.slane %v1404, 5
      %v1407 = vsel %vm654, %v1402, %v1406
      %v1409 = vshrl.u32 %v1332, 16
      %v1411 = vrot.slane %v1409, 4
      %v1412 = vshll.u32 %v1332, 16
      %v1414 = vrot.slane %v1412, 5
      %v1415 = vor.u32 %v1411, %v1414
      %v1416 = vrot.slane %v1415, 4
      %v1418 = vshll.u32 %v1333, 16
      %v1420 = vrot.slane %v1418, 5
      %v1421 = vsel %vm654, %v1416, %v1420
      %v1423 = vshrl.u32 %v1334, 16
      %v1425 = vrot.slane %v1423, 4
      %v1426 = vshll.u32 %v1334, 16
      %v1428 = vrot.slane %v1426, 5
      %v1429 = vor.u32 %v1425, %v1428
      %v1430 = vrot.slane %v1429, 4
      %v1432 = vshll.u32 %v1335, 16
      %v1434 = vrot.slane %v1432, 5
      %v1435 = vsel %vm654, %v1430, %v1434
      %v1437 = vshrl.u32 %v1336, 16
      %v1439 = vrot.slane %v1437, 4
      %v1440 = vshll.u32 %v1336, 16
      %v1442 = vrot.slane %v1440, 5
      %v1443 = vor.u32 %v1439, %v1442
      %v1444 = vrot.slane %v1443, 4
      %v1446 = vshll.u32 %v1337, 16
      %v1448 = vrot.slane %v1446, 5
      %v1449 = vsel %vm654, %v1444, %v1448
      %v1450 = vld [vmem:[%s2 + $0x48] sm:$0xf]
      %v1451 = vld [vmem:[%s2 + $0x4c] sm:$0xf]
      %v1452 = vld [vmem:[%s2 + $0x50] sm:$0xf]
      %v1453 = vld [vmem:[%s2 + $0x54] sm:$0xf]
      %v1454 = vld [vmem:[%s2 + $0x58] sm:$0x3]
      %v1455 = vunpack.c.l.b16 %v1351
      %v1456 = vunpack.c.l.b16 %v1365
      %v1457 = vunpack.c.l.b16 %v1379
      %v1458 = vunpack.c.l.b16 %v1393
      %v1459 = vunpack.c.l.b16 %v1407
      %v1460 = vunpack.c.l.b16 %v1421
      %v1461 = vunpack.c.l.b16 %v1435
      %v1462 = vunpack.c.l.b16 %v1449
      %v1463 = vpack.c.b16 %v1456, %v1455
      %v1464 = vpack.c.b16 %v1458, %v1457
      %v1465 = vpack.c.b16 %v1460, %v1459
      %v1466 = vpack.c.b16 %v1462, %v1461
      %v1472 = vunpack.c.l.b16 %v1450
      %v1473 = vunpack.c.l.b16 %v1451
      %v1474 = vunpack.c.l.b16 %v1452
      %v1475 = vunpack.c.l.b16 %v1453
      %v1476 = vunpack.c.l.b16 %v1454
      %v1477 = vpack.c.b16 %v1473, %v1472
      %v1478 = vpack.c.b16 %v1475, %v1474
      %v1479 = vpack.c.b16 %v1476, %v1476
      %v1483 = vsel %vm805, %v1463, 0
      %v1486 = vsel %vm805, %v1464, 0
      %v1489 = vsel %vm805, %v1465, 0
      %v1492 = vsel %vm805, %v1466, 0
      %v1495 = vsel %vm818, %v1479, 0
      %1497 = vmatprep.subr.bf16.mxu0 0
      %1498 = vmatpush1.bf16.msra.mxu0 %v1477
      %1499 = vmatprep.subr.bf16.mxu0 0
      %1500 = vmatpush1.bf16.msra.mxu0 %v1478
      %1501 = vmatprep.subr.bf16.mxu0 0
      %1502 = vmatpush1.bf16.msra.mxu0 %v1495
      %1503 = vmatprep.subr.bf16.mxu0 0
      %1504 = vmatpush1.bf16.msra.mxu0 0
      %1505 = vmatprep.subr.bf16.mxu0 0
      %1506 = vmatpush1.bf16.msra.mxu0 0
      %1507 = vmatprep.subr.bf16.mxu0 0
      %1508 = vmatpush1.bf16.msra.mxu0 0
      %1509 = vmatprep.subr.bf16.mxu0 0
      %1510 = vmatpush1.bf16.msra.mxu0 0
      %1511 = vmatprep.subr.bf16.mxu0 0
      %1512 = vmatpush1.bf16.msra.mxu0 0
      %1513 = vmatprep.subr.bf16.mxu0 0
      %1514 = vmatpush1.bf16.msra.mxu0 0
      %1515 = vmatprep.subr.bf16.mxu0 0
      %1516 = vmatpush1.bf16.msra.mxu0 0
      %1517 = vmatprep.subr.bf16.mxu0 0
      %1518 = vmatpush1.bf16.msra.mxu0 0
      %1519 = vmatprep.subr.bf16.mxu0 0
      %1520 = vmatpush1.bf16.msra.mxu0 0
      %1521 = vmatprep.subr.bf16.mxu0 0
      %1522 = vmatpush1.bf16.msra.mxu0 0
      %1523 = vmatprep.subr.bf16.mxu0 0
      %1524 = vmatpush1.bf16.msra.mxu0 0
      %1525 = vmatprep.subr.bf16.mxu0 0
      %1526 = vmatpush1.bf16.msra.mxu0 0
      %1527 = vmatprep.subr.bf16.mxu0 0
      %1528 = vmatpush1.bf16.msra.mxu0 0
      %1529 = vmatprep.mubr.bf16.mxu0 0
      %1530 = vmatmul.mubr.bf16.gmra.mrb[0].mxu0 %v1483
      %v1531 = vpop.f32.mrb[0].mxu0
      %v1532 = vadd.f32 0.0, %v1531
      %v1533 = vpop.f32.mrb[0].mxu0
      %v1534 = vpop.f32.mrb[0].mxu0
      %v1535 = vadd.f32 0.0, %v1534
      %v1536 = vpop.f32.mrb[0].mxu0
      %1537 = vmatprep.mubr.bf16.mxu0 0
      %1538 = vmatmul.mubr.bf16.gmra.mrb[0].mxu0 %v1486
      %v1539 = vpop.f32.mrb[0].mxu0
      %v1540 = vadd.f32 0.0, %v1539
      %v1541 = vpop.f32.mrb[0].mxu0
      %v1542 = vpop.f32.mrb[0].mxu0
      %v1543 = vadd.f32 0.0, %v1542
      %v1544 = vpop.f32.mrb[0].mxu0
      %1545 = vmatprep.mubr.bf16.mxu0 0
      %1546 = vmatmul.mubr.bf16.gmra.mrb[0].mxu0 %v1489
      %v1547 = vpop.f32.mrb[0].mxu0
      %v1548 = vadd.f32 0.0, %v1547
      %v1549 = vpop.f32.mrb[0].mxu0
      %v1550 = vpop.f32.mrb[0].mxu0
      %v1551 = vadd.f32 0.0, %v1550
      %v1552 = vpop.f32.mrb[0].mxu0
      %1553 = vmatprep.mubr.bf16.mxu0 0
      %1554 = vmatmul.mubr.bf16.gmra.mrb[0].mxu0 %v1492
      %v1555 = vpop.f32.mrb[0].mxu0
      %v1556 = vadd.f32 0.0, %v1555
      %v1557 = vpop.f32.mrb[0].mxu0
      %v1558 = vpop.f32.mrb[0].mxu0
      %v1559 = vadd.f32 0.0, %v1558
      %v1560 = vpop.f32.mrb[0].mxu0
      %1561 = vdwg.mxu0
      %v1562 = vadd.f32 %v1314, %v1532
      %v1563 = vadd.f32 %v1315, %v1535
      %v1564 = vadd.f32 %v1316, %v1540
      %v1565 = vadd.f32 %v1317, %v1543
      %v1566 = vadd.f32 %v1318, %v1548
      %v1567 = vadd.f32 %v1319, %v1551
      %v1568 = vadd.f32 %v1320, %v1556
      %v1569 = vadd.f32 %v1321, %v1559
      %v1570 = vld [vmem:[%s372] sm:$0xe]
      %v1571 = vld [vmem:[%s372 + $0x8] sm:$0xe]
      %v1572 = vld [vmem:[%s372 + $0x10] sm:$0xe]
      %v1573 = vld [vmem:[%s372 + $0x18] sm:$0xe]
      %v1574 = vld [vmem:[%s372 + $0x20] sm:$0xe]
      %v1575 = vld [vmem:[%s372 + $0x28] sm:$0xe]
      %v1576 = vld [vmem:[%s372 + $0x30] sm:$0xe]
      %v1577 = vld [vmem:[%s372 + $0x38] sm:$0xe]
      %v1594 = vrot.slane %v1570, 5
      %v1595 = vrot.slane %v1594, 4
      %v1596 = vrot.slane %v1323, 5
      %v1597 = vsel %vm1028, %v1595, %v1596
      %v1598 = vrot.slane %v1571, 5
      %v1599 = vrot.slane %v1598, 4
      %v1600 = vrot.slane %v1325, 5
      %v1601 = vsel %vm1028, %v1599, %v1600
      %v1602 = vrot.slane %v1572, 5
      %v1603 = vrot.slane %v1602, 4
      %v1604 = vrot.slane %v1327, 5
      %v1605 = vsel %vm1028, %v1603, %v1604
      %v1606 = vrot.slane %v1573, 5
      %v1607 = vrot.slane %v1606, 4
      %v1608 = vrot.slane %v1329, 5
      %v1609 = vsel %vm1028, %v1607, %v1608
      %v1610 = vrot.slane %v1574, 5
      %v1611 = vrot.slane %v1610, 4
      %v1612 = vrot.slane %v1331, 5
      %v1613 = vsel %vm1028, %v1611, %v1612
      %v1614 = vrot.slane %v1575, 5
      %v1615 = vrot.slane %v1614, 4
      %v1616 = vrot.slane %v1333, 5
      %v1617 = vsel %vm1028, %v1615, %v1616
      %v1618 = vrot.slane %v1576, 5
      %v1619 = vrot.slane %v1618, 4
      %v1620 = vrot.slane %v1335, 5
      %v1621 = vsel %vm1028, %v1619, %v1620
      %v1622 = vrot.slane %v1577, 5
      %v1623 = vrot.slane %v1622, 4
      %v1624 = vrot.slane %v1337, 5
      %v1625 = vsel %vm1028, %v1623, %v1624
      %v1626 = vld [vmem:[%s2 + $0x58] sm:$0xc]
      %v1627 = vld [vmem:[%s2 + $0x5c] sm:$0xf]
      %v1628 = vld [vmem:[%s2 + $0x60] sm:$0xf]
      %v1629 = vld [vmem:[%s2 + $0x64] sm:$0xf]
      %v1630 = vld [vmem:[%s2 + $0x68] sm:$0xf]
      %v1631 = vunpack.c.l.b16 %v1597
      %v1632 = vunpack.c.l.b16 %v1601
      %v1633 = vunpack.c.l.b16 %v1605
      %v1634 = vunpack.c.l.b16 %v1609
      %v1635 = vunpack.c.l.b16 %v1613
      %v1636 = vunpack.c.l.b16 %v1617
      %v1637 = vunpack.c.l.b16 %v1621
      %v1638 = vunpack.c.l.b16 %v1625
      %v1639 = vpack.c.b16 %v1632, %v1631
      %v1640 = vpack.c.b16 %v1634, %v1633
      %v1641 = vpack.c.b16 %v1636, %v1635
      %v1642 = vpack.c.b16 %v1638, %v1637
      %v1648 = vunpack.c.l.b16 %v1626
      %v1649 = vunpack.c.l.b16 %v1627
      %v1650 = vunpack.c.l.b16 %v1628
      %v1651 = vunpack.c.l.b16 %v1629
      %v1652 = vunpack.c.l.b16 %v1630
      %v1653 = vpack.c.b16 %v1649, %v1648
      %v1654 = vpack.c.b16 %v1651, %v1650
      %v1655 = vpack.c.b16 %v1652, %v1652
      %v1656 = vrot.slane %v1653, 2
      %v1657 = vrot.slane %v1654, 2
      %v1658 = vsel %vm797, %v1656, %v1657
      %v1659 = vrot.slane %v1655, 2
      %v1660 = vsel %vm797, %v1657, %v1659
      %v1664 = vsel %vm805, %v1639, 0
      %v1667 = vsel %vm805, %v1640, 0
      %v1670 = vsel %vm805, %v1641, 0
      %v1673 = vsel %vm805, %v1642, 0
      %v1676 = vsel %vm818, %v1659, 0
      %1678 = vmatprep.subr.bf16.mxu0 0
      %1679 = vmatpush1.bf16.msra.mxu0 %v1658
      %1680 = vmatprep.subr.bf16.mxu0 0
      %1681 = vmatpush1.bf16.msra.mxu0 %v1660
      %1682 = vmatprep.subr.bf16.mxu0 0
      %1683 = vmatpush1.bf16.msra.mxu0 %v1676
      %1684 = vmatprep.subr.bf16.mxu0 0
      %1685 = vmatpush1.bf16.msra.mxu0 0
      %1686 = vmatprep.subr.bf16.mxu0 0
      %1687 = vmatpush1.bf16.msra.mxu0 0
      %1688 = vmatprep.subr.bf16.mxu0 0
      %1689 = vmatpush1.bf16.msra.mxu0 0
      %1690 = vmatprep.subr.bf16.mxu0 0
      %1691 = vmatpush1.bf16.msra.mxu0 0
      %1692 = vmatprep.subr.bf16.mxu0 0
      %1693 = vmatpush1.bf16.msra.mxu0 0
      %1694 = vmatprep.subr.bf16.mxu0 0
      %1695 = vmatpush1.bf16.msra.mxu0 0
      %1696 = vmatprep.subr.bf16.mxu0 0
      %1697 = vmatpush1.bf16.msra.mxu0 0
      %1698 = vmatprep.subr.bf16.mxu0 0
      %1699 = vmatpush1.bf16.msra.mxu0 0
      %1700 = vmatprep.subr.bf16.mxu0 0
      %1701 = vmatpush1.bf16.msra.mxu0 0
      %1702 = vmatprep.subr.bf16.mxu0 0
      %1703 = vmatpush1.bf16.msra.mxu0 0
      %1704 = vmatprep.subr.bf16.mxu0 0
      %1705 = vmatpush1.bf16.msra.mxu0 0
      %1706 = vmatprep.subr.bf16.mxu0 0
      %1707 = vmatpush1.bf16.msra.mxu0 0
      %1708 = vmatprep.subr.bf16.mxu0 0
      %1709 = vmatpush1.bf16.msra.mxu0 0
      %1710 = vmatprep.mubr.bf16.mxu0 0
      %1711 = vmatmul.mubr.bf16.gmra.mrb[0].mxu0 %v1664
      %v1712 = vpop.f32.mrb[0].mxu0
      %v1713 = vadd.f32 0.0, %v1712
      %v1714 = vpop.f32.mrb[0].mxu0
      %v1715 = vpop.f32.mrb[0].mxu0
      %v1716 = vadd.f32 0.0, %v1715
      %v1717 = vpop.f32.mrb[0].mxu0
      %1718 = vmatprep.mubr.bf16.mxu0 0
      %1719 = vmatmul.mubr.bf16.gmra.mrb[0].mxu0 %v1667
      %v1720 = vpop.f32.mrb[0].mxu0
      %v1721 = vadd.f32 0.0, %v1720
      %v1722 = vpop.f32.mrb[0].mxu0
      %v1723 = vpop.f32.mrb[0].mxu0
      %v1724 = vadd.f32 0.0, %v1723
      %v1725 = vpop.f32.mrb[0].mxu0
      %1726 = vmatprep.mubr.bf16.mxu0 0
      %1727 = vmatmul.mubr.bf16.gmra.mrb[0].mxu0 %v1670
      %v1728 = vpop.f32.mrb[0].mxu0
      %v1729 = vadd.f32 0.0, %v1728
      %v1730 = vpop.f32.mrb[0].mxu0
      %v1731 = vpop.f32.mrb[0].mxu0
      %v1732 = vadd.f32 0.0, %v1731
      %v1733 = vpop.f32.mrb[0].mxu0
      %1734 = vmatprep.mubr.bf16.mxu0 0
      %1735 = vmatmul.mubr.bf16.gmra.mrb[0].mxu0 %v1673
      %v1736 = vpop.f32.mrb[0].mxu0
      %v1737 = vadd.f32 0.0, %v1736
      %v1738 = vpop.f32.mrb[0].mxu0
      %v1739 = vpop.f32.mrb[0].mxu0
      %v1740 = vadd.f32 0.0, %v1739
      %v1741 = vpop.f32.mrb[0].mxu0
      %1742 = vdwg.mxu0
      %v1743 = vadd.f32 %v1562, %v1713
      %v1744 = vadd.f32 %v1563, %v1716
      %v1745 = vadd.f32 %v1564, %v1721
      %v1746 = vadd.f32 %v1565, %v1724
      %v1747 = vadd.f32 %v1566, %v1729
      %v1748 = vadd.f32 %v1567, %v1732
      %v1749 = vadd.f32 %v1568, %v1737
      %v1750 = vadd.f32 %v1569, %v1740
      %s1751 = scalar_lea.vmem [#allocation2], 16
      %v1752 = vld [vmem:[%s1751] sm:$0xf]
      %v1753 = vld [vmem:[%s1751 + $0x8] sm:$0xf]
      %v1754 = vld [vmem:[%s1751 + $0x10] sm:$0xf]
      %v1755 = vld [vmem:[%s1751 + $0x18] sm:$0xf]
      %v1756 = vld [vmem:[%s1751 + $0x20] sm:$0xf]
      %v1757 = vld [vmem:[%s1751 + $0x28] sm:$0xf]
      %v1758 = vld [vmem:[%s1751 + $0x30] sm:$0xf]
      %v1759 = vld [vmem:[%s1751 + $0x38] sm:$0xf]
      %v1760 = vld [vmem:[%s2 + $0x6c] sm:$0xf]
      %v1761 = vld [vmem:[%s2 + $0x70] sm:$0xf]
      %v1762 = vld [vmem:[%s2 + $0x74] sm:$0xf]
      %v1763 = vld [vmem:[%s2 + $0x78] sm:$0xf]
      %v1764 = vld [vmem:[%s2 + $0x7c] sm:$0x3]
      %v1773 = vunpack.c.l.b16 %v1752
      %v1774 = vunpack.c.l.b16 %v1753
      %v1775 = vunpack.c.l.b16 %v1754
      %v1776 = vunpack.c.l.b16 %v1755
      %v1777 = vunpack.c.l.b16 %v1756
      %v1778 = vunpack.c.l.b16 %v1757
      %v1779 = vunpack.c.l.b16 %v1758
      %v1780 = vunpack.c.l.b16 %v1759
      %v1781 = vpack.c.b16 %v1774, %v1773
      %v1782 = vpack.c.b16 %v1776, %v1775
      %v1783 = vpack.c.b16 %v1778, %v1777
      %v1784 = vpack.c.b16 %v1780, %v1779
      %v1790 = vunpack.c.l.b16 %v1760
      %v1791 = vunpack.c.l.b16 %v1761
      %v1792 = vunpack.c.l.b16 %v1762
      %v1793 = vunpack.c.l.b16 %v1763
      %v1794 = vunpack.c.l.b16 %v1764
      %v1795 = vpack.c.b16 %v1791, %v1790
      %v1796 = vpack.c.b16 %v1793, %v1792
      %v1797 = vpack.c.b16 %v1794, %v1794
      %v1801 = vsel %vm805, %v1781, 0
      %v1804 = vsel %vm805, %v1782, 0
      %v1807 = vsel %vm805, %v1783, 0
      %v1810 = vsel %vm805, %v1784, 0
      %v1813 = vsel %vm818, %v1797, 0
      %1815 = vmatprep.subr.bf16.mxu0 0
      %1816 = vmatpush1.bf16.msra.mxu0 %v1795
      %1817 = vmatprep.subr.bf16.mxu0 0
      %1818 = vmatpush1.bf16.msra.mxu0 %v1796
      %1819 = vmatprep.subr.bf16.mxu0 0
      %1820 = vmatpush1.bf16.msra.mxu0 %v1813
      %1821 = vmatprep.subr.bf16.mxu0 0
      %1822 = vmatpush1.bf16.msra.mxu0 0
      %1823 = vmatprep.subr.bf16.mxu0 0
      %1824 = vmatpush1.bf16.msra.mxu0 0
      %1825 = vmatprep.subr.bf16.mxu0 0
      %1826 = vmatpush1.bf16.msra.mxu0 0
      %1827 = vmatprep.subr.bf16.mxu0 0
      %1828 = vmatpush1.bf16.msra.mxu0 0
      %1829 = vmatprep.subr.bf16.mxu0 0
      %1830 = vmatpush1.bf16.msra.mxu0 0
      %1831 = vmatprep.subr.bf16.mxu0 0
      %1832 = vmatpush1.bf16.msra.mxu0 0
      %1833 = vmatprep.subr.bf16.mxu0 0
      %1834 = vmatpush1.bf16.msra.mxu0 0
      %1835 = vmatprep.subr.bf16.mxu0 0
      %1836 = vmatpush1.bf16.msra.mxu0 0
      %1837 = vmatprep.subr.bf16.mxu0 0
      %1838 = vmatpush1.bf16.msra.mxu0 0
      %1839 = vmatprep.subr.bf16.mxu0 0
      %1840 = vmatpush1.bf16.msra.mxu0 0
      %1841 = vmatprep.subr.bf16.mxu0 0
      %1842 = vmatpush1.bf16.msra.mxu0 0
      %1843 = vmatprep.subr.bf16.mxu0 0
      %1844 = vmatpush1.bf16.msra.mxu0 0
      %1845 = vmatprep.subr.bf16.mxu0 0
      %1846 = vmatpush1.bf16.msra.mxu0 0
      %1847 = vmatprep.mubr.bf16.mxu0 0
      %1848 = vmatmul.mubr.bf16.gmra.mrb[0].mxu0 %v1801
      %v1849 = vpop.f32.mrb[0].mxu0
      %v1850 = vadd.f32 0.0, %v1849
      %v1851 = vpop.f32.mrb[0].mxu0
      %v1852 = vpop.f32.mrb[0].mxu0
      %v1853 = vadd.f32 0.0, %v1852
      %v1854 = vpop.f32.mrb[0].mxu0
      %1855 = vmatprep.mubr.bf16.mxu0 0
      %1856 = vmatmul.mubr.bf16.gmra.mrb[0].mxu0 %v1804
      %v1857 = vpop.f32.mrb[0].mxu0
      %v1858 = vadd.f32 0.0, %v1857
      %v1859 = vpop.f32.mrb[0].mxu0
      %v1860 = vpop.f32.mrb[0].mxu0
      %v1861 = vadd.f32 0.0, %v1860
      %v1862 = vpop.f32.mrb[0].mxu0
      %1863 = vmatprep.mubr.bf16.mxu0 0
      %1864 = vmatmul.mubr.bf16.gmra.mrb[0].mxu0 %v1807
      %v1865 = vpop.f32.mrb[0].mxu0
      %v1866 = vadd.f32 0.0, %v1865
      %v1867 = vpop.f32.mrb[0].mxu0
      %v1868 = vpop.f32.mrb[0].mxu0
      %v1869 = vadd.f32 0.0, %v1868
      %v1870 = vpop.f32.mrb[0].mxu0
      %1871 = vmatprep.mubr.bf16.mxu0 0
      %1872 = vmatmul.mubr.bf16.gmra.mrb[0].mxu0 %v1810
      %v1873 = vpop.f32.mrb[0].mxu0
      %v1874 = vadd.f32 0.0, %v1873
      %v1875 = vpop.f32.mrb[0].mxu0
      %v1876 = vpop.f32.mrb[0].mxu0
      %v1877 = vadd.f32 0.0, %v1876
      %v1878 = vpop.f32.mrb[0].mxu0
      %1879 = vdwg.mxu0
      %v1880 = vadd.f32 %v1743, %v1850
      %v1881 = vadd.f32 %v1744, %v1853
      %v1882 = vadd.f32 %v1745, %v1858
      %v1883 = vadd.f32 %v1746, %v1861
      %v1884 = vadd.f32 %v1747, %v1866
      %v1885 = vadd.f32 %v1748, %v1869
      %v1886 = vadd.f32 %v1749, %v1874
      %v1887 = vadd.f32 %v1750, %v1877
      %v1888 = vld [vmem:[%s1751] sm:$0xf]
      %v1889 = vld [vmem:[%s1751 + $0x4] sm:$0x1]
      %v1890 = vld [vmem:[%s1751 + $0x8] sm:$0xf]
      %v1891 = vld [vmem:[%s1751 + $0xc] sm:$0x1]
      %v1892 = vld [vmem:[%s1751 + $0x10] sm:$0xf]
      %v1893 = vld [vmem:[%s1751 + $0x14] sm:$0x1]
      %v1894 = vld [vmem:[%s1751 + $0x18] sm:$0xf]
      %v1895 = vld [vmem:[%s1751 + $0x1c] sm:$0x1]
      %v1896 = vld [vmem:[%s1751 + $0x20] sm:$0xf]
      %v1897 = vld [vmem:[%s1751 + $0x24] sm:$0x1]
      %v1898 = vld [vmem:[%s1751 + $0x28] sm:$0xf]
      %v1899 = vld [vmem:[%s1751 + $0x2c] sm:$0x1]
      %v1900 = vld [vmem:[%s1751 + $0x30] sm:$0xf]
      %v1901 = vld [vmem:[%s1751 + $0x34] sm:$0x1]
      %v1902 = vld [vmem:[%s1751 + $0x38] sm:$0xf]
      %v1903 = vld [vmem:[%s1751 + $0x3c] sm:$0x1]
      %v1905 = vshrl.u32 %v1888, 16
      %v1907 = vrot.slane %v1905, 4
      %v1908 = vshll.u32 %v1888, 16
      %v1910 = vrot.slane %v1908, 5
      %v1911 = vor.u32 %v1907, %v1910
      %v1912 = vrot.slane %v1911, 4
      %v1914 = vshll.u32 %v1889, 16
      %v1916 = vrot.slane %v1914, 5
      %v1917 = vsel %vm654, %v1912, %v1916
      %v1919 = vshrl.u32 %v1890, 16
      %v1921 = vrot.slane %v1919, 4
      %v1922 = vshll.u32 %v1890, 16
      %v1924 = vrot.slane %v1922, 5
      %v1925 = vor.u32 %v1921, %v1924
      %v1926 = vrot.slane %v1925, 4
      %v1928 = vshll.u32 %v1891, 16
      %v1930 = vrot.slane %v1928, 5
      %v1931 = vsel %vm654, %v1926, %v1930
      %v1933 = vshrl.u32 %v1892, 16
      %v1935 = vrot.slane %v1933, 4
      %v1936 = vshll.u32 %v1892, 16
      %v1938 = vrot.slane %v1936, 5
      %v1939 = vor.u32 %v1935, %v1938
      %v1940 = vrot.slane %v1939, 4
      %v1942 = vshll.u32 %v1893, 16
      %v1944 = vrot.slane %v1942, 5
      %v1945 = vsel %vm654, %v1940, %v1944
      %v1947 = vshrl.u32 %v1894, 16
      %v1949 = vrot.slane %v1947, 4
      %v1950 = vshll.u32 %v1894, 16
      %v1952 = vrot.slane %v1950, 5
      %v1953 = vor.u32 %v1949, %v1952
      %v1954 = vrot.slane %v1953, 4
      %v1956 = vshll.u32 %v1895, 16
      %v1958 = vrot.slane %v1956, 5
      %v1959 = vsel %vm654, %v1954, %v1958
      %v1961 = vshrl.u32 %v1896, 16
      %v1963 = vrot.slane %v1961, 4
      %v1964 = vshll.u32 %v1896, 16
      %v1966 = vrot.slane %v1964, 5
      %v1967 = vor.u32 %v1963, %v1966
      %v1968 = vrot.slane %v1967, 4
      %v1970 = vshll.u32 %v1897, 16
      %v1972 = vrot.slane %v1970, 5
      %v1973 = vsel %vm654, %v1968, %v1972
      %v1975 = vshrl.u32 %v1898, 16
      %v1977 = vrot.slane %v1975, 4
      %v1978 = vshll.u32 %v1898, 16
      %v1980 = vrot.slane %v1978, 5
      %v1981 = vor.u32 %v1977, %v1980
      %v1982 = vrot.slane %v1981, 4
      %v1984 = vshll.u32 %v1899, 16
      %v1986 = vrot.slane %v1984, 5
      %v1987 = vsel %vm654, %v1982, %v1986
      %v1989 = vshrl.u32 %v1900, 16
      %v1991 = vrot.slane %v1989, 4
      %v1992 = vshll.u32 %v1900, 16
      %v1994 = vrot.slane %v1992, 5
      %v1995 = vor.u32 %v1991, %v1994
      %v1996 = vrot.slane %v1995, 4
      %v1998 = vshll.u32 %v1901, 16
      %v2000 = vrot.slane %v1998, 5
      %v2001 = vsel %vm654, %v1996, %v2000
      %v2003 = vshrl.u32 %v1902, 16
      %v2005 = vrot.slane %v2003, 4
      %v2006 = vshll.u32 %v1902, 16
      %v2008 = vrot.slane %v2006, 5
      %v2009 = vor.u32 %v2005, %v2008
      %v2010 = vrot.slane %v2009, 4
      %v2012 = vshll.u32 %v1903, 16
      %v2014 = vrot.slane %v2012, 5
      %v2015 = vsel %vm654, %v2010, %v2014
      %v2016 = vld [vmem:[%s2 + $0x7c] sm:$0xc]
      %v2017 = vld [vmem:[%s2 + $0x80] sm:$0xf]
      %v2018 = vld [vmem:[%s2 + $0x84] sm:$0xf]
      %v2019 = vld [vmem:[%s2 + $0x88] sm:$0xf]
      %v2020 = vld [vmem:[%s2 + $0x8c] sm:$0xf]
      %v2021 = vunpack.c.l.b16 %v1917
      %v2022 = vunpack.c.l.b16 %v1931
      %v2023 = vunpack.c.l.b16 %v1945
      %v2024 = vunpack.c.l.b16 %v1959
      %v2025 = vunpack.c.l.b16 %v1973
      %v2026 = vunpack.c.l.b16 %v1987
      %v2027 = vunpack.c.l.b16 %v2001
      %v2028 = vunpack.c.l.b16 %v2015
      %v2029 = vpack.c.b16 %v2022, %v2021
      %v2030 = vpack.c.b16 %v2024, %v2023
      %v2031 = vpack.c.b16 %v2026, %v2025
      %v2032 = vpack.c.b16 %v2028, %v2027
      %v2038 = vunpack.c.l.b16 %v2016
      %v2039 = vunpack.c.l.b16 %v2017
      %v2040 = vunpack.c.l.b16 %v2018
      %v2041 = vunpack.c.l.b16 %v2019
      %v2042 = vunpack.c.l.b16 %v2020
      %v2043 = vpack.c.b16 %v2039, %v2038
      %v2044 = vpack.c.b16 %v2041, %v2040
      %v2045 = vpack.c.b16 %v2042, %v2042
      %v2046 = vrot.slane %v2043, 2
      %v2047 = vrot.slane %v2044, 2
      %v2048 = vsel %vm797, %v2046, %v2047
      %v2049 = vrot.slane %v2045, 2
      %v2050 = vsel %vm797, %v2047, %v2049
      %v2054 = vsel %vm805, %v2029, 0
      %v2057 = vsel %vm805, %v2030, 0
      %v2060 = vsel %vm805, %v2031, 0
      %v2063 = vsel %vm805, %v2032, 0
      %v2066 = vsel %vm818, %v2049, 0
      %2068 = vmatprep.subr.bf16.mxu0 0
      %2069 = vmatpush1.bf16.msra.mxu0 %v2048
      %2070 = vmatprep.subr.bf16.mxu0 0
      %2071 = vmatpush1.bf16.msra.mxu0 %v2050
      %2072 = vmatprep.subr.bf16.mxu0 0
      %2073 = vmatpush1.bf16.msra.mxu0 %v2066
      %2074 = vmatprep.subr.bf16.mxu0 0
      %2075 = vmatpush1.bf16.msra.mxu0 0
      %2076 = vmatprep.subr.bf16.mxu0 0
      %2077 = vmatpush1.bf16.msra.mxu0 0
      %2078 = vmatprep.subr.bf16.mxu0 0
      %2079 = vmatpush1.bf16.msra.mxu0 0
      %2080 = vmatprep.subr.bf16.mxu0 0
      %2081 = vmatpush1.bf16.msra.mxu0 0
      %2082 = vmatprep.subr.bf16.mxu0 0
      %2083 = vmatpush1.bf16.msra.mxu0 0
      %2084 = vmatprep.subr.bf16.mxu0 0
      %2085 = vmatpush1.bf16.msra.mxu0 0
      %2086 = vmatprep.subr.bf16.mxu0 0
      %2087 = vmatpush1.bf16.msra.mxu0 0
      %2088 = vmatprep.subr.bf16.mxu0 0
      %2089 = vmatpush1.bf16.msra.mxu0 0
      %2090 = vmatprep.subr.bf16.mxu0 0
      %2091 = vmatpush1.bf16.msra.mxu0 0
      %2092 = vmatprep.subr.bf16.mxu0 0
      %2093 = vmatpush1.bf16.msra.mxu0 0
      %2094 = vmatprep.subr.bf16.mxu0 0
      %2095 = vmatpush1.bf16.msra.mxu0 0
      %2096 = vmatprep.subr.bf16.mxu0 0
      %2097 = vmatpush1.bf16.msra.mxu0 0
      %2098 = vmatprep.subr.bf16.mxu0 0
      %2099 = vmatpush1.bf16.msra.mxu0 0
      %2100 = vmatprep.mubr.bf16.mxu0 0
      %2101 = vmatmul.mubr.bf16.gmra.mrb[0].mxu0 %v2054
      %v2102 = vpop.f32.mrb[0].mxu0
      %v2103 = vadd.f32 0.0, %v2102
      %v2104 = vpop.f32.mrb[0].mxu0
      %v2105 = vpop.f32.mrb[0].mxu0
      %v2106 = vadd.f32 0.0, %v2105
      %v2107 = vpop.f32.mrb[0].mxu0
      %2108 = vmatprep.mubr.bf16.mxu0 0
      %2109 = vmatmul.mubr.bf16.gmra.mrb[0].mxu0 %v2057
      %v2110 = vpop.f32.mrb[0].mxu0
      %v2111 = vadd.f32 0.0, %v2110
      %v2112 = vpop.f32.mrb[0].mxu0
      %v2113 = vpop.f32.mrb[0].mxu0
      %v2114 = vadd.f32 0.0, %v2113
      %v2115 = vpop.f32.mrb[0].mxu0
      %2116 = vmatprep.mubr.bf16.mxu0 0
      %2117 = vmatmul.mubr.bf16.gmra.mrb[0].mxu0 %v2060
      %v2118 = vpop.f32.mrb[0].mxu0
      %v2119 = vadd.f32 0.0, %v2118
      %v2120 = vpop.f32.mrb[0].mxu0
      %v2121 = vpop.f32.mrb[0].mxu0
      %v2122 = vadd.f32 0.0, %v2121
      %v2123 = vpop.f32.mrb[0].mxu0
      %2124 = vmatprep.mubr.bf16.mxu0 0
      %2125 = vmatmul.mubr.bf16.gmra.mrb[0].mxu0 %v2063
      %v2126 = vpop.f32.mrb[0].mxu0
      %v2127 = vadd.f32 0.0, %v2126
      %v2128 = vpop.f32.mrb[0].mxu0
      %v2129 = vpop.f32.mrb[0].mxu0
      %v2130 = vadd.f32 0.0, %v2129
      %v2131 = vpop.f32.mrb[0].mxu0
      %2132 = vdwg.mxu0
      %v2133 = vadd.f32 %v1880, %v2103
      %v2134 = vadd.f32 %v1881, %v2106
      %v2135 = vadd.f32 %v1882, %v2111
      %v2136 = vadd.f32 %v1883, %v2114
      %v2137 = vadd.f32 %v1884, %v2119
      %v2138 = vadd.f32 %v1885, %v2122
      %v2139 = vadd.f32 %v1886, %v2127
      %v2140 = vadd.f32 %v1887, %v2130
      %v2141 = vld [vmem:[%s1751] sm:$0xe]
      %v2142 = vld [vmem:[%s1751 + $0x8] sm:$0xe]
      %v2143 = vld [vmem:[%s1751 + $0x10] sm:$0xe]
      %v2144 = vld [vmem:[%s1751 + $0x18] sm:$0xe]
      %v2145 = vld [vmem:[%s1751 + $0x20] sm:$0xe]
      %v2146 = vld [vmem:[%s1751 + $0x28] sm:$0xe]
      %v2147 = vld [vmem:[%s1751 + $0x30] sm:$0xe]
      %v2148 = vld [vmem:[%s1751 + $0x38] sm:$0xe]
      %v2165 = vrot.slane %v2141, 5
      %v2166 = vrot.slane %v2165, 4
      %v2167 = vrot.slane %v1889, 5
      %v2168 = vsel %vm1028, %v2166, %v2167
      %v2169 = vrot.slane %v2142, 5
      %v2170 = vrot.slane %v2169, 4
      %v2171 = vrot.slane %v1891, 5
      %v2172 = vsel %vm1028, %v2170, %v2171
      %v2173 = vrot.slane %v2143, 5
      %v2174 = vrot.slane %v2173, 4
      %v2175 = vrot.slane %v1893, 5
      %v2176 = vsel %vm1028, %v2174, %v2175
      %v2177 = vrot.slane %v2144, 5
      %v2178 = vrot.slane %v2177, 4
      %v2179 = vrot.slane %v1895, 5
      %v2180 = vsel %vm1028, %v2178, %v2179
      %v2181 = vrot.slane %v2145, 5
      %v2182 = vrot.slane %v2181, 4
      %v2183 = vrot.slane %v1897, 5
      %v2184 = vsel %vm1028, %v2182, %v2183
      %v2185 = vrot.slane %v2146, 5
      %v2186 = vrot.slane %v2185, 4
      %v2187 = vrot.slane %v1899, 5
      %v2188 = vsel %vm1028, %v2186, %v2187
      %v2189 = vrot.slane %v2147, 5
      %v2190 = vrot.slane %v2189, 4
      %v2191 = vrot.slane %v1901, 5
      %v2192 = vsel %vm1028, %v2190, %v2191
      %v2193 = vrot.slane %v2148, 5
      %v2194 = vrot.slane %v2193, 4
      %v2195 = vrot.slane %v1903, 5
      %v2196 = vsel %vm1028, %v2194, %v2195
      %v2197 = vld [vmem:[%s2 + $0x90] sm:$0xf]
      %v2198 = vld [vmem:[%s2 + $0x94] sm:$0xf]
      %v2199 = vld [vmem:[%s2 + $0x98] sm:$0xf]
      %v2200 = vld [vmem:[%s2 + $0x9c] sm:$0xf]
      %v2201 = vld [vmem:[%s2 + $0xa0] sm:$0x3]
      %v2202 = vunpack.c.l.b16 %v2168
      %v2203 = vunpack.c.l.b16 %v2172
      %v2204 = vunpack.c.l.b16 %v2176
      %v2205 = vunpack.c.l.b16 %v2180
      %v2206 = vunpack.c.l.b16 %v2184
      %v2207 = vunpack.c.l.b16 %v2188
      %v2208 = vunpack.c.l.b16 %v2192
      %v2209 = vunpack.c.l.b16 %v2196
      %v2210 = vpack.c.b16 %v2203, %v2202
      %v2211 = vpack.c.b16 %v2205, %v2204
      %v2212 = vpack.c.b16 %v2207, %v2206
      %v2213 = vpack.c.b16 %v2209, %v2208
      %v2219 = vunpack.c.l.b16 %v2197
      %v2220 = vunpack.c.l.b16 %v2198
      %v2221 = vunpack.c.l.b16 %v2199
      %v2222 = vunpack.c.l.b16 %v2200
      %v2223 = vunpack.c.l.b16 %v2201
      %v2224 = vpack.c.b16 %v2220, %v2219
      %v2225 = vpack.c.b16 %v2222, %v2221
      %v2226 = vpack.c.b16 %v2223, %v2223
      %v2230 = vsel %vm805, %v2210, 0
      %v2233 = vsel %vm805, %v2211, 0
      %v2236 = vsel %vm805, %v2212, 0
      %v2239 = vsel %vm805, %v2213, 0
      %v2242 = vsel %vm818, %v2226, 0
      %2244 = vmatprep.subr.bf16.mxu0 0
      %2245 = vmatpush1.bf16.msra.mxu0 %v2224
      %2246 = vmatprep.subr.bf16.mxu0 0
      %2247 = vmatpush1.bf16.msra.mxu0 %v2225
      %2248 = vmatprep.subr.bf16.mxu0 0
      %2249 = vmatpush1.bf16.msra.mxu0 %v2242
      %2250 = vmatprep.subr.bf16.mxu0 0
      %2251 = vmatpush1.bf16.msra.mxu0 0
      %2252 = vmatprep.subr.bf16.mxu0 0
      %2253 = vmatpush1.bf16.msra.mxu0 0
      %2254 = vmatprep.subr.bf16.mxu0 0
      %2255 = vmatpush1.bf16.msra.mxu0 0
      %2256 = vmatprep.subr.bf16.mxu0 0
      %2257 = vmatpush1.bf16.msra.mxu0 0
      %2258 = vmatprep.subr.bf16.mxu0 0
      %2259 = vmatpush1.bf16.msra.mxu0 0
      %2260 = vmatprep.subr.bf16.mxu0 0
      %2261 = vmatpush1.bf16.msra.mxu0 0
      %2262 = vmatprep.subr.bf16.mxu0 0
      %2263 = vmatpush1.bf16.msra.mxu0 0
      %2264 = vmatprep.subr.bf16.mxu0 0
      %2265 = vmatpush1.bf16.msra.mxu0 0
      %2266 = vmatprep.subr.bf16.mxu0 0
      %2267 = vmatpush1.bf16.msra.mxu0 0
      %2268 = vmatprep.subr.bf16.mxu0 0
      %2269 = vmatpush1.bf16.msra.mxu0 0
      %2270 = vmatprep.subr.bf16.mxu0 0
      %2271 = vmatpush1.bf16.msra.mxu0 0
      %2272 = vmatprep.subr.bf16.mxu0 0
      %2273 = vmatpush1.bf16.msra.mxu0 0
      %2274 = vmatprep.subr.bf16.mxu0 0
      %2275 = vmatpush1.bf16.msra.mxu0 0
      %2276 = vmatprep.mubr.bf16.mxu0 0
      %2277 = vmatmul.mubr.bf16.gmra.mrb[0].mxu0 %v2230
      %v2278 = vpop.f32.mrb[0].mxu0
      %v2279 = vadd.f32 0.0, %v2278
      %v2280 = vpop.f32.mrb[0].mxu0
      %v2281 = vpop.f32.mrb[0].mxu0
      %v2282 = vadd.f32 0.0, %v2281
      %v2283 = vpop.f32.mrb[0].mxu0
      %2284 = vmatprep.mubr.bf16.mxu0 0
      %2285 = vmatmul.mubr.bf16.gmra.mrb[0].mxu0 %v2233
      %v2286 = vpop.f32.mrb[0].mxu0
      %v2287 = vadd.f32 0.0, %v2286
      %v2288 = vpop.f32.mrb[0].mxu0
      %v2289 = vpop.f32.mrb[0].mxu0
      %v2290 = vadd.f32 0.0, %v2289
      %v2291 = vpop.f32.mrb[0].mxu0
      %2292 = vmatprep.mubr.bf16.mxu0 0
      %2293 = vmatmul.mubr.bf16.gmra.mrb[0].mxu0 %v2236
      %v2294 = vpop.f32.mrb[0].mxu0
      %v2295 = vadd.f32 0.0, %v2294
      %v2296 = vpop.f32.mrb[0].mxu0
      %v2297 = vpop.f32.mrb[0].mxu0
      %v2298 = vadd.f32 0.0, %v2297
      %v2299 = vpop.f32.mrb[0].mxu0
      %2300 = vmatprep.mubr.bf16.mxu0 0
      %2301 = vmatmul.mubr.bf16.gmra.mrb[0].mxu0 %v2239
      %v2302 = vpop.f32.mrb[0].mxu0
      %v2303 = vadd.f32 0.0, %v2302
      %v2304 = vpop.f32.mrb[0].mxu0
      %v2305 = vpop.f32.mrb[0].mxu0
      %v2306 = vadd.f32 0.0, %v2305
      %v2307 = vpop.f32.mrb[0].mxu0
      %2308 = vdwg.mxu0
      %v2309 = vadd.f32 %v2133, %v2279
      %v2310 = vadd.f32 %v2134, %v2282
      %v2311 = vadd.f32 %v2135, %v2287
      %v2312 = vadd.f32 %v2136, %v2290
      %v2313 = vadd.f32 %v2137, %v2295
      %v2314 = vadd.f32 %v2138, %v2298
      %v2315 = vadd.f32 %v2139, %v2303
      %v2316 = vadd.f32 %v2140, %v2306
      %vm2317 = vcmask 130048
      %2318 = vst.msk [vmem:[%s224] sm:$0xff] %vm2317, %v2309
      %2319 = vst.msk [vmem:[%s224 + $0x8] sm:$0xff] %vm2317, %v2310
      %2320 = vst.msk [vmem:[%s224 + $0x10] sm:$0xff] %vm2317, %v2311
      %2321 = vst.msk [vmem:[%s224 + $0x18] sm:$0xff] %vm2317, %v2312
      %2322 = vst.msk [vmem:[%s224 + $0x20] sm:$0xff] %vm2317, %v2313
      %2323 = vst.msk [vmem:[%s224 + $0x28] sm:$0xff] %vm2317, %v2314
      %2324 = vst.msk [vmem:[%s224 + $0x30] sm:$0xff] %vm2317, %v2315
      %2325 = vst.msk [vmem:[%s224 + $0x38] sm:$0xff] %vm2317, %v2316
      %v2326 = vsel %vm2317, %v2309, 0.0
      %v2327 = vsel %vm2317, %v2310, 0.0
      %v2328 = vadd.f32 %v2326, %v2327
      %v2329 = vsel %vm2317, %v2311, 0.0
      %v2330 = vadd.f32 %v2328, %v2329
      %v2331 = vsel %vm2317, %v2312, 0.0
      %v2332 = vadd.f32 %v2330, %v2331
      %v2333 = vsel %vm2317, %v2313, 0.0
      %v2334 = vadd.f32 %v2332, %v2333
      %v2335 = vsel %vm2317, %v2314, 0.0
      %v2336 = vadd.f32 %v2334, %v2335
      %v2337 = vsel %vm2317, %v2315, 0.0
      %v2338 = vadd.f32 %v2336, %v2337
      %v2339 = vsel %vm2317, %v2316, 0.0
      %v2340 = vadd.f32 %v2338, %v2339
      %v2341 = vrot.slane %v2340, 4
      %v2342 = vadd.f32 %v2340, %v2341
      %v2343 = vrot.slane %v2342, 2
      %v2344 = vadd.f32 %v2342, %v2343
      %v2345 = vrot.slane %v2344, 1
      %v2346 = vadd.f32 %v2344, %v2345
      %vm2347 = vcmask 122880
      %2348 = vst.msk [vmem:[%s228] sm:$0x1] %vm2347, %v2346
      %v2349 = vmul.f32 %v2309, %v2309
      %v2350 = vmul.f32 %v2310, %v2310
      %v2351 = vmul.f32 %v2311, %v2311
      %v2352 = vmul.f32 %v2312, %v2312
      %v2353 = vmul.f32 %v2313, %v2313
      %v2354 = vmul.f32 %v2314, %v2314
      %v2355 = vmul.f32 %v2315, %v2315
      %v2356 = vmul.f32 %v2316, %v2316
      %v2357 = vsel %vm2317, %v2349, 0.0
      %v2358 = vsel %vm2317, %v2350, 0.0
      %v2359 = vadd.f32 %v2357, %v2358
      %v2360 = vsel %vm2317, %v2351, 0.0
      %v2361 = vadd.f32 %v2359, %v2360
      %v2362 = vsel %vm2317, %v2352, 0.0
      %v2363 = vadd.f32 %v2361, %v2362
      %v2364 = vsel %vm2317, %v2353, 0.0
      %v2365 = vadd.f32 %v2363, %v2364
      %v2366 = vsel %vm2317, %v2354, 0.0
      %v2367 = vadd.f32 %v2365, %v2366
      %v2368 = vsel %vm2317, %v2355, 0.0
      %v2369 = vadd.f32 %v2367, %v2368
      %v2370 = vsel %vm2317, %v2356, 0.0
      %v2371 = vadd.f32 %v2369, %v2370
      %v2372 = vrot.slane %v2371, 4
      %v2373 = vadd.f32 %v2371, %v2372
      %v2374 = vrot.slane %v2373, 2
      %v2375 = vadd.f32 %v2373, %v2374
      %v2376 = vrot.slane %v2375, 1
      %v2377 = vadd.f32 %v2375, %v2376
      %2378 = vst.msk [vmem:[%s228 + $0x1] sm:$0x1] %vm2347, %v2377
      %p2379 = scmp.lt.s32.totalorder %s16, 1
      %s2380 = scalar_select %p2379, %s16, 1
      %s2381 = smul.addr %s2380, 8
      %s2382 = smul.addr %s2381, 8
      %s2383 = scalar_lea.vmem %s3, %s2382
      %p2384 = scmp.lt.s32.totalorder %s16, 1
      %s2385 = scalar_select %p2384, %s16, 1
      %s2386 = smul.addr %s2385, 2
      %s2387 = scalar_lea.vmem %s4, %s2386
      // Predicated region
      $region33: #{frru_forward.3} parent=31 // pred_check
        %p2388 = pneg %p107
      $region34: #{frru_forward.3} parent=31 // pred_check_branch
        %2390 = sbr.rel (%p2388) target = $region36
      $region35: #{frru_forward.3} parent=31 // pred_region
        _
      $region36: #{frru_forward.3} parent=31 // pred_fallthru
        _
      // Predicated region
      $region37: #{frru_forward.3} parent=31 // pred_check
        %p2391 = pneg %p133
      $region38: #{frru_forward.3} parent=31 // pred_check_branch
        %2393 = sbr.rel (%p2391) target = $region40
      $region39: #{frru_forward.3} parent=31 // pred_region
        _
      $region40: #{frru_forward.3} parent=31 // pred_fallthru
        _
    $region32: #{frru_forward.3} parent=5 // pred_fallthru
      _
    %p2394 = scmp.le.s32.totalorder 2, %s11
    // Predicated region
    $region41: #{frru_forward.3} parent=5 // pred_check
      %p2395 = pneg %p2394
    $region42: #{frru_forward.3} parent=5 // pred_check_branch
      %2397 = sbr.rel (%p2395) target = $region44
    $region43: #{frru_forward.3} parent=5 // pred_region
      %s2398 = ssub.s32 %s11, 2
      // Predicated region
      $region45: #{frru_forward.3} parent=43 // pred_check
        %p2399 = pneg %p113
      $region46: #{frru_forward.3} parent=43 // pred_check_branch
        %2401 = sbr.rel (%p2399) target = $region48
      $region47: #{frru_forward.3} parent=43 // pred_region
        %p2402 = scmp.lt.s32.totalorder %s17, 1
        %s2403 = scalar_select %p2402, %s17, 1
        %s2404 = smul.addr %s2403, 8
        %s2405 = smul.addr %s2404, 8
        %s2406 = scalar_lea.vmem %s3, %s2405
      $region48: #{frru_forward.3} parent=43 // pred_fallthru
        _
      // Predicated region
      $region49: #{frru_forward.3} parent=43 // pred_check
        %p2407 = pneg %p139
      $region50: #{frru_forward.3} parent=43 // pred_check_branch
        %2409 = sbr.rel (%p2407) target = $region52
      $region51: #{frru_forward.3} parent=43 // pred_region
        %p2410 = scmp.lt.s32.totalorder %s17, 1
        %s2411 = scalar_select %p2410, %s17, 1
        %s2412 = smul.addr %s2411, 2
        %s2413 = scalar_lea.vmem %s4, %s2412
      $region52: #{frru_forward.3} parent=43 // pred_fallthru
        _
    $region44: #{frru_forward.3} parent=5 // pred_fallthru
      _
  $region6: #{frru_forward.3} parent=0 // loop_footer
    %s15 = sadd.s32 1, %s11
  $region7: #{frru_forward.3} parent=0 // loop_footer_branch
    %10 = sbr.rel target = $region3
  $region8: #{frru_forward.3} parent=0 // loop_exit
    _

</llo_original>
